<compile_context>
chip_gen: v7x
topology: tpu7x:2x2x1
jax: 0.10.0
libtpu: 0.0.40
codegen_flags: <defaults>
</compile_context>

<pallas_src>
import functools

import jax
import jax.numpy as jnp
from jax import lax
from jax.experimental import pallas as pl
from jax.experimental.pallas import tpu as pltpu


# --------------------------------------------------------------------------
# Kernel
# --------------------------------------------------------------------------
def _augru_seq_kernel(x_ref, h0_ref, wx_ref, wh_ref, b_ref, o_ref, h_carry,
                      *, precision):
    """One (batch-block, time-chunk) grid step of the fused AUGRU recurrence.

    x_ref:   [T_CHUNK, B_BLK, D]  chunk of the input sequence (VMEM)
    h0_ref:  [B_BLK, D]           initial hidden state for this batch block
    wx_ref:  [D, 3D]              [Wu | Wr | Wh]   (multiplied by x_t)
    wh_ref:  [D, 3D]              [Uu | Ur | Uh]   (multiplied by h)
    b_ref:   [1, 3D]              [bu | br | bh]
    o_ref:   [T_CHUNK, B_BLK, D]  per-step hidden states (output)
    h_carry: [B_BLK, D] f32       hidden state carried across time chunks
    """
    t_chunk, b_blk, D = x_ref.shape

    # First time-chunk of a batch block -> (re)load the carried hidden state.
    @pl.when(pl.program_id(1) == 0)
    def _():
        h_carry[...] = h0_ref[...].astype(jnp.float32)

    # Hoist weight loads and the bias broadcast out of the time loop
    # (JAX does not CSE broadcast_in_dim inside loops).
    wx = wx_ref[...]
    wh = wh_ref[...]
    b = jnp.broadcast_to(b_ref[...], (b_blk, 3 * D))

    def step(t, h):
        x_t = x_ref[t]                                           # [B_BLK, D]
        # Two lane-packed MXU pushes per step:
        #   lanes [0:D) = update gate, [D:2D) = reset gate, [2D:3D) = candidate.
        pre_x = jnp.dot(x_t, wx, preferred_element_type=jnp.float32,
                        precision=precision) + b
        pre_h = jnp.dot(h, wh, preferred_element_type=jnp.float32,
                        precision=precision)

        # Element-wise gate math stays in f32 (v5e VPU/EUP have no bf16 path).
        u = jax.nn.sigmoid(pre_x[:, 0:D] + pre_h[:, 0:D])
        r = jax.nn.sigmoid(pre_x[:, D:2 * D] + pre_h[:, D:2 * D])
        h_hat = jnp.tanh(pre_x[:, 2 * D:3 * D] + r * pre_h[:, 2 * D:3 * D])

        # attention(x_t, item) = softmax over a length-1 axis == 1.0 exactly,
        # so u_hat == u (bit-exact w.r.t. the PyTorch module's forward()).
        h_new = (1.0 - u) * h + u * h_hat
        o_ref[t] = h_new.astype(o_ref.dtype)
        return h_new

    h = lax.fori_loop(0, t_chunk, step, h_carry[...],
                      unroll=(t_chunk <= 16))
    h_carry[...] = h


# --------------------------------------------------------------------------
# Parameter packing (done once, outside the kernel)
# --------------------------------------------------------------------------
def pack_augru_params(params):
    """Pack the 10 module parameters into 2 weight mats + 1 bias row."""
    (Wu, Uu, bu, Wr, Ur, br, Wh, Uh, bh, Wa) = params
    del Wa  # attention is a mathematical no-op (softmax over a size-1 axis)
    wx = jnp.concatenate([Wu, Wr, Wh], axis=1)   # [D, 3D], applied to x_t
    wh = jnp.concatenate([Uu, Ur, Uh], axis=1)   # [D, 3D], applied to h
    b = jnp.concatenate([bu, br, bh], axis=1)    # [1, 3D]
    return wx, wh, b


# --------------------------------------------------------------------------
# Wrappers
# --------------------------------------------------------------------------
def augru_forward(x_seq, h0, item, packed_params, *, t_chunk=None,
                  b_block=None, precision=lax.Precision.HIGH):
    """Fused AUGRU recurrence over a whole sequence in a single pallas_call.

    x_seq: [T, B, D], h0: [B, D].  Returns h_seq [T, B, D] where h_seq[t] is
    the hidden state after consuming x_seq[t].  `item` only enters the module
    through a softmax over a length-1 axis (identically 1.0), so it is unused;
    kept for API parity with the PyTorch module.
    """
    del item
    wx, wh, b = packed_params
    T, B, D = x_seq.shape
    assert h0.shape == (B, D)
    assert wx.shape == (D, 3 * D) and wh.shape == (D, 3 * D)
    assert b.shape == (1, 3 * D)

    if t_chunk is None:
        t_chunk = min(T, 128)
    if b_block is None:
        b_block = B if (B < 8 or B % 8 != 0) else min(B, 256)
    assert T % t_chunk == 0, "pad T to a multiple of t_chunk"
    assert B % b_block == 0, "pad B to a multiple of b_block"
    assert b_block == B or b_block % 8 == 0

    grid = (B // b_block, T // t_chunk)
    kernel = functools.partial(_augru_seq_kernel, precision=precision)

    grid_spec = pltpu.PrefetchScalarGridSpec(
        num_scalar_prefetch=0,
        grid=grid,
        in_specs=[
            # Chunked, double-buffered x DMA.
            pl.BlockSpec((t_chunk, b_block, D), lambda bi, ti: (ti, bi, 0)),
            pl.BlockSpec((b_block, D), lambda bi, ti: (bi, 0)),
            # Packed weights / bias pinned to block (0,0): VMEM-resident.
            pl.BlockSpec((D, 3 * D), lambda bi, ti: (0, 0)),
            pl.BlockSpec((D, 3 * D), lambda bi, ti: (0, 0)),
            pl.BlockSpec((1, 3 * D), lambda bi, ti: (0, 0)),
        ],
        out_specs=pl.BlockSpec((t_chunk, b_block, D),
                               lambda bi, ti: (ti, bi, 0)),
        scratch_shapes=[pltpu.VMEM((b_block, D), jnp.float32)],
    )

    return pl.pallas_call(
        kernel,
        out_shape=jax.ShapeDtypeStruct((T, B, D), x_seq.dtype),
        grid_spec=grid_spec,
        compiler_params=pltpu.CompilerParams(
            # Batch blocks are independent (shardable across v7x's 2 TCs);
            # the time axis carries h in scratch -> must stay sequential.
            dimension_semantics=("parallel", "arbitrary")),
    )(x_seq, h0, wx, wh, b)


def augru_cell(x, h_1, item, packed_params, **kw):
    """Single AUGRU cell step -- exactly the PyTorch module's forward()."""
    h_seq = augru_forward(x[None], h_1, item, packed_params, t_chunk=1, **kw)
    return h_seq[0]


# --------------------------------------------------------------------------
# Pure-JAX references (mirror the PyTorch forward, incl. attention branch)
# --------------------------------------------------------------------------
def augru_cell_ref(x, h1, item, params):
    (Wu, Uu, bu, Wr, Ur, br, Wh, Uh, bh, Wa) = params
    hp = lax.Precision.HIGHEST
    mm = lambda a, b_: jnp.dot(a, b_, precision=hp)
    u = jax.nn.sigmoid(mm(x, Wu) + mm(h1, Uu) + bu)
    r = jax.nn.sigmoid(mm(x, Wr) + mm(h1, Ur) + br)
    h_hat = jnp.tanh(mm(x, Wh) + r * mm(h1, Uh) + bh)
    hWi = jnp.sum(mm(x, Wa) * item, axis=1, keepdims=True)
    a = jax.nn.softmax(hWi, axis=1)          # length-1 axis -> identically 1
    u_hat = a * u
    return (1.0 - u_hat) * h1 + u_hat * h_hat


def augru_seq_ref(x_seq, h0, item, params):
    def step(h, x_t):
        h_new = augru_cell_ref(x_t, h, item, params)
        return h_new, h_new
    _, hs = lax.scan(step, h0, x_seq)
    return hs


def init_params(key, embed_dim):
    """Deterministic init matching the module's parameter shapes."""
    ks = jax.random.split(key, 10)
    D = embed_dim

    def xavier(k, shape):
        fan_in, fan_out = shape[1], shape[0]
        bound = (6.0 / (fan_in + fan_out)) ** 0.5
        return jax.random.uniform(k, shape, jnp.float32, -bound, bound)

    Wu = jax.random.uniform(ks[0], (D, D), jnp.float32)
    Uu = jax.random.uniform(ks[1], (D, D), jnp.float32)
    bu = xavier(ks[2], (1, D))
    Wr = xavier(ks[3], (D, D))
    Ur = xavier(ks[4], (D, D))
    br = xavier(ks[5], (1, D))
    Wh = xavier(ks[6], (D, D))
    Uh = xavier(ks[7], (D, D))
    bh = xavier(ks[8], (1, D))
    Wa = xavier(ks[9], (D, D))
    return (Wu, Uu, bu, Wr, Ur, br, Wh, Uh, bh, Wa)


# --------------------------------------------------------------------------
# Test
# --------------------------------------------------------------------------
if __name__ == "__main__":
    T, B, D = 8, 16, 32
    key = jax.random.PRNGKey(0)
    kx, kh, ki, kp = jax.random.split(key, 4)

    x_seq = jax.random.normal(kx, (T, B, D), jnp.float32)
    h0 = jax.random.normal(kh, (B, D), jnp.float32)
    item = jax.random.normal(ki, (B, D), jnp.float32)
    params = init_params(kp, D)
    packed = pack_augru_params(params)     # one-time weight/bias fusion

    h_seq_ref = augru_seq_ref(x_seq, h0, item, params)
    h_cell_ref = augru_cell_ref(x_seq[0], h0, item, params)

    # 1) Exactness of the fused-recurrence kernel (6-pass f32 matmul).
    h_seq_exact = jax.block_until_ready(
        augru_forward(x_seq, h0, item, packed, t_chunk=4, b_block=8,
                      precision=lax.Precision.HIGHEST))
    assert h_seq_exact.shape == (T, B, D)
    err = jnp.max(jnp.abs(h_seq_exact - h_seq_ref))
    assert jnp.allclose(h_seq_exact, h_seq_ref, atol=1e-5, rtol=1e-5), (
        f"HIGHEST max abs err {err}")

    # 2) Performance default: bf16_3x (Precision.HIGH) matmuls; looser
    #    tolerance since the 3-pass error compounds over the T-step recurrence.
    h_seq_fast = jax.block_until_ready(
        augru_forward(x_seq, h0, item, packed, t_chunk=4, b_block=8))
    err = jnp.max(jnp.abs(h_seq_fast - h_seq_ref))
    assert jnp.allclose(h_seq_fast, h_seq_ref, atol=1e-3, rtol=1e-3), (
        f"HIGH max abs err {err}")

    # 3) Single-cell step: matches the PyTorch module's forward() signature.
    h_cell = jax.block_until_ready(augru_cell(x_seq[0], h0, item, packed))
    assert h_cell.shape == (B, D)
    err = jnp.max(jnp.abs(h_cell - h_cell_ref))
    assert jnp.allclose(h_cell, h_cell_ref, atol=1e-3, rtol=1e-3), (
        f"cell max abs err {err}")

    print("KERNEL_OK")
</pallas_src>

<mosaic_0001>
module attributes {stable_mosaic.version = 11 : i64} {
  func.func @_augru_seq_kernel(%arg0: i32, %arg1: i32, %arg2: memref<4x8x32xf32, #tpu.memory_space<vmem>>, %arg3: memref<8x32xf32, #tpu.memory_space<vmem>>, %arg4: memref<32x96xf32, #tpu.memory_space<vmem>>, %arg5: memref<32x96xf32, #tpu.memory_space<vmem>>, %arg6: memref<1x96xf32, #tpu.memory_space<vmem>>, %arg7: memref<4x8x32xf32, #tpu.memory_space<vmem>>, %arg8: memref<8x32xf32, #tpu.memory_space<vmem>>) attributes {dimension_semantics = [#tpu.dimension_semantics<parallel>, #tpu.dimension_semantics<arbitrary>], iteration_bounds = array<i64: 2, 2>, scalar_prefetch = 0 : i64, scratch_operands = 1 : i64, tpu.core_type = #tpu.core_type<tc>, window_params = [{transform_indices = @transform_0, window_bounds = array<i64: 4, 8, 32>}, {transform_indices = @transform_1, window_bounds = array<i64: 8, 32>}, {pipeline_mode = #tpu.pipeline_mode<synchronous>, transform_indices = @transform_2, window_bounds = array<i64: 32, 96>}, {pipeline_mode = #tpu.pipeline_mode<synchronous>, transform_indices = @transform_3, window_bounds = array<i64: 32, 96>}, {pipeline_mode = #tpu.pipeline_mode<synchronous>, transform_indices = @transform_4, window_bounds = array<i64: 1, 96>}, {transform_indices = @transform_5, window_bounds = array<i64: 4, 8, 32>}]} {
    %c0_i32 = arith.constant 0 : i32
    %0 = arith.cmpi eq, %arg1, %c0_i32 : i32
    %1 = arith.extui %0 : i1 to i32
    %c0_i32_0 = arith.constant 0 : i32
    %2 = arith.cmpi ne, %1, %c0_i32_0 : i32
    scf.if %2 {
      %c0_46 = arith.constant 0 : index
      %c0_47 = arith.constant 0 : index
      %154 = vector.load %arg3[%c0_46, %c0_47] : memref<8x32xf32, #tpu.memory_space<vmem>>, vector<8x32xf32>
      %c0_48 = arith.constant 0 : index
      %c0_49 = arith.constant 0 : index
      %155 = vector.load %arg8[%c0_48, %c0_49] : memref<8x32xf32, #tpu.memory_space<vmem>>, vector<8x32xf32>
      tpu.vector_store %arg8[%c0_48, %c0_49], %154 {strides = array<i32>} : memref<8x32xf32, #tpu.memory_space<vmem>>, vector<8x32xf32>,
    } else {
    }
    %c0 = arith.constant 0 : index
    %c0_1 = arith.constant 0 : index
    %3 = vector.load %arg4[%c0, %c0_1] : memref<32x96xf32, #tpu.memory_space<vmem>>, vector<32x96xf32>
    %c0_2 = arith.constant 0 : index
    %c0_3 = arith.constant 0 : index
    %4 = vector.load %arg5[%c0_2, %c0_3] : memref<32x96xf32, #tpu.memory_space<vmem>>, vector<32x96xf32>
    %c0_4 = arith.constant 0 : index
    %c0_5 = arith.constant 0 : index
    %5 = vector.load %arg6[%c0_4, %c0_5] : memref<1x96xf32, #tpu.memory_space<vmem>>, vector<1x96xf32>
    %6 = vector.shape_cast %5 : vector<1x96xf32> to vector<1x96xf32>
    %7 = vector.broadcast %6 : vector<1x96xf32> to vector<8x96xf32>
    %c0_6 = arith.constant 0 : index
    %c0_7 = arith.constant 0 : index
    %8 = vector.load %arg8[%c0_6, %c0_7] : memref<8x32xf32, #tpu.memory_space<vmem>>, vector<8x32xf32>
    %c0_i32_8 = arith.constant 0 : i32
    %9 = arith.index_cast %c0_i32_8 : i32 to index
    %c0_9 = arith.constant 0 : index
    %c0_10 = arith.constant 0 : index
    %10 = vector.load %arg2[%9, %c0_9, %c0_10] : memref<4x8x32xf32, #tpu.memory_space<vmem>>, vector<1x8x32xf32>
    %11 = vector.shape_cast %10 : vector<1x8x32xf32> to vector<8x32xf32>
    %cst = arith.constant dense<0.000000e+00> : vector<8x96xf32>
    %12 = tpu.matmul %11, %3, %cst {dimension_numbers = #tpu.dot_dimension_numbers<[1], [0], [0], [1], [0, 0, 1, 1], [], []>, precision = #tpu.contract_precision<fp32>} : vector<8x32xf32>, vector<32x96xf32>, vector<8x96xf32> -> vector<8x96xf32>
    %13 = arith.addf %12, %7 : vector<8x96xf32>
    %cst_11 = arith.constant dense<0.000000e+00> : vector<8x96xf32>
    %14 = tpu.matmul %8, %4, %cst_11 {dimension_numbers = #tpu.dot_dimension_numbers<[1], [0], [0], [1], [0, 0, 1, 1], [], []>, precision = #tpu.contract_precision<fp32>} : vector<8x32xf32>, vector<32x96xf32>, vector<8x96xf32> -> vector<8x96xf32>
    %15 = vector.extract_strided_slice %13 {offsets = [0, 0], sizes = [8, 32], strides = [1, 1]} : vector<8x96xf32> to vector<8x32xf32>
    %16 = vector.extract_strided_slice %14 {offsets = [0, 0], sizes = [8, 32], strides = [1, 1]} : vector<8x96xf32> to vector<8x32xf32>
    %17 = arith.addf %15, %16 : vector<8x32xf32>
    %18 = arith.negf %17 : vector<8x32xf32>
    %19 = math.exp %18 : vector<8x32xf32>
    %cst_12 = arith.constant 1.000000e+00 : f32
    %20 = vector.broadcast %cst_12 : f32 to vector<8x32xf32>
    %21 = arith.addf %20, %19 : vector<8x32xf32>
    %22 = arith.divf %20, %21 : vector<8x32xf32>
    %23 = vector.extract_strided_slice %13 {offsets = [0, 32], sizes = [8, 32], strides = [1, 1]} : vector<8x96xf32> to vector<8x32xf32>
    %24 = vector.extract_strided_slice %14 {offsets = [0, 32], sizes = [8, 32], strides = [1, 1]} : vector<8x96xf32> to vector<8x32xf32>
    %25 = arith.addf %23, %24 : vector<8x32xf32>
    %26 = arith.negf %25 : vector<8x32xf32>
    %27 = math.exp %26 : vector<8x32xf32>
    %cst_13 = arith.constant 1.000000e+00 : f32
    %28 = vector.broadcast %cst_13 : f32 to vector<8x32xf32>
    %29 = arith.addf %28, %27 : vector<8x32xf32>
    %30 = arith.divf %28, %29 : vector<8x32xf32>
    %31 = vector.extract_strided_slice %13 {offsets = [0, 64], sizes = [8, 32], strides = [1, 1]} : vector<8x96xf32> to vector<8x32xf32>
    %32 = vector.extract_strided_slice %14 {offsets = [0, 64], sizes = [8, 32], strides = [1, 1]} : vector<8x96xf32> to vector<8x32xf32>
    %33 = arith.mulf %30, %32 : vector<8x32xf32>
    %34 = arith.addf %31, %33 : vector<8x32xf32>
    %35 = math.tanh %34 : vector<8x32xf32>
    %cst_14 = arith.constant 1.000000e+00 : f32
    %36 = vector.broadcast %cst_14 : f32 to vector<8x32xf32>
    %37 = arith.subf %36, %22 : vector<8x32xf32>
    %38 = arith.mulf %37, %8 : vector<8x32xf32>
    %39 = arith.mulf %22, %35 : vector<8x32xf32>
    %40 = arith.addf %38, %39 : vector<8x32xf32>
    %41 = arith.index_cast %c0_i32_8 : i32 to index
    %c0_15 = arith.constant 0 : index
    %c0_16 = arith.constant 0 : index
    %42 = vector.load %arg7[%41, %c0_15, %c0_16] : memref<4x8x32xf32, #tpu.memory_space<vmem>>, vector<1x8x32xf32>
    %43 = vector.shape_cast %42 : vector<1x8x32xf32> to vector<8x32xf32>
    %44 = vector.shape_cast %40 : vector<8x32xf32> to vector<1x8x32xf32>
    tpu.vector_store %arg7[%41, %c0_15, %c0_16], %44 {strides = array<i32>} : memref<4x8x32xf32, #tpu.memory_space<vmem>>, vector<1x8x32xf32>,
    %c1_i32 = arith.constant 1 : i32
    %45 = arith.index_cast %c1_i32 : i32 to index
    %c0_17 = arith.constant 0 : index
    %c0_18 = arith.constant 0 : index
    %46 = vector.load %arg2[%45, %c0_17, %c0_18] : memref<4x8x32xf32, #tpu.memory_space<vmem>>, vector<1x8x32xf32>
    %47 = vector.shape_cast %46 : vector<1x8x32xf32> to vector<8x32xf32>
    %cst_19 = arith.constant dense<0.000000e+00> : vector<8x96xf32>
    %48 = tpu.matmul %47, %3, %cst_19 {dimension_numbers = #tpu.dot_dimension_numbers<[1], [0], [0], [1], [0, 0, 1, 1], [], []>, precision = #tpu.contract_precision<fp32>} : vector<8x32xf32>, vector<32x96xf32>, vector<8x96xf32> -> vector<8x96xf32>
    %49 = arith.addf %48, %7 : vector<8x96xf32>
    %cst_20 = arith.constant dense<0.000000e+00> : vector<8x96xf32>
    %50 = tpu.matmul %40, %4, %cst_20 {dimension_numbers = #tpu.dot_dimension_numbers<[1], [0], [0], [1], [0, 0, 1, 1], [], []>, precision = #tpu.contract_precision<fp32>} : vector<8x32xf32>, vector<32x96xf32>, vector<8x96xf32> -> vector<8x96xf32>
    %51 = vector.extract_strided_slice %49 {offsets = [0, 0], sizes = [8, 32], strides = [1, 1]} : vector<8x96xf32> to vector<8x32xf32>
    %52 = vector.extract_strided_slice %50 {offsets = [0, 0], sizes = [8, 32], strides = [1, 1]} : vector<8x96xf32> to vector<8x32xf32>
    %53 = arith.addf %51, %52 : vector<8x32xf32>
    %54 = arith.negf %53 : vector<8x32xf32>
    %55 = math.exp %54 : vector<8x32xf32>
    %cst_21 = arith.constant 1.000000e+00 : f32
    %56 = vector.broadcast %cst_21 : f32 to vector<8x32xf32>
    %57 = arith.addf %56, %55 : vector<8x32xf32>
    %58 = arith.divf %56, %57 : vector<8x32xf32>
    %59 = vector.extract_strided_slice %49 {offsets = [0, 32], sizes = [8, 32], strides = [1, 1]} : vector<8x96xf32> to vector<8x32xf32>
    %60 = vector.extract_strided_slice %50 {offsets = [0, 32], sizes = [8, 32], strides = [1, 1]} : vector<8x96xf32> to vector<8x32xf32>
    %61 = arith.addf %59, %60 : vector<8x32xf32>
    %62 = arith.negf %61 : vector<8x32xf32>
    %63 = math.exp %62 : vector<8x32xf32>
    %cst_22 = arith.constant 1.000000e+00 : f32
    %64 = vector.broadcast %cst_22 : f32 to vector<8x32xf32>
    %65 = arith.addf %64, %63 : vector<8x32xf32>
    %66 = arith.divf %64, %65 : vector<8x32xf32>
    %67 = vector.extract_strided_slice %49 {offsets = [0, 64], sizes = [8, 32], strides = [1, 1]} : vector<8x96xf32> to vector<8x32xf32>
    %68 = vector.extract_strided_slice %50 {offsets = [0, 64], sizes = [8, 32], strides = [1, 1]} : vector<8x96xf32> to vector<8x32xf32>
    %69 = arith.mulf %66, %68 : vector<8x32xf32>
    %70 = arith.addf %67, %69 : vector<8x32xf32>
    %71 = math.tanh %70 : vector<8x32xf32>
    %cst_23 = arith.constant 1.000000e+00 : f32
    %72 = vector.broadcast %cst_23 : f32 to vector<8x32xf32>
    %73 = arith.subf %72, %58 : vector<8x32xf32>
    %74 = arith.mulf %73, %40 : vector<8x32xf32>
    %75 = arith.mulf %58, %71 : vector<8x32xf32>
    %76 = arith.addf %74, %75 : vector<8x32xf32>
    %77 = arith.index_cast %c1_i32 : i32 to index
    %c0_24 = arith.constant 0 : index
    %c0_25 = arith.constant 0 : index
    %78 = vector.load %arg7[%77, %c0_24, %c0_25] : memref<4x8x32xf32, #tpu.memory_space<vmem>>, vector<1x8x32xf32>
    %79 = vector.shape_cast %78 : vector<1x8x32xf32> to vector<8x32xf32>
    %80 = vector.shape_cast %76 : vector<8x32xf32> to vector<1x8x32xf32>
    tpu.vector_store %arg7[%77, %c0_24, %c0_25], %80 {strides = array<i32>} : memref<4x8x32xf32, #tpu.memory_space<vmem>>, vector<1x8x32xf32>,
    %c2_i32 = arith.constant 2 : i32
    %81 = arith.index_cast %c2_i32 : i32 to index
    %c0_26 = arith.constant 0 : index
    %c0_27 = arith.constant 0 : index
    %82 = vector.load %arg2[%81, %c0_26, %c0_27] : memref<4x8x32xf32, #tpu.memory_space<vmem>>, vector<1x8x32xf32>
    %83 = vector.shape_cast %82 : vector<1x8x32xf32> to vector<8x32xf32>
    %cst_28 = arith.constant dense<0.000000e+00> : vector<8x96xf32>
    %84 = tpu.matmul %83, %3, %cst_28 {dimension_numbers = #tpu.dot_dimension_numbers<[1], [0], [0], [1], [0, 0, 1, 1], [], []>, precision = #tpu.contract_precision<fp32>} : vector<8x32xf32>, vector<32x96xf32>, vector<8x96xf32> -> vector<8x96xf32>
    %85 = arith.addf %84, %7 : vector<8x96xf32>
    %cst_29 = arith.constant dense<0.000000e+00> : vector<8x96xf32>
    %86 = tpu.matmul %76, %4, %cst_29 {dimension_numbers = #tpu.dot_dimension_numbers<[1], [0], [0], [1], [0, 0, 1, 1], [], []>, precision = #tpu.contract_precision<fp32>} : vector<8x32xf32>, vector<32x96xf32>, vector<8x96xf32> -> vector<8x96xf32>
    %87 = vector.extract_strided_slice %85 {offsets = [0, 0], sizes = [8, 32], strides = [1, 1]} : vector<8x96xf32> to vector<8x32xf32>
    %88 = vector.extract_strided_slice %86 {offsets = [0, 0], sizes = [8, 32], strides = [1, 1]} : vector<8x96xf32> to vector<8x32xf32>
    %89 = arith.addf %87, %88 : vector<8x32xf32>
    %90 = arith.negf %89 : vector<8x32xf32>
    %91 = math.exp %90 : vector<8x32xf32>
    %cst_30 = arith.constant 1.000000e+00 : f32
    %92 = vector.broadcast %cst_30 : f32 to vector<8x32xf32>
    %93 = arith.addf %92, %91 : vector<8x32xf32>
    %94 = arith.divf %92, %93 : vector<8x32xf32>
    %95 = vector.extract_strided_slice %85 {offsets = [0, 32], sizes = [8, 32], strides = [1, 1]} : vector<8x96xf32> to vector<8x32xf32>
    %96 = vector.extract_strided_slice %86 {offsets = [0, 32], sizes = [8, 32], strides = [1, 1]} : vector<8x96xf32> to vector<8x32xf32>
    %97 = arith.addf %95, %96 : vector<8x32xf32>
    %98 = arith.negf %97 : vector<8x32xf32>
    %99 = math.exp %98 : vector<8x32xf32>
    %cst_31 = arith.constant 1.000000e+00 : f32
    %100 = vector.broadcast %cst_31 : f32 to vector<8x32xf32>
    %101 = arith.addf %100, %99 : vector<8x32xf32>
    %102 = arith.divf %100, %101 : vector<8x32xf32>
    %103 = vector.extract_strided_slice %85 {offsets = [0, 64], sizes = [8, 32], strides = [1, 1]} : vector<8x96xf32> to vector<8x32xf32>
    %104 = vector.extract_strided_slice %86 {offsets = [0, 64], sizes = [8, 32], strides = [1, 1]} : vector<8x96xf32> to vector<8x32xf32>
    %105 = arith.mulf %102, %104 : vector<8x32xf32>
    %106 = arith.addf %103, %105 : vector<8x32xf32>
    %107 = math.tanh %106 : vector<8x32xf32>
    %cst_32 = arith.constant 1.000000e+00 : f32
    %108 = vector.broadcast %cst_32 : f32 to vector<8x32xf32>
    %109 = arith.subf %108, %94 : vector<8x32xf32>
    %110 = arith.mulf %109, %76 : vector<8x32xf32>
    %111 = arith.mulf %94, %107 : vector<8x32xf32>
    %112 = arith.addf %110, %111 : vector<8x32xf32>
    %113 = arith.index_cast %c2_i32 : i32 to index
    %c0_33 = arith.constant 0 : index
    %c0_34 = arith.constant 0 : index
    %114 = vector.load %arg7[%113, %c0_33, %c0_34] : memref<4x8x32xf32, #tpu.memory_space<vmem>>, vector<1x8x32xf32>
    %115 = vector.shape_cast %114 : vector<1x8x32xf32> to vector<8x32xf32>
    %116 = vector.shape_cast %112 : vector<8x32xf32> to vector<1x8x32xf32>
    tpu.vector_store %arg7[%113, %c0_33, %c0_34], %116 {strides = array<i32>} : memref<4x8x32xf32, #tpu.memory_space<vmem>>, vector<1x8x32xf32>,
    %c3_i32 = arith.constant 3 : i32
    %117 = arith.index_cast %c3_i32 : i32 to index
    %c0_35 = arith.constant 0 : index
    %c0_36 = arith.constant 0 : index
    %118 = vector.load %arg2[%117, %c0_35, %c0_36] : memref<4x8x32xf32, #tpu.memory_space<vmem>>, vector<1x8x32xf32>
    %119 = vector.shape_cast %118 : vector<1x8x32xf32> to vector<8x32xf32>
    %cst_37 = arith.constant dense<0.000000e+00> : vector<8x96xf32>
    %120 = tpu.matmul %119, %3, %cst_37 {dimension_numbers = #tpu.dot_dimension_numbers<[1], [0], [0], [1], [0, 0, 1, 1], [], []>, precision = #tpu.contract_precision<fp32>} : vector<8x32xf32>, vector<32x96xf32>, vector<8x96xf32> -> vector<8x96xf32>
    %121 = arith.addf %120, %7 : vector<8x96xf32>
    %cst_38 = arith.constant dense<0.000000e+00> : vector<8x96xf32>
    %122 = tpu.matmul %112, %4, %cst_38 {dimension_numbers = #tpu.dot_dimension_numbers<[1], [0], [0], [1], [0, 0, 1, 1], [], []>, precision = #tpu.contract_precision<fp32>} : vector<8x32xf32>, vector<32x96xf32>, vector<8x96xf32> -> vector<8x96xf32>
    %123 = vector.extract_strided_slice %121 {offsets = [0, 0], sizes = [8, 32], strides = [1, 1]} : vector<8x96xf32> to vector<8x32xf32>
    %124 = vector.extract_strided_slice %122 {offsets = [0, 0], sizes = [8, 32], strides = [1, 1]} : vector<8x96xf32> to vector<8x32xf32>
    %125 = arith.addf %123, %124 : vector<8x32xf32>
    %126 = arith.negf %125 : vector<8x32xf32>
    %127 = math.exp %126 : vector<8x32xf32>
    %cst_39 = arith.constant 1.000000e+00 : f32
    %128 = vector.broadcast %cst_39 : f32 to vector<8x32xf32>
    %129 = arith.addf %128, %127 : vector<8x32xf32>
    %130 = arith.divf %128, %129 : vector<8x32xf32>
    %131 = vector.extract_strided_slice %121 {offsets = [0, 32], sizes = [8, 32], strides = [1, 1]} : vector<8x96xf32> to vector<8x32xf32>
    %132 = vector.extract_strided_slice %122 {offsets = [0, 32], sizes = [8, 32], strides = [1, 1]} : vector<8x96xf32> to vector<8x32xf32>
    %133 = arith.addf %131, %132 : vector<8x32xf32>
    %134 = arith.negf %133 : vector<8x32xf32>
    %135 = math.exp %134 : vector<8x32xf32>
    %cst_40 = arith.constant 1.000000e+00 : f32
    %136 = vector.broadcast %cst_40 : f32 to vector<8x32xf32>
    %137 = arith.addf %136, %135 : vector<8x32xf32>
    %138 = arith.divf %136, %137 : vector<8x32xf32>
    %139 = vector.extract_strided_slice %121 {offsets = [0, 64], sizes = [8, 32], strides = [1, 1]} : vector<8x96xf32> to vector<8x32xf32>
    %140 = vector.extract_strided_slice %122 {offsets = [0, 64], sizes = [8, 32], strides = [1, 1]} : vector<8x96xf32> to vector<8x32xf32>
    %141 = arith.mulf %138, %140 : vector<8x32xf32>
    %142 = arith.addf %139, %141 : vector<8x32xf32>
    %143 = math.tanh %142 : vector<8x32xf32>
    %cst_41 = arith.constant 1.000000e+00 : f32
    %144 = vector.broadcast %cst_41 : f32 to vector<8x32xf32>
    %145 = arith.subf %144, %130 : vector<8x32xf32>
    %146 = arith.mulf %145, %112 : vector<8x32xf32>
    %147 = arith.mulf %130, %143 : vector<8x32xf32>
    %148 = arith.addf %146, %147 : vector<8x32xf32>
    %149 = arith.index_cast %c3_i32 : i32 to index
    %c0_42 = arith.constant 0 : index
    %c0_43 = arith.constant 0 : index
    %150 = vector.load %arg7[%149, %c0_42, %c0_43] : memref<4x8x32xf32, #tpu.memory_space<vmem>>, vector<1x8x32xf32>
    %151 = vector.shape_cast %150 : vector<1x8x32xf32> to vector<8x32xf32>
    %152 = vector.shape_cast %148 : vector<8x32xf32> to vector<1x8x32xf32>
    tpu.vector_store %arg7[%149, %c0_42, %c0_43], %152 {strides = array<i32>} : memref<4x8x32xf32, #tpu.memory_space<vmem>>, vector<1x8x32xf32>,
    %c4_i32 = arith.constant 4 : i32
    %c0_44 = arith.constant 0 : index
    %c0_45 = arith.constant 0 : index
    %153 = vector.load %arg8[%c0_44, %c0_45] : memref<8x32xf32, #tpu.memory_space<vmem>>, vector<8x32xf32>
    tpu.vector_store %arg8[%c0_44, %c0_45], %148 {strides = array<i32>} : memref<8x32xf32, #tpu.memory_space<vmem>>, vector<8x32xf32>,
    return
  }
  func.func @transform_0(%arg0: i32, %arg1: i32) -> (i32, i32, i32) {
    %c0_i32 = arith.constant 0 : i32
    %c0_i32_0 = arith.constant 0 : i32
    return %arg1, %arg0, %c0_i32 : i32, i32, i32
  }
  func.func @transform_1(%arg0: i32, %arg1: i32) -> (i32, i32) {
    %c0_i32 = arith.constant 0 : i32
    %c0_i32_0 = arith.constant 0 : i32
    return %arg0, %c0_i32 : i32, i32
  }
  func.func @transform_2(%arg0: i32, %arg1: i32) -> (i32, i32) {
    %c0_i32 = arith.constant 0 : i32
    %c0_i32_0 = arith.constant 0 : i32
    %c0_i32_1 = arith.constant 0 : i32
    return %c0_i32, %c0_i32_0 : i32, i32
  }
  func.func @transform_3(%arg0: i32, %arg1: i32) -> (i32, i32) {
    %c0_i32 = arith.constant 0 : i32
    %c0_i32_0 = arith.constant 0 : i32
    %c0_i32_1 = arith.constant 0 : i32
    return %c0_i32, %c0_i32_0 : i32, i32
  }
  func.func @transform_4(%arg0: i32, %arg1: i32) -> (i32, i32) {
    %c0_i32 = arith.constant 0 : i32
    %c0_i32_0 = arith.constant 0 : i32
    %c0_i32_1 = arith.constant 0 : i32
    return %c0_i32, %c0_i32_0 : i32, i32
  }
  func.func @transform_5(%arg0: i32, %arg1: i32) -> (i32, i32, i32) {
    %c0_i32 = arith.constant 0 : i32
    %c0_i32_0 = arith.constant 0 : i32
    return %arg1, %arg0, %c0_i32 : i32, i32, i32
  }
}

</mosaic_0001>

<llo_original>
// kernel: tpu_custom_call.1
$region0: #{tpu_custom_call.1}
  #allocation0 [shape = 'u32[]', space=smem, size = 0x4, offset = 0x4, fixed_abs, tag = 'smem constant byte address 0x4 - core index']
  #allocation1 [shape = 'u32[144,128]{1,0:T(1,128)}', space=vmem, size = 0x12000, scoped, tag = 'internal scratch']
  #allocation2 [shape = 'f32[8,32]{1,0:T(8,128)}', space=vmem, size = 0x1000, scoped, tag = 'scratch operand']
  %s0 = inlined_call_operand.hbm [shape: f32[8,16,32], index: 0, kind: input, shape index: {}]
  %s1 = inlined_call_operand.hbm [shape: f32[16,32], index: 1, kind: input, shape index: {}]
  %s2 = inlined_call_operand.hbm [shape: f32[32,96], index: 2, kind: input, shape index: {}]
  %s3 = inlined_call_operand.hbm [shape: f32[32,96], index: 3, kind: input, shape index: {}]
  %s4 = inlined_call_operand.vmem [shape: f32[1,96], index: 4, kind: input, shape index: {}]
  %s5 = inlined_call_operand.hbm [shape: f32[8,16,32], index: 5, kind: output, shape index: {}]
  %s6 = sld [smem:[#allocation0]]
  $region73: #{tpu_custom_call.1} parent=0
    _
  %s8 = ssub.s32 1, %s6
  %s9 = scalar_select 0, %s8, %s6
  $region1: #{tpu_custom_call.1} parent=0
    #allocation3 [shape = 'u8[32768]{0}', space=vmem, size = 0x8000, scoped, tag = 'input window, operand 0']
    #allocation4 [shape = 's32[2]{0}', space=sflag, size = 0x8, scoped, tag = 'scoped memory for tpu_custom_call.1']
    #allocation5 [shape = 's32[2]{0}', space=sflag, size = 0x8, scoped, tag = 'scoped memory for tpu_custom_call.1']
    #allocation6 [shape = 'u8[8192]{0}', space=vmem, size = 0x2000, scoped, tag = 'input window, operand 1']
    #allocation7 [shape = 's32[2]{0}', space=sflag, size = 0x8, scoped, tag = 'scoped memory for tpu_custom_call.1']
    #allocation8 [shape = 'u8[16384]{0}', space=vmem, size = 0x4000, scoped, tag = 'input window, operand 2, single buffered']
    #allocation9 [shape = 'u8[16384]{0}', space=vmem, size = 0x4000, scoped, tag = 'input window, operand 3, single buffered']
    #allocation10 [shape = 's32[1]{0}', space=sflag, size = 0x4, scoped, tag = 'scoped memory for tpu_custom_call.1']
    #allocation11 [shape = 'u8[32768]{0}', space=vmem, size = 0x8000, scoped, tag = 'output window, operand 0']
    %10 = vsyncpa [#allocation4], 0
    %s11 = scalar_lea.sflag [#allocation4], 1
    %12 = vsyncpa %s11, 0
    %13 = vsyncpa [#allocation7], 0
    %s14 = scalar_lea.sflag [#allocation7], 1
    %15 = vsyncpa %s14, 0
    %16 = vsyncpa [#allocation10], 0
    %17 = vsyncpa [#allocation5], 0
    %s18 = scalar_lea.sflag [#allocation5], 1
    %19 = vsyncpa %s18, 0
    loop: start=0, step=1, limit=6
    $region2: #{tpu_custom_call.1} parent=1 // loop_pre_header
      _
    $region3: #{tpu_custom_call.1} parent=1 // loop_header
      %s21 = sphi 0, %s25
      %p22 = scmp.ge.s32.totalorder %s21, 6
      %s28 = sphi 0, %s40
      %s29 = sphi 0, %s36
      %s30 = sphi 0, %s28
      %s31 = sphi 0, %s29
      %s32 = sphi 0, %s30
      %s33 = sphi 0, %s31
      %s45 = sphi 0, %s47
      %s48 = sphi 0, %s45
      %s49 = sphi 0, %s48
      %s65 = sphi 0, %s49
      %s71 = sphi 0, %s73
      %s74 = sphi 0, %s71
      %s75 = sphi 0, %s74
      %s91 = sphi 0, %s75
      %s95 = sphi 0, %s95
      %s97 = sphi 0, %s95
      %s98 = sphi 0, %s97
      %s112 = sphi 0, %s98
      %s116 = sphi 0, %s116
      %s118 = sphi 0, %s116
      %s119 = sphi 0, %s118
      %s133 = sphi 0, %s119
      %s137 = sphi 0, %s137
      %s139 = sphi 0, %s137
      %s140 = sphi 0, %s139
      %s154 = sphi 0, %s140
      %s162 = sphi 0, %s164
      %s165 = sphi 0, %s162
      %s166 = sphi 0, %s165
      %s182 = sphi 0, %s166
    $region4: #{tpu_custom_call.1} parent=1 // loop_header_branch
      %24 = sbr.rel (%p22) target = $region8
    $region5: #{tpu_custom_call.1} parent=1 // loop_body
      %s26 = ssub.s32 %s21, 1
      %s27 = ssub.s32 %s21, 2
      %s34 = sadd.s32 1, %s29
      %p35 = scmp.ge.s32.totalorder %s34, 2
      %s36 = scalar_select %p35, 0, %s34
      %s37 = sadd.s32 1, %s28
      %s38 = scalar_select %p35, %s37, %s28
      %p39 = scmp.ge.s32.totalorder %s38, 2
      %s40 = scalar_select %p39, 0, %s38
      %s41 = ssub.s32 %s29, %s36
      %s42 = ssub.s32 %s28, %s40
      %s43 = sor.u32 %s41, %s42
      %p44 = scmp.eq.s32.totalorder %s43, 0
      %s46 = sadd.s32 %s45, 1
      %s47 = scalar_select %p44, %s45, %s46
      %p50 = pneg %p44
      %p51 = scmp.eq.s32.totalorder %s21, 3
      %p52 = por %p50, %p51
      %p53 = scmp.ne.s32.totalorder %s45, %s48
      %p54 = scmp.eq.s32.totalorder %s21, 0
      %p55 = por %p53, %p54
      %p56 = scmp.ne.s32.totalorder %s45, %s48
      %p57 = scmp.eq.s32.totalorder %s26, 3
      %p58 = por %p56, %p57
      %p59 = scmp.ne.s32.totalorder %s48, %s49
      %p60 = scmp.eq.s32.totalorder %s26, 0
      %p61 = por %p59, %p60
      %p62 = scmp.ne.s32.totalorder %s48, %s49
      %p63 = scmp.eq.s32.totalorder %s27, 3
      %p64 = por %p62, %p63
      %p66 = scmp.ne.s32.totalorder %s49, %s65
      %p67 = scmp.eq.s32.totalorder %s27, 0
      %p68 = por %p66, %p67
      %s69 = ssub.s32 %s28, %s40
      %p70 = scmp.eq.s32.totalorder %s69, 0
      %s72 = sadd.s32 %s71, 1
      %s73 = scalar_select %p70, %s71, %s72
      %p76 = pneg %p70
      %p77 = scmp.eq.s32.totalorder %s21, 3
      %p78 = por %p76, %p77
      %p79 = scmp.ne.s32.totalorder %s71, %s74
      %p80 = scmp.eq.s32.totalorder %s21, 0
      %p81 = por %p79, %p80
      %p82 = scmp.ne.s32.totalorder %s71, %s74
      %p83 = scmp.eq.s32.totalorder %s26, 3
      %p84 = por %p82, %p83
      %p85 = scmp.ne.s32.totalorder %s74, %s75
      %p86 = scmp.eq.s32.totalorder %s26, 0
      %p87 = por %p85, %p86
      %p88 = scmp.ne.s32.totalorder %s74, %s75
      %p89 = scmp.eq.s32.totalorder %s27, 3
      %p90 = por %p88, %p89
      %p92 = scmp.ne.s32.totalorder %s75, %s91
      %p93 = scmp.eq.s32.totalorder %s27, 0
      %p94 = por %p92, %p93
      %s96 = sadd.s32 %s95, 1
      %p99 = scmp.eq.s32.totalorder %s21, 3
      %p100 = scmp.ne.s32.totalorder %s95, %s97
      %p101 = scmp.eq.s32.totalorder %s21, 0
      %p102 = por %p100, %p101
      %p103 = scmp.ne.s32.totalorder %s95, %s97
      %p104 = scmp.eq.s32.totalorder %s26, 3
      %p105 = por %p103, %p104
      %p106 = scmp.ne.s32.totalorder %s97, %s98
      %p107 = scmp.eq.s32.totalorder %s26, 0
      %p108 = por %p106, %p107
      %p109 = scmp.ne.s32.totalorder %s97, %s98
      %p110 = scmp.eq.s32.totalorder %s27, 3
      %p111 = por %p109, %p110
      %p113 = scmp.ne.s32.totalorder %s98, %s112
      %p114 = scmp.eq.s32.totalorder %s27, 0
      %p115 = por %p113, %p114
      %s117 = sadd.s32 %s116, 1
      %p120 = scmp.eq.s32.totalorder %s21, 3
      %p121 = scmp.ne.s32.totalorder %s116, %s118
      %p122 = scmp.eq.s32.totalorder %s21, 0
      %p123 = por %p121, %p122
      %p124 = scmp.ne.s32.totalorder %s116, %s118
      %p125 = scmp.eq.s32.totalorder %s26, 3
      %p126 = por %p124, %p125
      %p127 = scmp.ne.s32.totalorder %s118, %s119
      %p128 = scmp.eq.s32.totalorder %s26, 0
      %p129 = por %p127, %p128
      %p130 = scmp.ne.s32.totalorder %s118, %s119
      %p131 = scmp.eq.s32.totalorder %s27, 3
      %p132 = por %p130, %p131
      %p134 = scmp.ne.s32.totalorder %s119, %s133
      %p135 = scmp.eq.s32.totalorder %s27, 0
      %p136 = por %p134, %p135
      %s138 = sadd.s32 %s137, 1
      %p141 = scmp.eq.s32.totalorder %s21, 3
      %p142 = scmp.ne.s32.totalorder %s137, %s139
      %p143 = scmp.eq.s32.totalorder %s21, 0
      %p144 = por %p142, %p143
      %p145 = scmp.ne.s32.totalorder %s137, %s139
      %p146 = scmp.eq.s32.totalorder %s26, 3
      %p147 = por %p145, %p146
      %p148 = scmp.ne.s32.totalorder %s139, %s140
      %p149 = scmp.eq.s32.totalorder %s26, 0
      %p150 = por %p148, %p149
      %p151 = scmp.ne.s32.totalorder %s139, %s140
      %p152 = scmp.eq.s32.totalorder %s27, 3
      %p153 = por %p151, %p152
      %p155 = scmp.ne.s32.totalorder %s140, %s154
      %p156 = scmp.eq.s32.totalorder %s27, 0
      %p157 = por %p155, %p156
      %s158 = ssub.s32 %s29, %s36
      %s159 = ssub.s32 %s28, %s40
      %s160 = sor.u32 %s158, %s159
      %p161 = scmp.eq.s32.totalorder %s160, 0
      %s163 = sadd.s32 %s162, 1
      %s164 = scalar_select %p161, %s162, %s163
      %p167 = pneg %p161
      %p168 = scmp.eq.s32.totalorder %s21, 3
      %p169 = por %p167, %p168
      %p170 = scmp.ne.s32.totalorder %s162, %s165
      %p171 = scmp.eq.s32.totalorder %s21, 0
      %p172 = por %p170, %p171
      %p173 = scmp.ne.s32.totalorder %s162, %s165
      %p174 = scmp.eq.s32.totalorder %s26, 3
      %p175 = por %p173, %p174
      %p176 = scmp.ne.s32.totalorder %s165, %s166
      %p177 = scmp.eq.s32.totalorder %s26, 0
      %p178 = por %p176, %p177
      %p179 = scmp.ne.s32.totalorder %s165, %s166
      %p180 = scmp.eq.s32.totalorder %s27, 3
      %p181 = por %p179, %p180
      %p183 = scmp.ne.s32.totalorder %s166, %s182
      %p184 = scmp.eq.s32.totalorder %s27, 0
      %p185 = por %p183, %p184
      %p186 = scmp.le.s32.totalorder 1, %s21
      %p187 = scmp.lt.s32.totalorder %s21, 5
      %p188 = pnand %p186, %p187
      %p189 = pneg %p188
      // Predicated region
      $region9: #{tpu_custom_call.1} parent=5 // pred_check
        _
      $region10: #{tpu_custom_call.1} parent=5 // pred_check_branch
        %191 = sbr.rel (%p188) target = $region12
      $region11: #{tpu_custom_call.1} parent=5 // pred_region
        %s192 = ssub.s32 %s21, 1
        // Predicated region
        $region13: #{tpu_custom_call.1} parent=11 // pred_check
          %p193 = pneg %p108
        $region14: #{tpu_custom_call.1} parent=11 // pred_check_branch
          %195 = sbr.rel (%p193) target = $region16
        $region15: #{tpu_custom_call.1} parent=11 // pred_region
          %s197 = ssub.s32 512, 512
          %198 = vsyncadd [#allocation7], %s197
          %s199 = sshll.u32 [#allocation8], 4
          %s200 = int_to_ptr.vmem [resolvable:$true] %s199
          %205 = dma.hbm_to_vmem [thread:$0]  %s2, 512, %s200, [#allocation7], 128, 128, 8
        $region16: #{tpu_custom_call.1} parent=11 // pred_fallthru
          _
        // Predicated region
        $region17: #{tpu_custom_call.1} parent=11 // pred_check
          %p206 = pneg %p129
        $region18: #{tpu_custom_call.1} parent=11 // pred_check_branch
          %208 = sbr.rel (%p206) target = $region20
        $region19: #{tpu_custom_call.1} parent=11 // pred_region
          %s210 = ssub.s32 512, 512
          %211 = vsyncadd [#allocation10], %s210
          %s212 = sshll.u32 [#allocation9], 4
          %s213 = int_to_ptr.vmem [resolvable:$true] %s212
          %218 = dma.hbm_to_vmem [thread:$0]  %s3, 512, %s213, [#allocation10], 128, 128, 8
        $region20: #{tpu_custom_call.1} parent=11 // pred_fallthru
          _
        // Predicated region
        $region21: #{tpu_custom_call.1} parent=11 // pred_check
          %p219 = pneg %p150
        $region22: #{tpu_custom_call.1} parent=11 // pred_check_branch
          %221 = sbr.rel (%p219) target = $region24
        $region23: #{tpu_custom_call.1} parent=11 // pred_region
          _
        $region24: #{tpu_custom_call.1} parent=11 // pred_fallthru
          _
      $region12: #{tpu_custom_call.1} parent=5 // pred_fallthru
        _
      %p222 = scmp.lt.s32.totalorder %s21, 4
      // Predicated region
      $region25: #{tpu_custom_call.1} parent=5 // pred_check
        %p223 = pneg %p222
      $region26: #{tpu_custom_call.1} parent=5 // pred_check_branch
        %225 = sbr.rel (%p223) target = $region28
      $region27: #{tpu_custom_call.1} parent=5 // pred_region
        // Predicated region
        $region29: #{tpu_custom_call.1} parent=27 // pred_check
          %p226 = pneg %p55
        $region30: #{tpu_custom_call.1} parent=27 // pred_check_branch
          %228 = sbr.rel (%p226) target = $region32
        $region31: #{tpu_custom_call.1} parent=27 // pred_region
          %s229 = sand.u32 %s45, 1
          %s230 = scalar_lea.sflag [#allocation4], %s229
          %s231 = sand.u32 %s45, 1
          %s232 = smul.addr %s231, 32
          %s233 = scalar_lea.vmem [#allocation3], %s232
          %s234 = smul.u32 4, %s29
          %s236 = ssub.s32 512, 512
          %237 = vsyncadd %s230, %s236
          %s238 = smul.addr %s234, 2
          %s239 = sadd.s32 %s28, %s238
          %s240 = smul.addr %s239, 128
          %s241 = scalar_lea.hbm %s0, %s240
          %s242 = sshll.u32 %s233, 4
          %s243 = int_to_ptr.vmem [resolvable:$true] %s242
          %248 = dma.hbm_to_vmem [thread:$0]  %s241, 512, %s243, %s230, 256, 128, 8
        $region32: #{tpu_custom_call.1} parent=27 // pred_fallthru
          _
        // Predicated region
        $region33: #{tpu_custom_call.1} parent=27 // pred_check
          %p249 = pneg %p81
        $region34: #{tpu_custom_call.1} parent=27 // pred_check_branch
          %251 = sbr.rel (%p249) target = $region36
        $region35: #{tpu_custom_call.1} parent=27 // pred_region
          %s252 = sand.u32 %s21, 1
          %s253 = scalar_lea.sflag [#allocation7], %s252
          %s254 = sand.u32 %s71, 1
          %s255 = smul.addr %s254, 8
          %s256 = scalar_lea.vmem [#allocation6], %s255
          %s258 = ssub.s32 128, 128
          %259 = vsyncadd %s253, %s258
          %s260 = smul.addr %s28, 128
          %s261 = scalar_lea.hbm %s1, %s260
          %s263 = sshll.u32 %s256, 4
          %s264 = int_to_ptr.vmem [resolvable:$true] %s263
          %266 = dma.hbm_to_vmem [thread:$0]  %s261, 128, %s264, %s253
        $region36: #{tpu_custom_call.1} parent=27 // pred_fallthru
          _
      $region28: #{tpu_custom_call.1} parent=5 // pred_fallthru
        _
      %p267 = scmp.le.s32.totalorder 1, %s21
      %p268 = scmp.lt.s32.totalorder %s21, 5
      %p269 = pnand %p267, %p268
      %p270 = pneg %p269
      // Predicated region
      $region37: #{tpu_custom_call.1} parent=5 // pred_check
        _
      $region38: #{tpu_custom_call.1} parent=5 // pred_check_branch
        %272 = sbr.rel (%p269) target = $region40
      $region39: #{tpu_custom_call.1} parent=5 // pred_region
        %s273 = ssub.s32 %s21, 1
        %s274 = sand.u32 %s48, 1
        %s275 = scalar_lea.sflag [#allocation4], %s274
        %s276 = sand.u32 %s48, 1
        %s277 = smul.addr %s276, 32
        %s278 = scalar_lea.vmem [#allocation3], %s277
        // Predicated region
        $region41: #{tpu_custom_call.1} parent=39 // pred_check
          %p279 = pneg %p61
        $region42: #{tpu_custom_call.1} parent=39 // pred_check_branch
          %281 = sbr.rel (%p279) target = $region44
        $region43: #{tpu_custom_call.1} parent=39 // pred_region
          %282 = dma.done %s275, 512
        $region44: #{tpu_custom_call.1} parent=39 // pred_fallthru
          _
        %s283 = sand.u32 %s26, 1
        %s284 = scalar_lea.sflag [#allocation7], %s283
        %s285 = sand.u32 %s74, 1
        %s286 = smul.addr %s285, 8
        %s287 = scalar_lea.vmem [#allocation6], %s286
        // Predicated region
        $region45: #{tpu_custom_call.1} parent=39 // pred_check
          %p288 = pneg %p87
        $region46: #{tpu_custom_call.1} parent=39 // pred_check_branch
          %290 = sbr.rel (%p288) target = $region48
        $region47: #{tpu_custom_call.1} parent=39 // pred_region
          %291 = dma.done %s284, 128
        $region48: #{tpu_custom_call.1} parent=39 // pred_fallthru
          _
        // Predicated region
        $region49: #{tpu_custom_call.1} parent=39 // pred_check
          %p292 = pneg %p108
        $region50: #{tpu_custom_call.1} parent=39 // pred_check_branch
          %294 = sbr.rel (%p292) target = $region52
        $region51: #{tpu_custom_call.1} parent=39 // pred_region
          %295 = dma.done [#allocation7], 512
        $region52: #{tpu_custom_call.1} parent=39 // pred_fallthru
          _
        // Predicated region
        $region53: #{tpu_custom_call.1} parent=39 // pred_check
          %p296 = pneg %p129
        $region54: #{tpu_custom_call.1} parent=39 // pred_check_branch
          %298 = sbr.rel (%p296) target = $region56
        $region55: #{tpu_custom_call.1} parent=39 // pred_region
          %299 = dma.done [#allocation10], 512
        $region56: #{tpu_custom_call.1} parent=39 // pred_fallthru
          _
        %s300 = sand.u32 %s48, 1
        %s301 = scalar_lea.sflag [#allocation4], %s300
        %s302 = sand.u32 %s48, 1
        %s303 = smul.addr %s302, 32
        %s304 = scalar_lea.vmem [#allocation3], %s303
        %p305 = pneg %p61
        %p306 = pneg %p58
        %s307 = sand.u32 %s26, 1
        %s308 = scalar_lea.sflag [#allocation7], %s307
        %s309 = sand.u32 %s74, 1
        %s310 = smul.addr %s309, 8
        %s311 = scalar_lea.vmem [#allocation6], %s310
        %p312 = pneg %p87
        %p313 = pneg %p84
        %p314 = pneg %p108
        %p315 = pneg %p105
        %p316 = pneg %p129
        %p317 = pneg %p126
        %p318 = pneg %p150
        %p319 = pneg %p147
        %p320 = pneg %p178
        %p321 = pneg %p175
        %s322 = sand.u32 %s165, 1
        %s323 = scalar_lea.sflag [#allocation5], %s322
        %s324 = sand.u32 %s165, 1
        %s325 = smul.addr %s324, 32
        %s326 = scalar_lea.vmem [#allocation11], %s325
        %s327 = smul.u32 4, %s31
        %s328 = smul.u32 4, %s31
        %p329 = scmp.eq.s32.totalorder %s31, 0
        // Predicated region
        $region57: #{tpu_custom_call.1} parent=39 // pred_check
          %p330 = pneg %p329
        $region58: #{tpu_custom_call.1} parent=39 // pred_check_branch
          %332 = sbr.rel (%p330) target = $region60
        $region59: #{tpu_custom_call.1} parent=39 // pred_region
          %v333 = vld [vmem:[%s287] sm:$0xff]
          %vm334 = vcmask 261120
          %335 = vst.msk [vmem:[#allocation2] sm:$0xff] %vm334, %v333
        $region60: #{tpu_custom_call.1} parent=39 // pred_fallthru
          _
        %v336 = vld [vmem:[#allocation8] sm:$0xff]
        %v337 = vld [vmem:[#allocation8 + $0x8] sm:$0xff]
        %v338 = vld [vmem:[#allocation8 + $0x10] sm:$0xff]
        %v339 = vld [vmem:[#allocation8 + $0x18] sm:$0xff]
        %v340 = vld [vmem:[#allocation9] sm:$0xff]
        %v341 = vld [vmem:[#allocation9 + $0x8] sm:$0xff]
        %v342 = vld [vmem:[#allocation9 + $0x10] sm:$0xff]
        %v343 = vld [vmem:[#allocation9 + $0x18] sm:$0xff]
        %v344 = vld [vmem:[%s4] sm:$0x1]
        %v346 = vlaneseq
        %v347 = vshrl.u32 %v346, 7
        %v348 = vsub.s32 0, %v347
        %v349 = vrot.slane %v344, %v348
        %v351 = vld [vmem:[#allocation2] sm:$0xff]
        %v352 = vld [vmem:[%s278] sm:$0xff]
        %vm353 = vcmask 261120
        %v355 = vsel %vm353, %v352, 0
        %357 = vmatprep.subr.mxu0 0.0
        %v358 = vand.u32 %v336, 4294901760
        %359 = vmatpush1.msra.mxu0 %v358
        %360 = vmatprep.subr.mxu0 0.0
        %v361 = vand.u32 %v337, 4294901760
        %362 = vmatpush1.msra.mxu0 %v361
        %363 = vmatprep.subr.mxu0 0.0
        %v364 = vand.u32 %v338, 4294901760
        %365 = vmatpush1.msra.mxu0 %v364
        %366 = vmatprep.subr.mxu0 0.0
        %v367 = vand.u32 %v339, 4294901760
        %368 = vmatpush1.msra.mxu0 %v367
        %369 = vmatprep.subr.mxu0 0.0
        %370 = vmatpush1.msra.mxu0 0.0
        %371 = vmatprep.subr.mxu0 0.0
        %372 = vmatpush1.msra.mxu0 0.0
        %373 = vmatprep.subr.mxu0 0.0
        %374 = vmatpush1.msra.mxu0 0.0
        %375 = vmatprep.subr.mxu0 0.0
        %376 = vmatpush1.msra.mxu0 0.0
        %377 = vmatprep.subr.mxu0 0.0
        %378 = vmatpush1.msra.mxu0 0.0
        %379 = vmatprep.subr.mxu0 0.0
        %380 = vmatpush1.msra.mxu0 0.0
        %381 = vmatprep.subr.mxu0 0.0
        %382 = vmatpush1.msra.mxu0 0.0
        %383 = vmatprep.subr.mxu0 0.0
        %384 = vmatpush1.msra.mxu0 0.0
        %385 = vmatprep.subr.mxu0 0.0
        %386 = vmatpush1.msra.mxu0 0.0
        %387 = vmatprep.subr.mxu0 0.0
        %388 = vmatpush1.msra.mxu0 0.0
        %389 = vmatprep.subr.mxu0 0.0
        %390 = vmatpush1.msra.mxu0 0.0
        %391 = vmatprep.subr.mxu0 0.0
        %392 = vmatpush1.msra.mxu0 0.0
        %393 = vmatprep.subr.mxu0 0.0
        %394 = vmatpush1.msra.mxu0 0.0
        %395 = vmatprep.subr.mxu0 0.0
        %396 = vmatpush1.msra.mxu0 0.0
        %397 = vmatprep.subr.mxu0 0.0
        %398 = vmatpush1.msra.mxu0 0.0
        %399 = vmatprep.subr.mxu0 0.0
        %400 = vmatpush1.msra.mxu0 0.0
        %401 = vmatprep.subr.mxu0 0.0
        %402 = vmatpush1.msra.mxu0 0.0
        %403 = vmatprep.subr.mxu0 0.0
        %404 = vmatpush1.msra.mxu0 0.0
        %405 = vmatprep.subr.mxu0 0.0
        %406 = vmatpush1.msra.mxu0 0.0
        %407 = vmatprep.subr.mxu0 0.0
        %408 = vmatpush1.msra.mxu0 0.0
        %409 = vmatprep.subr.mxu0 0.0
        %410 = vmatpush1.msra.mxu0 0.0
        %411 = vmatprep.subr.mxu0 0.0
        %412 = vmatpush1.msra.mxu0 0.0
        %413 = vmatprep.subr.mxu0 0.0
        %414 = vmatpush1.msra.mxu0 0.0
        %415 = vmatprep.subr.mxu0 0.0
        %416 = vmatpush1.msra.mxu0 0.0
        %417 = vmatprep.subr.mxu0 0.0
        %418 = vmatpush1.msra.mxu0 0.0
        %419 = vmatprep.subr.mxu0 0.0
        %420 = vmatpush1.msra.mxu0 0.0
        %421 = vmatprep.subr.mxu0 0.0
        %422 = vmatpush1.msra.mxu0 0.0
        %423 = vmatprep.subr.mxu0 0.0
        %424 = vmatpush1.msra.mxu0 0.0
        %425 = vmatprep.mubr.f32.mxu0 0.0
        %v426 = vand.u32 %v355, 4294901760
        %v427 = vsub.f32 %v355, %v426
        %v428 = vand.u32 %v427, 4294901760
        %v429 = vsub.f32 %v427, %v428
        %v430 = vand.u32 %v429, 4294901760
        %431 = vmatmul.mubr.f32.gmra.mrb[0].mxu0 %v430
        %v432 = vpop.f32.mrb[0].mxu0
        %v433 = vadd.f32 %v349, %v432
        %v434 = vpop.f32.mrb[0].mxu0
        %435 = vdwg.mxu0
        %436 = vmatprep.subr.mxu0 0.0
        %v437 = vand.u32 %v336, 4294901760
        %v438 = vsub.f32 %v336, %v437
        %v439 = vand.u32 %v438, 4294901760
        %v440 = vsub.f32 %v438, %v439
        %v441 = vand.u32 %v440, 4294901760
        %442 = vmatpush1.msra.mxu0 %v441
        %443 = vmatprep.subr.mxu0 0.0
        %v444 = vand.u32 %v337, 4294901760
        %v445 = vsub.f32 %v337, %v444
        %v446 = vand.u32 %v445, 4294901760
        %v447 = vsub.f32 %v445, %v446
        %v448 = vand.u32 %v447, 4294901760
        %449 = vmatpush1.msra.mxu0 %v448
        %450 = vmatprep.subr.mxu0 0.0
        %v451 = vand.u32 %v338, 4294901760
        %v452 = vsub.f32 %v338, %v451
        %v453 = vand.u32 %v452, 4294901760
        %v454 = vsub.f32 %v452, %v453
        %v455 = vand.u32 %v454, 4294901760
        %456 = vmatpush1.msra.mxu0 %v455
        %457 = vmatprep.subr.mxu0 0.0
        %v458 = vand.u32 %v339, 4294901760
        %v459 = vsub.f32 %v339, %v458
        %v460 = vand.u32 %v459, 4294901760
        %v461 = vsub.f32 %v459, %v460
        %v462 = vand.u32 %v461, 4294901760
        %463 = vmatpush1.msra.mxu0 %v462
        %464 = vmatprep.subr.mxu0 0.0
        %465 = vmatpush1.msra.mxu0 0.0
        %466 = vmatprep.subr.mxu0 0.0
        %467 = vmatpush1.msra.mxu0 0.0
        %468 = vmatprep.subr.mxu0 0.0
        %469 = vmatpush1.msra.mxu0 0.0
        %470 = vmatprep.subr.mxu0 0.0
        %471 = vmatpush1.msra.mxu0 0.0
        %472 = vmatprep.subr.mxu0 0.0
        %473 = vmatpush1.msra.mxu0 0.0
        %474 = vmatprep.subr.mxu0 0.0
        %475 = vmatpush1.msra.mxu0 0.0
        %476 = vmatprep.subr.mxu0 0.0
        %477 = vmatpush1.msra.mxu0 0.0
        %478 = vmatprep.subr.mxu0 0.0
        %479 = vmatpush1.msra.mxu0 0.0
        %480 = vmatprep.subr.mxu0 0.0
        %481 = vmatpush1.msra.mxu0 0.0
        %482 = vmatprep.subr.mxu0 0.0
        %483 = vmatpush1.msra.mxu0 0.0
        %484 = vmatprep.subr.mxu0 0.0
        %485 = vmatpush1.msra.mxu0 0.0
        %486 = vmatprep.subr.mxu0 0.0
        %487 = vmatpush1.msra.mxu0 0.0
        %488 = vmatprep.subr.mxu0 0.0
        %489 = vmatpush1.msra.mxu0 0.0
        %490 = vmatprep.subr.mxu0 0.0
        %491 = vmatpush1.msra.mxu0 0.0
        %492 = vmatprep.subr.mxu0 0.0
        %493 = vmatpush1.msra.mxu0 0.0
        %494 = vmatprep.subr.mxu0 0.0
        %495 = vmatpush1.msra.mxu0 0.0
        %496 = vmatprep.subr.mxu0 0.0
        %497 = vmatpush1.msra.mxu0 0.0
        %498 = vmatprep.subr.mxu0 0.0
        %499 = vmatpush1.msra.mxu0 0.0
        %500 = vmatprep.subr.mxu0 0.0
        %501 = vmatpush1.msra.mxu0 0.0
        %502 = vmatprep.subr.mxu0 0.0
        %503 = vmatpush1.msra.mxu0 0.0
        %504 = vmatprep.subr.mxu0 0.0
        %505 = vmatpush1.msra.mxu0 0.0
        %506 = vmatprep.subr.mxu0 0.0
        %507 = vmatpush1.msra.mxu0 0.0
        %508 = vmatprep.subr.mxu0 0.0
        %509 = vmatpush1.msra.mxu0 0.0
        %510 = vmatprep.subr.mxu0 0.0
        %511 = vmatpush1.msra.mxu0 0.0
        %512 = vmatprep.subr.mxu0 0.0
        %513 = vmatpush1.msra.mxu0 0.0
        %514 = vmatprep.subr.mxu0 0.0
        %515 = vmatpush1.msra.mxu0 0.0
        %516 = vmatprep.subr.mxu0 0.0
        %517 = vmatpush1.msra.mxu0 0.0
        %518 = vmatprep.subr.mxu0 0.0
        %519 = vmatpush1.msra.mxu0 0.0
        %520 = vmatprep.mubr.f32.mxu0 0.0
        %v521 = vand.u32 %v355, 4294901760
        %522 = vmatmul.mubr.f32.gmra.mrb[0].mxu0 %v521
        %v523 = vpop.f32.mrb[0].mxu0
        %v524 = vadd.f32 %v433, %v523
        %v525 = vpop.f32.mrb[0].mxu0
        %526 = vdwg.mxu0
        %527 = vmatprep.subr.mxu0 0.0
        %v528 = vand.u32 %v336, 4294901760
        %v529 = vsub.f32 %v336, %v528
        %530 = vmatpush1.msra.mxu0 %v529
        %531 = vmatprep.subr.mxu0 0.0
        %v532 = vand.u32 %v337, 4294901760
        %v533 = vsub.f32 %v337, %v532
        %534 = vmatpush1.msra.mxu0 %v533
        %535 = vmatprep.subr.mxu0 0.0
        %v536 = vand.u32 %v338, 4294901760
        %v537 = vsub.f32 %v338, %v536
        %538 = vmatpush1.msra.mxu0 %v537
        %539 = vmatprep.subr.mxu0 0.0
        %v540 = vand.u32 %v339, 4294901760
        %v541 = vsub.f32 %v339, %v540
        %542 = vmatpush1.msra.mxu0 %v541
        %543 = vmatprep.subr.mxu0 0.0
        %544 = vmatpush1.msra.mxu0 0.0
        %545 = vmatprep.subr.mxu0 0.0
        %546 = vmatpush1.msra.mxu0 0.0
        %547 = vmatprep.subr.mxu0 0.0
        %548 = vmatpush1.msra.mxu0 0.0
        %549 = vmatprep.subr.mxu0 0.0
        %550 = vmatpush1.msra.mxu0 0.0
        %551 = vmatprep.subr.mxu0 0.0
        %552 = vmatpush1.msra.mxu0 0.0
        %553 = vmatprep.subr.mxu0 0.0
        %554 = vmatpush1.msra.mxu0 0.0
        %555 = vmatprep.subr.mxu0 0.0
        %556 = vmatpush1.msra.mxu0 0.0
        %557 = vmatprep.subr.mxu0 0.0
        %558 = vmatpush1.msra.mxu0 0.0
        %559 = vmatprep.subr.mxu0 0.0
        %560 = vmatpush1.msra.mxu0 0.0
        %561 = vmatprep.subr.mxu0 0.0
        %562 = vmatpush1.msra.mxu0 0.0
        %563 = vmatprep.subr.mxu0 0.0
        %564 = vmatpush1.msra.mxu0 0.0
        %565 = vmatprep.subr.mxu0 0.0
        %566 = vmatpush1.msra.mxu0 0.0
        %567 = vmatprep.subr.mxu0 0.0
        %568 = vmatpush1.msra.mxu0 0.0
        %569 = vmatprep.subr.mxu0 0.0
        %570 = vmatpush1.msra.mxu0 0.0
        %571 = vmatprep.subr.mxu0 0.0
        %572 = vmatpush1.msra.mxu0 0.0
        %573 = vmatprep.subr.mxu0 0.0
        %574 = vmatpush1.msra.mxu0 0.0
        %575 = vmatprep.subr.mxu0 0.0
        %576 = vmatpush1.msra.mxu0 0.0
        %577 = vmatprep.subr.mxu0 0.0
        %578 = vmatpush1.msra.mxu0 0.0
        %579 = vmatprep.subr.mxu0 0.0
        %580 = vmatpush1.msra.mxu0 0.0
        %581 = vmatprep.subr.mxu0 0.0
        %582 = vmatpush1.msra.mxu0 0.0
        %583 = vmatprep.subr.mxu0 0.0
        %584 = vmatpush1.msra.mxu0 0.0
        %585 = vmatprep.subr.mxu0 0.0
        %586 = vmatpush1.msra.mxu0 0.0
        %587 = vmatprep.subr.mxu0 0.0
        %588 = vmatpush1.msra.mxu0 0.0
        %589 = vmatprep.subr.mxu0 0.0
        %590 = vmatpush1.msra.mxu0 0.0
        %591 = vmatprep.subr.mxu0 0.0
        %592 = vmatpush1.msra.mxu0 0.0
        %593 = vmatprep.subr.mxu0 0.0
        %594 = vmatpush1.msra.mxu0 0.0
        %595 = vmatprep.subr.mxu0 0.0
        %596 = vmatpush1.msra.mxu0 0.0
        %597 = vmatprep.subr.mxu0 0.0
        %598 = vmatpush1.msra.mxu0 0.0
        %599 = vmatprep.mubr.f32.mxu0 0.0
        %v600 = vand.u32 %v355, 4294901760
        %v601 = vsub.f32 %v355, %v600
        %602 = vmatmul.mubr.f32.gmra.mrb[0].mxu0 %v601
        %v603 = vpop.f32.mrb[0].mxu0
        %v604 = vadd.f32 %v524, %v603
        %v605 = vpop.f32.mrb[0].mxu0
        %606 = vdwg.mxu0
        %607 = vmatprep.subr.mxu0 0.0
        %v608 = vand.u32 %v336, 4294901760
        %609 = vmatpush1.msra.mxu0 %v608
        %610 = vmatprep.subr.mxu0 0.0
        %v611 = vand.u32 %v337, 4294901760
        %612 = vmatpush1.msra.mxu0 %v611
        %613 = vmatprep.subr.mxu0 0.0
        %v614 = vand.u32 %v338, 4294901760
        %615 = vmatpush1.msra.mxu0 %v614
        %616 = vmatprep.subr.mxu0 0.0
        %v617 = vand.u32 %v339, 4294901760
        %618 = vmatpush1.msra.mxu0 %v617
        %619 = vmatprep.subr.mxu0 0.0
        %620 = vmatpush1.msra.mxu0 0.0
        %621 = vmatprep.subr.mxu0 0.0
        %622 = vmatpush1.msra.mxu0 0.0
        %623 = vmatprep.subr.mxu0 0.0
        %624 = vmatpush1.msra.mxu0 0.0
        %625 = vmatprep.subr.mxu0 0.0
        %626 = vmatpush1.msra.mxu0 0.0
        %627 = vmatprep.subr.mxu0 0.0
        %628 = vmatpush1.msra.mxu0 0.0
        %629 = vmatprep.subr.mxu0 0.0
        %630 = vmatpush1.msra.mxu0 0.0
        %631 = vmatprep.subr.mxu0 0.0
        %632 = vmatpush1.msra.mxu0 0.0
        %633 = vmatprep.subr.mxu0 0.0
        %634 = vmatpush1.msra.mxu0 0.0
        %635 = vmatprep.subr.mxu0 0.0
        %636 = vmatpush1.msra.mxu0 0.0
        %637 = vmatprep.subr.mxu0 0.0
        %638 = vmatpush1.msra.mxu0 0.0
        %639 = vmatprep.subr.mxu0 0.0
        %640 = vmatpush1.msra.mxu0 0.0
        %641 = vmatprep.subr.mxu0 0.0
        %642 = vmatpush1.msra.mxu0 0.0
        %643 = vmatprep.subr.mxu0 0.0
        %644 = vmatpush1.msra.mxu0 0.0
        %645 = vmatprep.subr.mxu0 0.0
        %646 = vmatpush1.msra.mxu0 0.0
        %647 = vmatprep.subr.mxu0 0.0
        %648 = vmatpush1.msra.mxu0 0.0
        %649 = vmatprep.subr.mxu0 0.0
        %650 = vmatpush1.msra.mxu0 0.0
        %651 = vmatprep.subr.mxu0 0.0
        %652 = vmatpush1.msra.mxu0 0.0
        %653 = vmatprep.subr.mxu0 0.0
        %654 = vmatpush1.msra.mxu0 0.0
        %655 = vmatprep.subr.mxu0 0.0
        %656 = vmatpush1.msra.mxu0 0.0
        %657 = vmatprep.subr.mxu0 0.0
        %658 = vmatpush1.msra.mxu0 0.0
        %659 = vmatprep.subr.mxu0 0.0
        %660 = vmatpush1.msra.mxu0 0.0
        %661 = vmatprep.subr.mxu0 0.0
        %662 = vmatpush1.msra.mxu0 0.0
        %663 = vmatprep.subr.mxu0 0.0
        %664 = vmatpush1.msra.mxu0 0.0
        %665 = vmatprep.subr.mxu0 0.0
        %666 = vmatpush1.msra.mxu0 0.0
        %667 = vmatprep.subr.mxu0 0.0
        %668 = vmatpush1.msra.mxu0 0.0
        %669 = vmatprep.subr.mxu0 0.0
        %670 = vmatpush1.msra.mxu0 0.0
        %671 = vmatprep.subr.mxu0 0.0
        %672 = vmatpush1.msra.mxu0 0.0
        %673 = vmatprep.subr.mxu0 0.0
        %674 = vmatpush1.msra.mxu0 0.0
        %675 = vmatprep.mubr.f32.mxu0 0.0
        %v676 = vand.u32 %v355, 4294901760
        %v677 = vsub.f32 %v355, %v676
        %v678 = vand.u32 %v677, 4294901760
        %679 = vmatmul.mubr.f32.gmra.mrb[0].mxu0 %v678
        %v680 = vpop.f32.mrb[0].mxu0
        %v681 = vadd.f32 %v604, %v680
        %v682 = vpop.f32.mrb[0].mxu0
        %683 = vdwg.mxu0
        %684 = vmatprep.subr.mxu0 0.0
        %v685 = vand.u32 %v336, 4294901760
        %v686 = vsub.f32 %v336, %v685
        %v687 = vand.u32 %v686, 4294901760
        %688 = vmatpush1.msra.mxu0 %v687
        %689 = vmatprep.subr.mxu0 0.0
        %v690 = vand.u32 %v337, 4294901760
        %v691 = vsub.f32 %v337, %v690
        %v692 = vand.u32 %v691, 4294901760
        %693 = vmatpush1.msra.mxu0 %v692
        %694 = vmatprep.subr.mxu0 0.0
        %v695 = vand.u32 %v338, 4294901760
        %v696 = vsub.f32 %v338, %v695
        %v697 = vand.u32 %v696, 4294901760
        %698 = vmatpush1.msra.mxu0 %v697
        %699 = vmatprep.subr.mxu0 0.0
        %v700 = vand.u32 %v339, 4294901760
        %v701 = vsub.f32 %v339, %v700
        %v702 = vand.u32 %v701, 4294901760
        %703 = vmatpush1.msra.mxu0 %v702
        %704 = vmatprep.subr.mxu0 0.0
        %705 = vmatpush1.msra.mxu0 0.0
        %706 = vmatprep.subr.mxu0 0.0
        %707 = vmatpush1.msra.mxu0 0.0
        %708 = vmatprep.subr.mxu0 0.0
        %709 = vmatpush1.msra.mxu0 0.0
        %710 = vmatprep.subr.mxu0 0.0
        %711 = vmatpush1.msra.mxu0 0.0
        %712 = vmatprep.subr.mxu0 0.0
        %713 = vmatpush1.msra.mxu0 0.0
        %714 = vmatprep.subr.mxu0 0.0
        %715 = vmatpush1.msra.mxu0 0.0
        %716 = vmatprep.subr.mxu0 0.0
        %717 = vmatpush1.msra.mxu0 0.0
        %718 = vmatprep.subr.mxu0 0.0
        %719 = vmatpush1.msra.mxu0 0.0
        %720 = vmatprep.subr.mxu0 0.0
        %721 = vmatpush1.msra.mxu0 0.0
        %722 = vmatprep.subr.mxu0 0.0
        %723 = vmatpush1.msra.mxu0 0.0
        %724 = vmatprep.subr.mxu0 0.0
        %725 = vmatpush1.msra.mxu0 0.0
        %726 = vmatprep.subr.mxu0 0.0
        %727 = vmatpush1.msra.mxu0 0.0
        %728 = vmatprep.subr.mxu0 0.0
        %729 = vmatpush1.msra.mxu0 0.0
        %730 = vmatprep.subr.mxu0 0.0
        %731 = vmatpush1.msra.mxu0 0.0
        %732 = vmatprep.subr.mxu0 0.0
        %733 = vmatpush1.msra.mxu0 0.0
        %734 = vmatprep.subr.mxu0 0.0
        %735 = vmatpush1.msra.mxu0 0.0
        %736 = vmatprep.subr.mxu0 0.0
        %737 = vmatpush1.msra.mxu0 0.0
        %738 = vmatprep.subr.mxu0 0.0
        %739 = vmatpush1.msra.mxu0 0.0
        %740 = vmatprep.subr.mxu0 0.0
        %741 = vmatpush1.msra.mxu0 0.0
        %742 = vmatprep.subr.mxu0 0.0
        %743 = vmatpush1.msra.mxu0 0.0
        %744 = vmatprep.subr.mxu0 0.0
        %745 = vmatpush1.msra.mxu0 0.0
        %746 = vmatprep.subr.mxu0 0.0
        %747 = vmatpush1.msra.mxu0 0.0
        %748 = vmatprep.subr.mxu0 0.0
        %749 = vmatpush1.msra.mxu0 0.0
        %750 = vmatprep.subr.mxu0 0.0
        %751 = vmatpush1.msra.mxu0 0.0
        %752 = vmatprep.subr.mxu0 0.0
        %753 = vmatpush1.msra.mxu0 0.0
        %754 = vmatprep.subr.mxu0 0.0
        %755 = vmatpush1.msra.mxu0 0.0
        %756 = vmatprep.subr.mxu0 0.0
        %757 = vmatpush1.msra.mxu0 0.0
        %758 = vmatprep.subr.mxu0 0.0
        %759 = vmatpush1.msra.mxu0 0.0
        %760 = vmatprep.mubr.f32.mxu0 0.0
        %v761 = vand.u32 %v355, 4294901760
        %762 = vmatmul.mubr.f32.gmra.mrb[0].mxu0 %v761
        %v763 = vpop.f32.mrb[0].mxu0
        %v764 = vadd.f32 %v681, %v763
        %v765 = vpop.f32.mrb[0].mxu0
        %766 = vdwg.mxu0
        %767 = vmatprep.subr.mxu0 0.0
        %v768 = vand.u32 %v336, 4294901760
        %769 = vmatpush1.msra.mxu0 %v768
        %770 = vmatprep.subr.mxu0 0.0
        %v771 = vand.u32 %v337, 4294901760
        %772 = vmatpush1.msra.mxu0 %v771
        %773 = vmatprep.subr.mxu0 0.0
        %v774 = vand.u32 %v338, 4294901760
        %775 = vmatpush1.msra.mxu0 %v774
        %776 = vmatprep.subr.mxu0 0.0
        %v777 = vand.u32 %v339, 4294901760
        %778 = vmatpush1.msra.mxu0 %v777
        %779 = vmatprep.subr.mxu0 0.0
        %780 = vmatpush1.msra.mxu0 0.0
        %781 = vmatprep.subr.mxu0 0.0
        %782 = vmatpush1.msra.mxu0 0.0
        %783 = vmatprep.subr.mxu0 0.0
        %784 = vmatpush1.msra.mxu0 0.0
        %785 = vmatprep.subr.mxu0 0.0
        %786 = vmatpush1.msra.mxu0 0.0
        %787 = vmatprep.subr.mxu0 0.0
        %788 = vmatpush1.msra.mxu0 0.0
        %789 = vmatprep.subr.mxu0 0.0
        %790 = vmatpush1.msra.mxu0 0.0
        %791 = vmatprep.subr.mxu0 0.0
        %792 = vmatpush1.msra.mxu0 0.0
        %793 = vmatprep.subr.mxu0 0.0
        %794 = vmatpush1.msra.mxu0 0.0
        %795 = vmatprep.subr.mxu0 0.0
        %796 = vmatpush1.msra.mxu0 0.0
        %797 = vmatprep.subr.mxu0 0.0
        %798 = vmatpush1.msra.mxu0 0.0
        %799 = vmatprep.subr.mxu0 0.0
        %800 = vmatpush1.msra.mxu0 0.0
        %801 = vmatprep.subr.mxu0 0.0
        %802 = vmatpush1.msra.mxu0 0.0
        %803 = vmatprep.subr.mxu0 0.0
        %804 = vmatpush1.msra.mxu0 0.0
        %805 = vmatprep.subr.mxu0 0.0
        %806 = vmatpush1.msra.mxu0 0.0
        %807 = vmatprep.subr.mxu0 0.0
        %808 = vmatpush1.msra.mxu0 0.0
        %809 = vmatprep.subr.mxu0 0.0
        %810 = vmatpush1.msra.mxu0 0.0
        %811 = vmatprep.subr.mxu0 0.0
        %812 = vmatpush1.msra.mxu0 0.0
        %813 = vmatprep.subr.mxu0 0.0
        %814 = vmatpush1.msra.mxu0 0.0
        %815 = vmatprep.subr.mxu0 0.0
        %816 = vmatpush1.msra.mxu0 0.0
        %817 = vmatprep.subr.mxu0 0.0
        %818 = vmatpush1.msra.mxu0 0.0
        %819 = vmatprep.subr.mxu0 0.0
        %820 = vmatpush1.msra.mxu0 0.0
        %821 = vmatprep.subr.mxu0 0.0
        %822 = vmatpush1.msra.mxu0 0.0
        %823 = vmatprep.subr.mxu0 0.0
        %824 = vmatpush1.msra.mxu0 0.0
        %825 = vmatprep.subr.mxu0 0.0
        %826 = vmatpush1.msra.mxu0 0.0
        %827 = vmatprep.subr.mxu0 0.0
        %828 = vmatpush1.msra.mxu0 0.0
        %829 = vmatprep.subr.mxu0 0.0
        %830 = vmatpush1.msra.mxu0 0.0
        %831 = vmatprep.subr.mxu0 0.0
        %832 = vmatpush1.msra.mxu0 0.0
        %833 = vmatprep.subr.mxu0 0.0
        %834 = vmatpush1.msra.mxu0 0.0
        %835 = vmatprep.mubr.f32.mxu0 0.0
        %v836 = vand.u32 %v355, 4294901760
        %837 = vmatmul.mubr.f32.gmra.mrb[0].mxu0 %v836
        %v838 = vpop.f32.mrb[0].mxu0
        %v839 = vadd.f32 %v764, %v838
        %v840 = vpop.f32.mrb[0].mxu0
        %841 = vdwg.mxu0
        %v843 = vsel %vm353, %v351, 0
        %845 = vmatprep.subr.mxu0 0.0
        %v846 = vand.u32 %v340, 4294901760
        %847 = vmatpush1.msra.mxu0 %v846
        %848 = vmatprep.subr.mxu0 0.0
        %v849 = vand.u32 %v341, 4294901760
        %850 = vmatpush1.msra.mxu0 %v849
        %851 = vmatprep.subr.mxu0 0.0
        %v852 = vand.u32 %v342, 4294901760
        %853 = vmatpush1.msra.mxu0 %v852
        %854 = vmatprep.subr.mxu0 0.0
        %v855 = vand.u32 %v343, 4294901760
        %856 = vmatpush1.msra.mxu0 %v855
        %857 = vmatprep.subr.mxu0 0.0
        %858 = vmatpush1.msra.mxu0 0.0
        %859 = vmatprep.subr.mxu0 0.0
        %860 = vmatpush1.msra.mxu0 0.0
        %861 = vmatprep.subr.mxu0 0.0
        %862 = vmatpush1.msra.mxu0 0.0
        %863 = vmatprep.subr.mxu0 0.0
        %864 = vmatpush1.msra.mxu0 0.0
        %865 = vmatprep.subr.mxu0 0.0
        %866 = vmatpush1.msra.mxu0 0.0
        %867 = vmatprep.subr.mxu0 0.0
        %868 = vmatpush1.msra.mxu0 0.0
        %869 = vmatprep.subr.mxu0 0.0
        %870 = vmatpush1.msra.mxu0 0.0
        %871 = vmatprep.subr.mxu0 0.0
        %872 = vmatpush1.msra.mxu0 0.0
        %873 = vmatprep.subr.mxu0 0.0
        %874 = vmatpush1.msra.mxu0 0.0
        %875 = vmatprep.subr.mxu0 0.0
        %876 = vmatpush1.msra.mxu0 0.0
        %877 = vmatprep.subr.mxu0 0.0
        %878 = vmatpush1.msra.mxu0 0.0
        %879 = vmatprep.subr.mxu0 0.0
        %880 = vmatpush1.msra.mxu0 0.0
        %881 = vmatprep.subr.mxu0 0.0
        %882 = vmatpush1.msra.mxu0 0.0
        %883 = vmatprep.subr.mxu0 0.0
        %884 = vmatpush1.msra.mxu0 0.0
        %885 = vmatprep.subr.mxu0 0.0
        %886 = vmatpush1.msra.mxu0 0.0
        %887 = vmatprep.subr.mxu0 0.0
        %888 = vmatpush1.msra.mxu0 0.0
        %889 = vmatprep.subr.mxu0 0.0
        %890 = vmatpush1.msra.mxu0 0.0
        %891 = vmatprep.subr.mxu0 0.0
        %892 = vmatpush1.msra.mxu0 0.0
        %893 = vmatprep.subr.mxu0 0.0
        %894 = vmatpush1.msra.mxu0 0.0
        %895 = vmatprep.subr.mxu0 0.0
        %896 = vmatpush1.msra.mxu0 0.0
        %897 = vmatprep.subr.mxu0 0.0
        %898 = vmatpush1.msra.mxu0 0.0
        %899 = vmatprep.subr.mxu0 0.0
        %900 = vmatpush1.msra.mxu0 0.0
        %901 = vmatprep.subr.mxu0 0.0
        %902 = vmatpush1.msra.mxu0 0.0
        %903 = vmatprep.subr.mxu0 0.0
        %904 = vmatpush1.msra.mxu0 0.0
        %905 = vmatprep.subr.mxu0 0.0
        %906 = vmatpush1.msra.mxu0 0.0
        %907 = vmatprep.subr.mxu0 0.0
        %908 = vmatpush1.msra.mxu0 0.0
        %909 = vmatprep.subr.mxu0 0.0
        %910 = vmatpush1.msra.mxu0 0.0
        %911 = vmatprep.subr.mxu0 0.0
        %912 = vmatpush1.msra.mxu0 0.0
        %913 = vmatprep.mubr.f32.mxu0 0.0
        %v914 = vand.u32 %v843, 4294901760
        %v915 = vsub.f32 %v843, %v914
        %v916 = vand.u32 %v915, 4294901760
        %v917 = vsub.f32 %v915, %v916
        %v918 = vand.u32 %v917, 4294901760
        %919 = vmatmul.mubr.f32.gmra.mrb[0].mxu0 %v918
        %v920 = vpop.f32.mrb[0].mxu0
        %v921 = vadd.f32 0.0, %v920
        %v922 = vpop.f32.mrb[0].mxu0
        %923 = vdwg.mxu0
        %924 = vmatprep.subr.mxu0 0.0
        %v925 = vand.u32 %v340, 4294901760
        %v926 = vsub.f32 %v340, %v925
        %v927 = vand.u32 %v926, 4294901760
        %v928 = vsub.f32 %v926, %v927
        %v929 = vand.u32 %v928, 4294901760
        %930 = vmatpush1.msra.mxu0 %v929
        %931 = vmatprep.subr.mxu0 0.0
        %v932 = vand.u32 %v341, 4294901760
        %v933 = vsub.f32 %v341, %v932
        %v934 = vand.u32 %v933, 4294901760
        %v935 = vsub.f32 %v933, %v934
        %v936 = vand.u32 %v935, 4294901760
        %937 = vmatpush1.msra.mxu0 %v936
        %938 = vmatprep.subr.mxu0 0.0
        %v939 = vand.u32 %v342, 4294901760
        %v940 = vsub.f32 %v342, %v939
        %v941 = vand.u32 %v940, 4294901760
        %v942 = vsub.f32 %v940, %v941
        %v943 = vand.u32 %v942, 4294901760
        %944 = vmatpush1.msra.mxu0 %v943
        %945 = vmatprep.subr.mxu0 0.0
        %v946 = vand.u32 %v343, 4294901760
        %v947 = vsub.f32 %v343, %v946
        %v948 = vand.u32 %v947, 4294901760
        %v949 = vsub.f32 %v947, %v948
        %v950 = vand.u32 %v949, 4294901760
        %951 = vmatpush1.msra.mxu0 %v950
        %952 = vmatprep.subr.mxu0 0.0
        %953 = vmatpush1.msra.mxu0 0.0
        %954 = vmatprep.subr.mxu0 0.0
        %955 = vmatpush1.msra.mxu0 0.0
        %956 = vmatprep.subr.mxu0 0.0
        %957 = vmatpush1.msra.mxu0 0.0
        %958 = vmatprep.subr.mxu0 0.0
        %959 = vmatpush1.msra.mxu0 0.0
        %960 = vmatprep.subr.mxu0 0.0
        %961 = vmatpush1.msra.mxu0 0.0
        %962 = vmatprep.subr.mxu0 0.0
        %963 = vmatpush1.msra.mxu0 0.0
        %964 = vmatprep.subr.mxu0 0.0
        %965 = vmatpush1.msra.mxu0 0.0
        %966 = vmatprep.subr.mxu0 0.0
        %967 = vmatpush1.msra.mxu0 0.0
        %968 = vmatprep.subr.mxu0 0.0
        %969 = vmatpush1.msra.mxu0 0.0
        %970 = vmatprep.subr.mxu0 0.0
        %971 = vmatpush1.msra.mxu0 0.0
        %972 = vmatprep.subr.mxu0 0.0
        %973 = vmatpush1.msra.mxu0 0.0
        %974 = vmatprep.subr.mxu0 0.0
        %975 = vmatpush1.msra.mxu0 0.0
        %976 = vmatprep.subr.mxu0 0.0
        %977 = vmatpush1.msra.mxu0 0.0
        %978 = vmatprep.subr.mxu0 0.0
        %979 = vmatpush1.msra.mxu0 0.0
        %980 = vmatprep.subr.mxu0 0.0
        %981 = vmatpush1.msra.mxu0 0.0
        %982 = vmatprep.subr.mxu0 0.0
        %983 = vmatpush1.msra.mxu0 0.0
        %984 = vmatprep.subr.mxu0 0.0
        %985 = vmatpush1.msra.mxu0 0.0
        %986 = vmatprep.subr.mxu0 0.0
        %987 = vmatpush1.msra.mxu0 0.0
        %988 = vmatprep.subr.mxu0 0.0
        %989 = vmatpush1.msra.mxu0 0.0
        %990 = vmatprep.subr.mxu0 0.0
        %991 = vmatpush1.msra.mxu0 0.0
        %992 = vmatprep.subr.mxu0 0.0
        %993 = vmatpush1.msra.mxu0 0.0
        %994 = vmatprep.subr.mxu0 0.0
        %995 = vmatpush1.msra.mxu0 0.0
        %996 = vmatprep.subr.mxu0 0.0
        %997 = vmatpush1.msra.mxu0 0.0
        %998 = vmatprep.subr.mxu0 0.0
        %999 = vmatpush1.msra.mxu0 0.0
        %1000 = vmatprep.subr.mxu0 0.0
        %1001 = vmatpush1.msra.mxu0 0.0
        %1002 = vmatprep.subr.mxu0 0.0
        %1003 = vmatpush1.msra.mxu0 0.0
        %1004 = vmatprep.subr.mxu0 0.0
        %1005 = vmatpush1.msra.mxu0 0.0
        %1006 = vmatprep.subr.mxu0 0.0
        %1007 = vmatpush1.msra.mxu0 0.0
        %1008 = vmatprep.mubr.f32.mxu0 0.0
        %v1009 = vand.u32 %v843, 4294901760
        %1010 = vmatmul.mubr.f32.gmra.mrb[0].mxu0 %v1009
        %v1011 = vpop.f32.mrb[0].mxu0
        %v1012 = vadd.f32 %v921, %v1011
        %v1013 = vpop.f32.mrb[0].mxu0
        %1014 = vdwg.mxu0
        %1015 = vmatprep.subr.mxu0 0.0
        %v1016 = vand.u32 %v340, 4294901760
        %v1017 = vsub.f32 %v340, %v1016
        %1018 = vmatpush1.msra.mxu0 %v1017
        %1019 = vmatprep.subr.mxu0 0.0
        %v1020 = vand.u32 %v341, 4294901760
        %v1021 = vsub.f32 %v341, %v1020
        %1022 = vmatpush1.msra.mxu0 %v1021
        %1023 = vmatprep.subr.mxu0 0.0
        %v1024 = vand.u32 %v342, 4294901760
        %v1025 = vsub.f32 %v342, %v1024
        %1026 = vmatpush1.msra.mxu0 %v1025
        %1027 = vmatprep.subr.mxu0 0.0
        %v1028 = vand.u32 %v343, 4294901760
        %v1029 = vsub.f32 %v343, %v1028
        %1030 = vmatpush1.msra.mxu0 %v1029
        %1031 = vmatprep.subr.mxu0 0.0
        %1032 = vmatpush1.msra.mxu0 0.0
        %1033 = vmatprep.subr.mxu0 0.0
        %1034 = vmatpush1.msra.mxu0 0.0
        %1035 = vmatprep.subr.mxu0 0.0
        %1036 = vmatpush1.msra.mxu0 0.0
        %1037 = vmatprep.subr.mxu0 0.0
        %1038 = vmatpush1.msra.mxu0 0.0
        %1039 = vmatprep.subr.mxu0 0.0
        %1040 = vmatpush1.msra.mxu0 0.0
        %1041 = vmatprep.subr.mxu0 0.0
        %1042 = vmatpush1.msra.mxu0 0.0
        %1043 = vmatprep.subr.mxu0 0.0
        %1044 = vmatpush1.msra.mxu0 0.0
        %1045 = vmatprep.subr.mxu0 0.0
        %1046 = vmatpush1.msra.mxu0 0.0
        %1047 = vmatprep.subr.mxu0 0.0
        %1048 = vmatpush1.msra.mxu0 0.0
        %1049 = vmatprep.subr.mxu0 0.0
        %1050 = vmatpush1.msra.mxu0 0.0
        %1051 = vmatprep.subr.mxu0 0.0
        %1052 = vmatpush1.msra.mxu0 0.0
        %1053 = vmatprep.subr.mxu0 0.0
        %1054 = vmatpush1.msra.mxu0 0.0
        %1055 = vmatprep.subr.mxu0 0.0
        %1056 = vmatpush1.msra.mxu0 0.0
        %1057 = vmatprep.subr.mxu0 0.0
        %1058 = vmatpush1.msra.mxu0 0.0
        %1059 = vmatprep.subr.mxu0 0.0
        %1060 = vmatpush1.msra.mxu0 0.0
        %1061 = vmatprep.subr.mxu0 0.0
        %1062 = vmatpush1.msra.mxu0 0.0
        %1063 = vmatprep.subr.mxu0 0.0
        %1064 = vmatpush1.msra.mxu0 0.0
        %1065 = vmatprep.subr.mxu0 0.0
        %1066 = vmatpush1.msra.mxu0 0.0
        %1067 = vmatprep.subr.mxu0 0.0
        %1068 = vmatpush1.msra.mxu0 0.0
        %1069 = vmatprep.subr.mxu0 0.0
        %1070 = vmatpush1.msra.mxu0 0.0
        %1071 = vmatprep.subr.mxu0 0.0
        %1072 = vmatpush1.msra.mxu0 0.0
        %1073 = vmatprep.subr.mxu0 0.0
        %1074 = vmatpush1.msra.mxu0 0.0
        %1075 = vmatprep.subr.mxu0 0.0
        %1076 = vmatpush1.msra.mxu0 0.0
        %1077 = vmatprep.subr.mxu0 0.0
        %1078 = vmatpush1.msra.mxu0 0.0
        %1079 = vmatprep.subr.mxu0 0.0
        %1080 = vmatpush1.msra.mxu0 0.0
        %1081 = vmatprep.subr.mxu0 0.0
        %1082 = vmatpush1.msra.mxu0 0.0
        %1083 = vmatprep.subr.mxu0 0.0
        %1084 = vmatpush1.msra.mxu0 0.0
        %1085 = vmatprep.subr.mxu0 0.0
        %1086 = vmatpush1.msra.mxu0 0.0
        %1087 = vmatprep.mubr.f32.mxu0 0.0
        %v1088 = vand.u32 %v843, 4294901760
        %v1089 = vsub.f32 %v843, %v1088
        %1090 = vmatmul.mubr.f32.gmra.mrb[0].mxu0 %v1089
        %v1091 = vpop.f32.mrb[0].mxu0
        %v1092 = vadd.f32 %v1012, %v1091
        %v1093 = vpop.f32.mrb[0].mxu0
        %1094 = vdwg.mxu0
        %1095 = vmatprep.subr.mxu0 0.0
        %v1096 = vand.u32 %v340, 4294901760
        %1097 = vmatpush1.msra.mxu0 %v1096
        %1098 = vmatprep.subr.mxu0 0.0
        %v1099 = vand.u32 %v341, 4294901760
        %1100 = vmatpush1.msra.mxu0 %v1099
        %1101 = vmatprep.subr.mxu0 0.0
        %v1102 = vand.u32 %v342, 4294901760
        %1103 = vmatpush1.msra.mxu0 %v1102
        %1104 = vmatprep.subr.mxu0 0.0
        %v1105 = vand.u32 %v343, 4294901760
        %1106 = vmatpush1.msra.mxu0 %v1105
        %1107 = vmatprep.subr.mxu0 0.0
        %1108 = vmatpush1.msra.mxu0 0.0
        %1109 = vmatprep.subr.mxu0 0.0
        %1110 = vmatpush1.msra.mxu0 0.0
        %1111 = vmatprep.subr.mxu0 0.0
        %1112 = vmatpush1.msra.mxu0 0.0
        %1113 = vmatprep.subr.mxu0 0.0
        %1114 = vmatpush1.msra.mxu0 0.0
        %1115 = vmatprep.subr.mxu0 0.0
        %1116 = vmatpush1.msra.mxu0 0.0
        %1117 = vmatprep.subr.mxu0 0.0
        %1118 = vmatpush1.msra.mxu0 0.0
        %1119 = vmatprep.subr.mxu0 0.0
        %1120 = vmatpush1.msra.mxu0 0.0
        %1121 = vmatprep.subr.mxu0 0.0
        %1122 = vmatpush1.msra.mxu0 0.0
        %1123 = vmatprep.subr.mxu0 0.0
        %1124 = vmatpush1.msra.mxu0 0.0
        %1125 = vmatprep.subr.mxu0 0.0
        %1126 = vmatpush1.msra.mxu0 0.0
        %1127 = vmatprep.subr.mxu0 0.0
        %1128 = vmatpush1.msra.mxu0 0.0
        %1129 = vmatprep.subr.mxu0 0.0
        %1130 = vmatpush1.msra.mxu0 0.0
        %1131 = vmatprep.subr.mxu0 0.0
        %1132 = vmatpush1.msra.mxu0 0.0
        %1133 = vmatprep.subr.mxu0 0.0
        %1134 = vmatpush1.msra.mxu0 0.0
        %1135 = vmatprep.subr.mxu0 0.0
        %1136 = vmatpush1.msra.mxu0 0.0
        %1137 = vmatprep.subr.mxu0 0.0
        %1138 = vmatpush1.msra.mxu0 0.0
        %1139 = vmatprep.subr.mxu0 0.0
        %1140 = vmatpush1.msra.mxu0 0.0
        %1141 = vmatprep.subr.mxu0 0.0
        %1142 = vmatpush1.msra.mxu0 0.0
        %1143 = vmatprep.subr.mxu0 0.0
        %1144 = vmatpush1.msra.mxu0 0.0
        %1145 = vmatprep.subr.mxu0 0.0
        %1146 = vmatpush1.msra.mxu0 0.0
        %1147 = vmatprep.subr.mxu0 0.0
        %1148 = vmatpush1.msra.mxu0 0.0
        %1149 = vmatprep.subr.mxu0 0.0
        %1150 = vmatpush1.msra.mxu0 0.0
        %1151 = vmatprep.subr.mxu0 0.0
        %1152 = vmatpush1.msra.mxu0 0.0
        %1153 = vmatprep.subr.mxu0 0.0
        %1154 = vmatpush1.msra.mxu0 0.0
        %1155 = vmatprep.subr.mxu0 0.0
        %1156 = vmatpush1.msra.mxu0 0.0
        %1157 = vmatprep.subr.mxu0 0.0
        %1158 = vmatpush1.msra.mxu0 0.0
        %1159 = vmatprep.subr.mxu0 0.0
        %1160 = vmatpush1.msra.mxu0 0.0
        %1161 = vmatprep.subr.mxu0 0.0
        %1162 = vmatpush1.msra.mxu0 0.0
        %1163 = vmatprep.mubr.f32.mxu0 0.0
        %v1164 = vand.u32 %v843, 4294901760
        %v1165 = vsub.f32 %v843, %v1164
        %v1166 = vand.u32 %v1165, 4294901760
        %1167 = vmatmul.mubr.f32.gmra.mrb[0].mxu0 %v1166
        %v1168 = vpop.f32.mrb[0].mxu0
        %v1169 = vadd.f32 %v1092, %v1168
        %v1170 = vpop.f32.mrb[0].mxu0
        %1171 = vdwg.mxu0
        %1172 = vmatprep.subr.mxu0 0.0
        %v1173 = vand.u32 %v340, 4294901760
        %v1174 = vsub.f32 %v340, %v1173
        %v1175 = vand.u32 %v1174, 4294901760
        %1176 = vmatpush1.msra.mxu0 %v1175
        %1177 = vmatprep.subr.mxu0 0.0
        %v1178 = vand.u32 %v341, 4294901760
        %v1179 = vsub.f32 %v341, %v1178
        %v1180 = vand.u32 %v1179, 4294901760
        %1181 = vmatpush1.msra.mxu0 %v1180
        %1182 = vmatprep.subr.mxu0 0.0
        %v1183 = vand.u32 %v342, 4294901760
        %v1184 = vsub.f32 %v342, %v1183
        %v1185 = vand.u32 %v1184, 4294901760
        %1186 = vmatpush1.msra.mxu0 %v1185
        %1187 = vmatprep.subr.mxu0 0.0
        %v1188 = vand.u32 %v343, 4294901760
        %v1189 = vsub.f32 %v343, %v1188
        %v1190 = vand.u32 %v1189, 4294901760
        %1191 = vmatpush1.msra.mxu0 %v1190
        %1192 = vmatprep.subr.mxu0 0.0
        %1193 = vmatpush1.msra.mxu0 0.0
        %1194 = vmatprep.subr.mxu0 0.0
        %1195 = vmatpush1.msra.mxu0 0.0
        %1196 = vmatprep.subr.mxu0 0.0
        %1197 = vmatpush1.msra.mxu0 0.0
        %1198 = vmatprep.subr.mxu0 0.0
        %1199 = vmatpush1.msra.mxu0 0.0
        %1200 = vmatprep.subr.mxu0 0.0
        %1201 = vmatpush1.msra.mxu0 0.0
        %1202 = vmatprep.subr.mxu0 0.0
        %1203 = vmatpush1.msra.mxu0 0.0
        %1204 = vmatprep.subr.mxu0 0.0
        %1205 = vmatpush1.msra.mxu0 0.0
        %1206 = vmatprep.subr.mxu0 0.0
        %1207 = vmatpush1.msra.mxu0 0.0
        %1208 = vmatprep.subr.mxu0 0.0
        %1209 = vmatpush1.msra.mxu0 0.0
        %1210 = vmatprep.subr.mxu0 0.0
        %1211 = vmatpush1.msra.mxu0 0.0
        %1212 = vmatprep.subr.mxu0 0.0
        %1213 = vmatpush1.msra.mxu0 0.0
        %1214 = vmatprep.subr.mxu0 0.0
        %1215 = vmatpush1.msra.mxu0 0.0
        %1216 = vmatprep.subr.mxu0 0.0
        %1217 = vmatpush1.msra.mxu0 0.0
        %1218 = vmatprep.subr.mxu0 0.0
        %1219 = vmatpush1.msra.mxu0 0.0
        %1220 = vmatprep.subr.mxu0 0.0
        %1221 = vmatpush1.msra.mxu0 0.0
        %1222 = vmatprep.subr.mxu0 0.0
        %1223 = vmatpush1.msra.mxu0 0.0
        %1224 = vmatprep.subr.mxu0 0.0
        %1225 = vmatpush1.msra.mxu0 0.0
        %1226 = vmatprep.subr.mxu0 0.0
        %1227 = vmatpush1.msra.mxu0 0.0
        %1228 = vmatprep.subr.mxu0 0.0
        %1229 = vmatpush1.msra.mxu0 0.0
        %1230 = vmatprep.subr.mxu0 0.0
        %1231 = vmatpush1.msra.mxu0 0.0
        %1232 = vmatprep.subr.mxu0 0.0
        %1233 = vmatpush1.msra.mxu0 0.0
        %1234 = vmatprep.subr.mxu0 0.0
        %1235 = vmatpush1.msra.mxu0 0.0
        %1236 = vmatprep.subr.mxu0 0.0
        %1237 = vmatpush1.msra.mxu0 0.0
        %1238 = vmatprep.subr.mxu0 0.0
        %1239 = vmatpush1.msra.mxu0 0.0
        %1240 = vmatprep.subr.mxu0 0.0
        %1241 = vmatpush1.msra.mxu0 0.0
        %1242 = vmatprep.subr.mxu0 0.0
        %1243 = vmatpush1.msra.mxu0 0.0
        %1244 = vmatprep.subr.mxu0 0.0
        %1245 = vmatpush1.msra.mxu0 0.0
        %1246 = vmatprep.subr.mxu0 0.0
        %1247 = vmatpush1.msra.mxu0 0.0
        %1248 = vmatprep.mubr.f32.mxu0 0.0
        %v1249 = vand.u32 %v843, 4294901760
        %1250 = vmatmul.mubr.f32.gmra.mrb[0].mxu0 %v1249
        %v1251 = vpop.f32.mrb[0].mxu0
        %v1252 = vadd.f32 %v1169, %v1251
        %v1253 = vpop.f32.mrb[0].mxu0
        %1254 = vdwg.mxu0
        %1255 = vmatprep.subr.mxu0 0.0
        %v1256 = vand.u32 %v340, 4294901760
        %1257 = vmatpush1.msra.mxu0 %v1256
        %1258 = vmatprep.subr.mxu0 0.0
        %v1259 = vand.u32 %v341, 4294901760
        %1260 = vmatpush1.msra.mxu0 %v1259
        %1261 = vmatprep.subr.mxu0 0.0
        %v1262 = vand.u32 %v342, 4294901760
        %1263 = vmatpush1.msra.mxu0 %v1262
        %1264 = vmatprep.subr.mxu0 0.0
        %v1265 = vand.u32 %v343, 4294901760
        %1266 = vmatpush1.msra.mxu0 %v1265
        %1267 = vmatprep.subr.mxu0 0.0
        %1268 = vmatpush1.msra.mxu0 0.0
        %1269 = vmatprep.subr.mxu0 0.0
        %1270 = vmatpush1.msra.mxu0 0.0
        %1271 = vmatprep.subr.mxu0 0.0
        %1272 = vmatpush1.msra.mxu0 0.0
        %1273 = vmatprep.subr.mxu0 0.0
        %1274 = vmatpush1.msra.mxu0 0.0
        %1275 = vmatprep.subr.mxu0 0.0
        %1276 = vmatpush1.msra.mxu0 0.0
        %1277 = vmatprep.subr.mxu0 0.0
        %1278 = vmatpush1.msra.mxu0 0.0
        %1279 = vmatprep.subr.mxu0 0.0
        %1280 = vmatpush1.msra.mxu0 0.0
        %1281 = vmatprep.subr.mxu0 0.0
        %1282 = vmatpush1.msra.mxu0 0.0
        %1283 = vmatprep.subr.mxu0 0.0
        %1284 = vmatpush1.msra.mxu0 0.0
        %1285 = vmatprep.subr.mxu0 0.0
        %1286 = vmatpush1.msra.mxu0 0.0
        %1287 = vmatprep.subr.mxu0 0.0
        %1288 = vmatpush1.msra.mxu0 0.0
        %1289 = vmatprep.subr.mxu0 0.0
        %1290 = vmatpush1.msra.mxu0 0.0
        %1291 = vmatprep.subr.mxu0 0.0
        %1292 = vmatpush1.msra.mxu0 0.0
        %1293 = vmatprep.subr.mxu0 0.0
        %1294 = vmatpush1.msra.mxu0 0.0
        %1295 = vmatprep.subr.mxu0 0.0
        %1296 = vmatpush1.msra.mxu0 0.0
        %1297 = vmatprep.subr.mxu0 0.0
        %1298 = vmatpush1.msra.mxu0 0.0
        %1299 = vmatprep.subr.mxu0 0.0
        %1300 = vmatpush1.msra.mxu0 0.0
        %1301 = vmatprep.subr.mxu0 0.0
        %1302 = vmatpush1.msra.mxu0 0.0
        %1303 = vmatprep.subr.mxu0 0.0
        %1304 = vmatpush1.msra.mxu0 0.0
        %1305 = vmatprep.subr.mxu0 0.0
        %1306 = vmatpush1.msra.mxu0 0.0
        %1307 = vmatprep.subr.mxu0 0.0
        %1308 = vmatpush1.msra.mxu0 0.0
        %1309 = vmatprep.subr.mxu0 0.0
        %1310 = vmatpush1.msra.mxu0 0.0
        %1311 = vmatprep.subr.mxu0 0.0
        %1312 = vmatpush1.msra.mxu0 0.0
        %1313 = vmatprep.subr.mxu0 0.0
        %1314 = vmatpush1.msra.mxu0 0.0
        %1315 = vmatprep.subr.mxu0 0.0
        %1316 = vmatpush1.msra.mxu0 0.0
        %1317 = vmatprep.subr.mxu0 0.0
        %1318 = vmatpush1.msra.mxu0 0.0
        %1319 = vmatprep.subr.mxu0 0.0
        %1320 = vmatpush1.msra.mxu0 0.0
        %1321 = vmatprep.subr.mxu0 0.0
        %1322 = vmatpush1.msra.mxu0 0.0
        %1323 = vmatprep.mubr.f32.mxu0 0.0
        %v1324 = vand.u32 %v843, 4294901760
        %1325 = vmatmul.mubr.f32.gmra.mrb[0].mxu0 %v1324
        %v1326 = vpop.f32.mrb[0].mxu0
        %v1327 = vadd.f32 %v1252, %v1326
        %v1328 = vpop.f32.mrb[0].mxu0
        %1329 = vdwg.mxu0
        %v1330 = vadd.f32 %v839, %v1327
        %v1331 = vxor.u32 %v1330, 2147483648
        %v1332 = vmul.f32 %v1331, 1.442695
        %v1333 = vpow.pop %v1332
        %v1334 = vadd.f32 %v1333, 1.0
        %v1335 = vrcp.pop %v1334
        %v1336 = vmul.f32 1.0, %v1335
        %1338 = vrot.lane.b32.xlu0 %v1327, 96
        %v1339 = vpop.permute.xlu0 %1338
        %v1341 = vmul.f32 %v1336, %v1339
        %1343 = vrot.lane.b32.xlu0 %v1341, 32
        %v1344 = vpop.permute.xlu0 %1343
        %v1346 = vadd.f32 %v839, %v1344
        %v1347 = vtanh.pop %v1346
        %v1348 = vsub.f32 1.0, %v1336
        %v1349 = vmul.f32 %v1348, %v351
        %1351 = vrot.lane.b32.xlu0 %v1347, 64
        %v1352 = vpop.permute.xlu0 %1351
        %v1354 = vmul.f32 %v1336, %v1352
        %v1355 = vadd.f32 %v1349, %v1354
        %1356 = vst.msk [vmem:[%s326] sm:$0xff] %vm353, %v1355
        %s1357 = scalar_lea.vmem %s278, 8 [#allocation3]
        %v1358 = vld [vmem:[%s1357] sm:$0xff]
        %v1360 = vsel %vm353, %v1358, 0
        %1362 = vmatprep.subr.mxu0 0.0
        %v1363 = vand.u32 %v336, 4294901760
        %1364 = vmatpush1.msra.mxu0 %v1363
        %1365 = vmatprep.subr.mxu0 0.0
        %v1366 = vand.u32 %v337, 4294901760
        %1367 = vmatpush1.msra.mxu0 %v1366
        %1368 = vmatprep.subr.mxu0 0.0
        %v1369 = vand.u32 %v338, 4294901760
        %1370 = vmatpush1.msra.mxu0 %v1369
        %1371 = vmatprep.subr.mxu0 0.0
        %v1372 = vand.u32 %v339, 4294901760
        %1373 = vmatpush1.msra.mxu0 %v1372
        %1374 = vmatprep.subr.mxu0 0.0
        %1375 = vmatpush1.msra.mxu0 0.0
        %1376 = vmatprep.subr.mxu0 0.0
        %1377 = vmatpush1.msra.mxu0 0.0
        %1378 = vmatprep.subr.mxu0 0.0
        %1379 = vmatpush1.msra.mxu0 0.0
        %1380 = vmatprep.subr.mxu0 0.0
        %1381 = vmatpush1.msra.mxu0 0.0
        %1382 = vmatprep.subr.mxu0 0.0
        %1383 = vmatpush1.msra.mxu0 0.0
        %1384 = vmatprep.subr.mxu0 0.0
        %1385 = vmatpush1.msra.mxu0 0.0
        %1386 = vmatprep.subr.mxu0 0.0
        %1387 = vmatpush1.msra.mxu0 0.0
        %1388 = vmatprep.subr.mxu0 0.0
        %1389 = vmatpush1.msra.mxu0 0.0
        %1390 = vmatprep.subr.mxu0 0.0
        %1391 = vmatpush1.msra.mxu0 0.0
        %1392 = vmatprep.subr.mxu0 0.0
        %1393 = vmatpush1.msra.mxu0 0.0
        %1394 = vmatprep.subr.mxu0 0.0
        %1395 = vmatpush1.msra.mxu0 0.0
        %1396 = vmatprep.subr.mxu0 0.0
        %1397 = vmatpush1.msra.mxu0 0.0
        %1398 = vmatprep.subr.mxu0 0.0
        %1399 = vmatpush1.msra.mxu0 0.0
        %1400 = vmatprep.subr.mxu0 0.0
        %1401 = vmatpush1.msra.mxu0 0.0
        %1402 = vmatprep.subr.mxu0 0.0
        %1403 = vmatpush1.msra.mxu0 0.0
        %1404 = vmatprep.subr.mxu0 0.0
        %1405 = vmatpush1.msra.mxu0 0.0
        %1406 = vmatprep.subr.mxu0 0.0
        %1407 = vmatpush1.msra.mxu0 0.0
        %1408 = vmatprep.subr.mxu0 0.0
        %1409 = vmatpush1.msra.mxu0 0.0
        %1410 = vmatprep.subr.mxu0 0.0
        %1411 = vmatpush1.msra.mxu0 0.0
        %1412 = vmatprep.subr.mxu0 0.0
        %1413 = vmatpush1.msra.mxu0 0.0
        %1414 = vmatprep.subr.mxu0 0.0
        %1415 = vmatpush1.msra.mxu0 0.0
        %1416 = vmatprep.subr.mxu0 0.0
        %1417 = vmatpush1.msra.mxu0 0.0
        %1418 = vmatprep.subr.mxu0 0.0
        %1419 = vmatpush1.msra.mxu0 0.0
        %1420 = vmatprep.subr.mxu0 0.0
        %1421 = vmatpush1.msra.mxu0 0.0
        %1422 = vmatprep.subr.mxu0 0.0
        %1423 = vmatpush1.msra.mxu0 0.0
        %1424 = vmatprep.subr.mxu0 0.0
        %1425 = vmatpush1.msra.mxu0 0.0
        %1426 = vmatprep.subr.mxu0 0.0
        %1427 = vmatpush1.msra.mxu0 0.0
        %1428 = vmatprep.subr.mxu0 0.0
        %1429 = vmatpush1.msra.mxu0 0.0
        %1430 = vmatprep.mubr.f32.mxu0 0.0
        %v1431 = vand.u32 %v1360, 4294901760
        %v1432 = vsub.f32 %v1360, %v1431
        %v1433 = vand.u32 %v1432, 4294901760
        %v1434 = vsub.f32 %v1432, %v1433
        %v1435 = vand.u32 %v1434, 4294901760
        %1436 = vmatmul.mubr.f32.gmra.mrb[0].mxu0 %v1435
        %v1437 = vpop.f32.mrb[0].mxu0
        %v1438 = vadd.f32 %v349, %v1437
        %v1439 = vpop.f32.mrb[0].mxu0
        %1440 = vdwg.mxu0
        %1441 = vmatprep.subr.mxu0 0.0
        %v1442 = vand.u32 %v336, 4294901760
        %v1443 = vsub.f32 %v336, %v1442
        %v1444 = vand.u32 %v1443, 4294901760
        %v1445 = vsub.f32 %v1443, %v1444
        %v1446 = vand.u32 %v1445, 4294901760
        %1447 = vmatpush1.msra.mxu0 %v1446
        %1448 = vmatprep.subr.mxu0 0.0
        %v1449 = vand.u32 %v337, 4294901760
        %v1450 = vsub.f32 %v337, %v1449
        %v1451 = vand.u32 %v1450, 4294901760
        %v1452 = vsub.f32 %v1450, %v1451
        %v1453 = vand.u32 %v1452, 4294901760
        %1454 = vmatpush1.msra.mxu0 %v1453
        %1455 = vmatprep.subr.mxu0 0.0
        %v1456 = vand.u32 %v338, 4294901760
        %v1457 = vsub.f32 %v338, %v1456
        %v1458 = vand.u32 %v1457, 4294901760
        %v1459 = vsub.f32 %v1457, %v1458
        %v1460 = vand.u32 %v1459, 4294901760
        %1461 = vmatpush1.msra.mxu0 %v1460
        %1462 = vmatprep.subr.mxu0 0.0
        %v1463 = vand.u32 %v339, 4294901760
        %v1464 = vsub.f32 %v339, %v1463
        %v1465 = vand.u32 %v1464, 4294901760
        %v1466 = vsub.f32 %v1464, %v1465
        %v1467 = vand.u32 %v1466, 4294901760
        %1468 = vmatpush1.msra.mxu0 %v1467
        %1469 = vmatprep.subr.mxu0 0.0
        %1470 = vmatpush1.msra.mxu0 0.0
        %1471 = vmatprep.subr.mxu0 0.0
        %1472 = vmatpush1.msra.mxu0 0.0
        %1473 = vmatprep.subr.mxu0 0.0
        %1474 = vmatpush1.msra.mxu0 0.0
        %1475 = vmatprep.subr.mxu0 0.0
        %1476 = vmatpush1.msra.mxu0 0.0
        %1477 = vmatprep.subr.mxu0 0.0
        %1478 = vmatpush1.msra.mxu0 0.0
        %1479 = vmatprep.subr.mxu0 0.0
        %1480 = vmatpush1.msra.mxu0 0.0
        %1481 = vmatprep.subr.mxu0 0.0
        %1482 = vmatpush1.msra.mxu0 0.0
        %1483 = vmatprep.subr.mxu0 0.0
        %1484 = vmatpush1.msra.mxu0 0.0
        %1485 = vmatprep.subr.mxu0 0.0
        %1486 = vmatpush1.msra.mxu0 0.0
        %1487 = vmatprep.subr.mxu0 0.0
        %1488 = vmatpush1.msra.mxu0 0.0
        %1489 = vmatprep.subr.mxu0 0.0
        %1490 = vmatpush1.msra.mxu0 0.0
        %1491 = vmatprep.subr.mxu0 0.0
        %1492 = vmatpush1.msra.mxu0 0.0
        %1493 = vmatprep.subr.mxu0 0.0
        %1494 = vmatpush1.msra.mxu0 0.0
        %1495 = vmatprep.subr.mxu0 0.0
        %1496 = vmatpush1.msra.mxu0 0.0
        %1497 = vmatprep.subr.mxu0 0.0
        %1498 = vmatpush1.msra.mxu0 0.0
        %1499 = vmatprep.subr.mxu0 0.0
        %1500 = vmatpush1.msra.mxu0 0.0
        %1501 = vmatprep.subr.mxu0 0.0
        %1502 = vmatpush1.msra.mxu0 0.0
        %1503 = vmatprep.subr.mxu0 0.0
        %1504 = vmatpush1.msra.mxu0 0.0
        %1505 = vmatprep.subr.mxu0 0.0
        %1506 = vmatpush1.msra.mxu0 0.0
        %1507 = vmatprep.subr.mxu0 0.0
        %1508 = vmatpush1.msra.mxu0 0.0
        %1509 = vmatprep.subr.mxu0 0.0
        %1510 = vmatpush1.msra.mxu0 0.0
        %1511 = vmatprep.subr.mxu0 0.0
        %1512 = vmatpush1.msra.mxu0 0.0
        %1513 = vmatprep.subr.mxu0 0.0
        %1514 = vmatpush1.msra.mxu0 0.0
        %1515 = vmatprep.subr.mxu0 0.0
        %1516 = vmatpush1.msra.mxu0 0.0
        %1517 = vmatprep.subr.mxu0 0.0
        %1518 = vmatpush1.msra.mxu0 0.0
        %1519 = vmatprep.subr.mxu0 0.0
        %1520 = vmatpush1.msra.mxu0 0.0
        %1521 = vmatprep.subr.mxu0 0.0
        %1522 = vmatpush1.msra.mxu0 0.0
        %1523 = vmatprep.subr.mxu0 0.0
        %1524 = vmatpush1.msra.mxu0 0.0
        %1525 = vmatprep.mubr.f32.mxu0 0.0
        %v1526 = vand.u32 %v1360, 4294901760
        %1527 = vmatmul.mubr.f32.gmra.mrb[0].mxu0 %v1526
        %v1528 = vpop.f32.mrb[0].mxu0
        %v1529 = vadd.f32 %v1438, %v1528
        %v1530 = vpop.f32.mrb[0].mxu0
        %1531 = vdwg.mxu0
        %1532 = vmatprep.subr.mxu0 0.0
        %v1533 = vand.u32 %v336, 4294901760
        %v1534 = vsub.f32 %v336, %v1533
        %1535 = vmatpush1.msra.mxu0 %v1534
        %1536 = vmatprep.subr.mxu0 0.0
        %v1537 = vand.u32 %v337, 4294901760
        %v1538 = vsub.f32 %v337, %v1537
        %1539 = vmatpush1.msra.mxu0 %v1538
        %1540 = vmatprep.subr.mxu0 0.0
        %v1541 = vand.u32 %v338, 4294901760
        %v1542 = vsub.f32 %v338, %v1541
        %1543 = vmatpush1.msra.mxu0 %v1542
        %1544 = vmatprep.subr.mxu0 0.0
        %v1545 = vand.u32 %v339, 4294901760
        %v1546 = vsub.f32 %v339, %v1545
        %1547 = vmatpush1.msra.mxu0 %v1546
        %1548 = vmatprep.subr.mxu0 0.0
        %1549 = vmatpush1.msra.mxu0 0.0
        %1550 = vmatprep.subr.mxu0 0.0
        %1551 = vmatpush1.msra.mxu0 0.0
        %1552 = vmatprep.subr.mxu0 0.0
        %1553 = vmatpush1.msra.mxu0 0.0
        %1554 = vmatprep.subr.mxu0 0.0
        %1555 = vmatpush1.msra.mxu0 0.0
        %1556 = vmatprep.subr.mxu0 0.0
        %1557 = vmatpush1.msra.mxu0 0.0
        %1558 = vmatprep.subr.mxu0 0.0
        %1559 = vmatpush1.msra.mxu0 0.0
        %1560 = vmatprep.subr.mxu0 0.0
        %1561 = vmatpush1.msra.mxu0 0.0
        %1562 = vmatprep.subr.mxu0 0.0
        %1563 = vmatpush1.msra.mxu0 0.0
        %1564 = vmatprep.subr.mxu0 0.0
        %1565 = vmatpush1.msra.mxu0 0.0
        %1566 = vmatprep.subr.mxu0 0.0
        %1567 = vmatpush1.msra.mxu0 0.0
        %1568 = vmatprep.subr.mxu0 0.0
        %1569 = vmatpush1.msra.mxu0 0.0
        %1570 = vmatprep.subr.mxu0 0.0
        %1571 = vmatpush1.msra.mxu0 0.0
        %1572 = vmatprep.subr.mxu0 0.0
        %1573 = vmatpush1.msra.mxu0 0.0
        %1574 = vmatprep.subr.mxu0 0.0
        %1575 = vmatpush1.msra.mxu0 0.0
        %1576 = vmatprep.subr.mxu0 0.0
        %1577 = vmatpush1.msra.mxu0 0.0
        %1578 = vmatprep.subr.mxu0 0.0
        %1579 = vmatpush1.msra.mxu0 0.0
        %1580 = vmatprep.subr.mxu0 0.0
        %1581 = vmatpush1.msra.mxu0 0.0
        %1582 = vmatprep.subr.mxu0 0.0
        %1583 = vmatpush1.msra.mxu0 0.0
        %1584 = vmatprep.subr.mxu0 0.0
        %1585 = vmatpush1.msra.mxu0 0.0
        %1586 = vmatprep.subr.mxu0 0.0
        %1587 = vmatpush1.msra.mxu0 0.0
        %1588 = vmatprep.subr.mxu0 0.0
        %1589 = vmatpush1.msra.mxu0 0.0
        %1590 = vmatprep.subr.mxu0 0.0
        %1591 = vmatpush1.msra.mxu0 0.0
        %1592 = vmatprep.subr.mxu0 0.0
        %1593 = vmatpush1.msra.mxu0 0.0
        %1594 = vmatprep.subr.mxu0 0.0
        %1595 = vmatpush1.msra.mxu0 0.0
        %1596 = vmatprep.subr.mxu0 0.0
        %1597 = vmatpush1.msra.mxu0 0.0
        %1598 = vmatprep.subr.mxu0 0.0
        %1599 = vmatpush1.msra.mxu0 0.0
        %1600 = vmatprep.subr.mxu0 0.0
        %1601 = vmatpush1.msra.mxu0 0.0
        %1602 = vmatprep.subr.mxu0 0.0
        %1603 = vmatpush1.msra.mxu0 0.0
        %1604 = vmatprep.mubr.f32.mxu0 0.0
        %v1605 = vand.u32 %v1360, 4294901760
        %v1606 = vsub.f32 %v1360, %v1605
        %1607 = vmatmul.mubr.f32.gmra.mrb[0].mxu0 %v1606
        %v1608 = vpop.f32.mrb[0].mxu0
        %v1609 = vadd.f32 %v1529, %v1608
        %v1610 = vpop.f32.mrb[0].mxu0
        %1611 = vdwg.mxu0
        %1612 = vmatprep.subr.mxu0 0.0
        %v1613 = vand.u32 %v336, 4294901760
        %1614 = vmatpush1.msra.mxu0 %v1613
        %1615 = vmatprep.subr.mxu0 0.0
        %v1616 = vand.u32 %v337, 4294901760
        %1617 = vmatpush1.msra.mxu0 %v1616
        %1618 = vmatprep.subr.mxu0 0.0
        %v1619 = vand.u32 %v338, 4294901760
        %1620 = vmatpush1.msra.mxu0 %v1619
        %1621 = vmatprep.subr.mxu0 0.0
        %v1622 = vand.u32 %v339, 4294901760
        %1623 = vmatpush1.msra.mxu0 %v1622
        %1624 = vmatprep.subr.mxu0 0.0
        %1625 = vmatpush1.msra.mxu0 0.0
        %1626 = vmatprep.subr.mxu0 0.0
        %1627 = vmatpush1.msra.mxu0 0.0
        %1628 = vmatprep.subr.mxu0 0.0
        %1629 = vmatpush1.msra.mxu0 0.0
        %1630 = vmatprep.subr.mxu0 0.0
        %1631 = vmatpush1.msra.mxu0 0.0
        %1632 = vmatprep.subr.mxu0 0.0
        %1633 = vmatpush1.msra.mxu0 0.0
        %1634 = vmatprep.subr.mxu0 0.0
        %1635 = vmatpush1.msra.mxu0 0.0
        %1636 = vmatprep.subr.mxu0 0.0
        %1637 = vmatpush1.msra.mxu0 0.0
        %1638 = vmatprep.subr.mxu0 0.0
        %1639 = vmatpush1.msra.mxu0 0.0
        %1640 = vmatprep.subr.mxu0 0.0
        %1641 = vmatpush1.msra.mxu0 0.0
        %1642 = vmatprep.subr.mxu0 0.0
        %1643 = vmatpush1.msra.mxu0 0.0
        %1644 = vmatprep.subr.mxu0 0.0
        %1645 = vmatpush1.msra.mxu0 0.0
        %1646 = vmatprep.subr.mxu0 0.0
        %1647 = vmatpush1.msra.mxu0 0.0
        %1648 = vmatprep.subr.mxu0 0.0
        %1649 = vmatpush1.msra.mxu0 0.0
        %1650 = vmatprep.subr.mxu0 0.0
        %1651 = vmatpush1.msra.mxu0 0.0
        %1652 = vmatprep.subr.mxu0 0.0
        %1653 = vmatpush1.msra.mxu0 0.0
        %1654 = vmatprep.subr.mxu0 0.0
        %1655 = vmatpush1.msra.mxu0 0.0
        %1656 = vmatprep.subr.mxu0 0.0
        %1657 = vmatpush1.msra.mxu0 0.0
        %1658 = vmatprep.subr.mxu0 0.0
        %1659 = vmatpush1.msra.mxu0 0.0
        %1660 = vmatprep.subr.mxu0 0.0
        %1661 = vmatpush1.msra.mxu0 0.0
        %1662 = vmatprep.subr.mxu0 0.0
        %1663 = vmatpush1.msra.mxu0 0.0
        %1664 = vmatprep.subr.mxu0 0.0
        %1665 = vmatpush1.msra.mxu0 0.0
        %1666 = vmatprep.subr.mxu0 0.0
        %1667 = vmatpush1.msra.mxu0 0.0
        %1668 = vmatprep.subr.mxu0 0.0
        %1669 = vmatpush1.msra.mxu0 0.0
        %1670 = vmatprep.subr.mxu0 0.0
        %1671 = vmatpush1.msra.mxu0 0.0
        %1672 = vmatprep.subr.mxu0 0.0
        %1673 = vmatpush1.msra.mxu0 0.0
        %1674 = vmatprep.subr.mxu0 0.0
        %1675 = vmatpush1.msra.mxu0 0.0
        %1676 = vmatprep.subr.mxu0 0.0
        %1677 = vmatpush1.msra.mxu0 0.0
        %1678 = vmatprep.subr.mxu0 0.0
        %1679 = vmatpush1.msra.mxu0 0.0
        %1680 = vmatprep.mubr.f32.mxu0 0.0
        %v1681 = vand.u32 %v1360, 4294901760
        %v1682 = vsub.f32 %v1360, %v1681
        %v1683 = vand.u32 %v1682, 4294901760
        %1684 = vmatmul.mubr.f32.gmra.mrb[0].mxu0 %v1683
        %v1685 = vpop.f32.mrb[0].mxu0
        %v1686 = vadd.f32 %v1609, %v1685
        %v1687 = vpop.f32.mrb[0].mxu0
        %1688 = vdwg.mxu0
        %1689 = vmatprep.subr.mxu0 0.0
        %v1690 = vand.u32 %v336, 4294901760
        %v1691 = vsub.f32 %v336, %v1690
        %v1692 = vand.u32 %v1691, 4294901760
        %1693 = vmatpush1.msra.mxu0 %v1692
        %1694 = vmatprep.subr.mxu0 0.0
        %v1695 = vand.u32 %v337, 4294901760
        %v1696 = vsub.f32 %v337, %v1695
        %v1697 = vand.u32 %v1696, 4294901760
        %1698 = vmatpush1.msra.mxu0 %v1697
        %1699 = vmatprep.subr.mxu0 0.0
        %v1700 = vand.u32 %v338, 4294901760
        %v1701 = vsub.f32 %v338, %v1700
        %v1702 = vand.u32 %v1701, 4294901760
        %1703 = vmatpush1.msra.mxu0 %v1702
        %1704 = vmatprep.subr.mxu0 0.0
        %v1705 = vand.u32 %v339, 4294901760
        %v1706 = vsub.f32 %v339, %v1705
        %v1707 = vand.u32 %v1706, 4294901760
        %1708 = vmatpush1.msra.mxu0 %v1707
        %1709 = vmatprep.subr.mxu0 0.0
        %1710 = vmatpush1.msra.mxu0 0.0
        %1711 = vmatprep.subr.mxu0 0.0
        %1712 = vmatpush1.msra.mxu0 0.0
        %1713 = vmatprep.subr.mxu0 0.0
        %1714 = vmatpush1.msra.mxu0 0.0
        %1715 = vmatprep.subr.mxu0 0.0
        %1716 = vmatpush1.msra.mxu0 0.0
        %1717 = vmatprep.subr.mxu0 0.0
        %1718 = vmatpush1.msra.mxu0 0.0
        %1719 = vmatprep.subr.mxu0 0.0
        %1720 = vmatpush1.msra.mxu0 0.0
        %1721 = vmatprep.subr.mxu0 0.0
        %1722 = vmatpush1.msra.mxu0 0.0
        %1723 = vmatprep.subr.mxu0 0.0
        %1724 = vmatpush1.msra.mxu0 0.0
        %1725 = vmatprep.subr.mxu0 0.0
        %1726 = vmatpush1.msra.mxu0 0.0
        %1727 = vmatprep.subr.mxu0 0.0
        %1728 = vmatpush1.msra.mxu0 0.0
        %1729 = vmatprep.subr.mxu0 0.0
        %1730 = vmatpush1.msra.mxu0 0.0
        %1731 = vmatprep.subr.mxu0 0.0
        %1732 = vmatpush1.msra.mxu0 0.0
        %1733 = vmatprep.subr.mxu0 0.0
        %1734 = vmatpush1.msra.mxu0 0.0
        %1735 = vmatprep.subr.mxu0 0.0
        %1736 = vmatpush1.msra.mxu0 0.0
        %1737 = vmatprep.subr.mxu0 0.0
        %1738 = vmatpush1.msra.mxu0 0.0
        %1739 = vmatprep.subr.mxu0 0.0
        %1740 = vmatpush1.msra.mxu0 0.0
        %1741 = vmatprep.subr.mxu0 0.0
        %1742 = vmatpush1.msra.mxu0 0.0
        %1743 = vmatprep.subr.mxu0 0.0
        %1744 = vmatpush1.msra.mxu0 0.0
        %1745 = vmatprep.subr.mxu0 0.0
        %1746 = vmatpush1.msra.mxu0 0.0
        %1747 = vmatprep.subr.mxu0 0.0
        %1748 = vmatpush1.msra.mxu0 0.0
        %1749 = vmatprep.subr.mxu0 0.0
        %1750 = vmatpush1.msra.mxu0 0.0
        %1751 = vmatprep.subr.mxu0 0.0
        %1752 = vmatpush1.msra.mxu0 0.0
        %1753 = vmatprep.subr.mxu0 0.0
        %1754 = vmatpush1.msra.mxu0 0.0
        %1755 = vmatprep.subr.mxu0 0.0
        %1756 = vmatpush1.msra.mxu0 0.0
        %1757 = vmatprep.subr.mxu0 0.0
        %1758 = vmatpush1.msra.mxu0 0.0
        %1759 = vmatprep.subr.mxu0 0.0
        %1760 = vmatpush1.msra.mxu0 0.0
        %1761 = vmatprep.subr.mxu0 0.0
        %1762 = vmatpush1.msra.mxu0 0.0
        %1763 = vmatprep.subr.mxu0 0.0
        %1764 = vmatpush1.msra.mxu0 0.0
        %1765 = vmatprep.mubr.f32.mxu0 0.0
        %v1766 = vand.u32 %v1360, 4294901760
        %1767 = vmatmul.mubr.f32.gmra.mrb[0].mxu0 %v1766
        %v1768 = vpop.f32.mrb[0].mxu0
        %v1769 = vadd.f32 %v1686, %v1768
        %v1770 = vpop.f32.mrb[0].mxu0
        %1771 = vdwg.mxu0
        %1772 = vmatprep.subr.mxu0 0.0
        %v1773 = vand.u32 %v336, 4294901760
        %1774 = vmatpush1.msra.mxu0 %v1773
        %1775 = vmatprep.subr.mxu0 0.0
        %v1776 = vand.u32 %v337, 4294901760
        %1777 = vmatpush1.msra.mxu0 %v1776
        %1778 = vmatprep.subr.mxu0 0.0
        %v1779 = vand.u32 %v338, 4294901760
        %1780 = vmatpush1.msra.mxu0 %v1779
        %1781 = vmatprep.subr.mxu0 0.0
        %v1782 = vand.u32 %v339, 4294901760
        %1783 = vmatpush1.msra.mxu0 %v1782
        %1784 = vmatprep.subr.mxu0 0.0
        %1785 = vmatpush1.msra.mxu0 0.0
        %1786 = vmatprep.subr.mxu0 0.0
        %1787 = vmatpush1.msra.mxu0 0.0
        %1788 = vmatprep.subr.mxu0 0.0
        %1789 = vmatpush1.msra.mxu0 0.0
        %1790 = vmatprep.subr.mxu0 0.0
        %1791 = vmatpush1.msra.mxu0 0.0
        %1792 = vmatprep.subr.mxu0 0.0
        %1793 = vmatpush1.msra.mxu0 0.0
        %1794 = vmatprep.subr.mxu0 0.0
        %1795 = vmatpush1.msra.mxu0 0.0
        %1796 = vmatprep.subr.mxu0 0.0
        %1797 = vmatpush1.msra.mxu0 0.0
        %1798 = vmatprep.subr.mxu0 0.0
        %1799 = vmatpush1.msra.mxu0 0.0
        %1800 = vmatprep.subr.mxu0 0.0
        %1801 = vmatpush1.msra.mxu0 0.0
        %1802 = vmatprep.subr.mxu0 0.0
        %1803 = vmatpush1.msra.mxu0 0.0
        %1804 = vmatprep.subr.mxu0 0.0
        %1805 = vmatpush1.msra.mxu0 0.0
        %1806 = vmatprep.subr.mxu0 0.0
        %1807 = vmatpush1.msra.mxu0 0.0
        %1808 = vmatprep.subr.mxu0 0.0
        %1809 = vmatpush1.msra.mxu0 0.0
        %1810 = vmatprep.subr.mxu0 0.0
        %1811 = vmatpush1.msra.mxu0 0.0
        %1812 = vmatprep.subr.mxu0 0.0
        %1813 = vmatpush1.msra.mxu0 0.0
        %1814 = vmatprep.subr.mxu0 0.0
        %1815 = vmatpush1.msra.mxu0 0.0
        %1816 = vmatprep.subr.mxu0 0.0
        %1817 = vmatpush1.msra.mxu0 0.0
        %1818 = vmatprep.subr.mxu0 0.0
        %1819 = vmatpush1.msra.mxu0 0.0
        %1820 = vmatprep.subr.mxu0 0.0
        %1821 = vmatpush1.msra.mxu0 0.0
        %1822 = vmatprep.subr.mxu0 0.0
        %1823 = vmatpush1.msra.mxu0 0.0
        %1824 = vmatprep.subr.mxu0 0.0
        %1825 = vmatpush1.msra.mxu0 0.0
        %1826 = vmatprep.subr.mxu0 0.0
        %1827 = vmatpush1.msra.mxu0 0.0
        %1828 = vmatprep.subr.mxu0 0.0
        %1829 = vmatpush1.msra.mxu0 0.0
        %1830 = vmatprep.subr.mxu0 0.0
        %1831 = vmatpush1.msra.mxu0 0.0
        %1832 = vmatprep.subr.mxu0 0.0
        %1833 = vmatpush1.msra.mxu0 0.0
        %1834 = vmatprep.subr.mxu0 0.0
        %1835 = vmatpush1.msra.mxu0 0.0
        %1836 = vmatprep.subr.mxu0 0.0
        %1837 = vmatpush1.msra.mxu0 0.0
        %1838 = vmatprep.subr.mxu0 0.0
        %1839 = vmatpush1.msra.mxu0 0.0
        %1840 = vmatprep.mubr.f32.mxu0 0.0
        %v1841 = vand.u32 %v1360, 4294901760
        %1842 = vmatmul.mubr.f32.gmra.mrb[0].mxu0 %v1841
        %v1843 = vpop.f32.mrb[0].mxu0
        %v1844 = vadd.f32 %v1769, %v1843
        %v1845 = vpop.f32.mrb[0].mxu0
        %1846 = vdwg.mxu0
        %v1848 = vsel %vm353, %v1355, 0
        %1850 = vmatprep.subr.mxu0 0.0
        %v1851 = vand.u32 %v340, 4294901760
        %1852 = vmatpush1.msra.mxu0 %v1851
        %1853 = vmatprep.subr.mxu0 0.0
        %v1854 = vand.u32 %v341, 4294901760
        %1855 = vmatpush1.msra.mxu0 %v1854
        %1856 = vmatprep.subr.mxu0 0.0
        %v1857 = vand.u32 %v342, 4294901760
        %1858 = vmatpush1.msra.mxu0 %v1857
        %1859 = vmatprep.subr.mxu0 0.0
        %v1860 = vand.u32 %v343, 4294901760
        %1861 = vmatpush1.msra.mxu0 %v1860
        %1862 = vmatprep.subr.mxu0 0.0
        %1863 = vmatpush1.msra.mxu0 0.0
        %1864 = vmatprep.subr.mxu0 0.0
        %1865 = vmatpush1.msra.mxu0 0.0
        %1866 = vmatprep.subr.mxu0 0.0
        %1867 = vmatpush1.msra.mxu0 0.0
        %1868 = vmatprep.subr.mxu0 0.0
        %1869 = vmatpush1.msra.mxu0 0.0
        %1870 = vmatprep.subr.mxu0 0.0
        %1871 = vmatpush1.msra.mxu0 0.0
        %1872 = vmatprep.subr.mxu0 0.0
        %1873 = vmatpush1.msra.mxu0 0.0
        %1874 = vmatprep.subr.mxu0 0.0
        %1875 = vmatpush1.msra.mxu0 0.0
        %1876 = vmatprep.subr.mxu0 0.0
        %1877 = vmatpush1.msra.mxu0 0.0
        %1878 = vmatprep.subr.mxu0 0.0
        %1879 = vmatpush1.msra.mxu0 0.0
        %1880 = vmatprep.subr.mxu0 0.0
        %1881 = vmatpush1.msra.mxu0 0.0
        %1882 = vmatprep.subr.mxu0 0.0
        %1883 = vmatpush1.msra.mxu0 0.0
        %1884 = vmatprep.subr.mxu0 0.0
        %1885 = vmatpush1.msra.mxu0 0.0
        %1886 = vmatprep.subr.mxu0 0.0
        %1887 = vmatpush1.msra.mxu0 0.0
        %1888 = vmatprep.subr.mxu0 0.0
        %1889 = vmatpush1.msra.mxu0 0.0
        %1890 = vmatprep.subr.mxu0 0.0
        %1891 = vmatpush1.msra.mxu0 0.0
        %1892 = vmatprep.subr.mxu0 0.0
        %1893 = vmatpush1.msra.mxu0 0.0
        %1894 = vmatprep.subr.mxu0 0.0
        %1895 = vmatpush1.msra.mxu0 0.0
        %1896 = vmatprep.subr.mxu0 0.0
        %1897 = vmatpush1.msra.mxu0 0.0
        %1898 = vmatprep.subr.mxu0 0.0
        %1899 = vmatpush1.msra.mxu0 0.0
        %1900 = vmatprep.subr.mxu0 0.0
        %1901 = vmatpush1.msra.mxu0 0.0
        %1902 = vmatprep.subr.mxu0 0.0
        %1903 = vmatpush1.msra.mxu0 0.0
        %1904 = vmatprep.subr.mxu0 0.0
        %1905 = vmatpush1.msra.mxu0 0.0
        %1906 = vmatprep.subr.mxu0 0.0
        %1907 = vmatpush1.msra.mxu0 0.0
        %1908 = vmatprep.subr.mxu0 0.0
        %1909 = vmatpush1.msra.mxu0 0.0
        %1910 = vmatprep.subr.mxu0 0.0
        %1911 = vmatpush1.msra.mxu0 0.0
        %1912 = vmatprep.subr.mxu0 0.0
        %1913 = vmatpush1.msra.mxu0 0.0
        %1914 = vmatprep.subr.mxu0 0.0
        %1915 = vmatpush1.msra.mxu0 0.0
        %1916 = vmatprep.subr.mxu0 0.0
        %1917 = vmatpush1.msra.mxu0 0.0
        %1918 = vmatprep.mubr.f32.mxu0 0.0
        %v1919 = vand.u32 %v1848, 4294901760
        %v1920 = vsub.f32 %v1848, %v1919
        %v1921 = vand.u32 %v1920, 4294901760
        %v1922 = vsub.f32 %v1920, %v1921
        %v1923 = vand.u32 %v1922, 4294901760
        %1924 = vmatmul.mubr.f32.gmra.mrb[0].mxu0 %v1923
        %v1925 = vpop.f32.mrb[0].mxu0
        %v1926 = vadd.f32 0.0, %v1925
        %v1927 = vpop.f32.mrb[0].mxu0
        %1928 = vdwg.mxu0
        %1929 = vmatprep.subr.mxu0 0.0
        %v1930 = vand.u32 %v340, 4294901760
        %v1931 = vsub.f32 %v340, %v1930
        %v1932 = vand.u32 %v1931, 4294901760
        %v1933 = vsub.f32 %v1931, %v1932
        %v1934 = vand.u32 %v1933, 4294901760
        %1935 = vmatpush1.msra.mxu0 %v1934
        %1936 = vmatprep.subr.mxu0 0.0
        %v1937 = vand.u32 %v341, 4294901760
        %v1938 = vsub.f32 %v341, %v1937
        %v1939 = vand.u32 %v1938, 4294901760
        %v1940 = vsub.f32 %v1938, %v1939
        %v1941 = vand.u32 %v1940, 4294901760
        %1942 = vmatpush1.msra.mxu0 %v1941
        %1943 = vmatprep.subr.mxu0 0.0
        %v1944 = vand.u32 %v342, 4294901760
        %v1945 = vsub.f32 %v342, %v1944
        %v1946 = vand.u32 %v1945, 4294901760
        %v1947 = vsub.f32 %v1945, %v1946
        %v1948 = vand.u32 %v1947, 4294901760
        %1949 = vmatpush1.msra.mxu0 %v1948
        %1950 = vmatprep.subr.mxu0 0.0
        %v1951 = vand.u32 %v343, 4294901760
        %v1952 = vsub.f32 %v343, %v1951
        %v1953 = vand.u32 %v1952, 4294901760
        %v1954 = vsub.f32 %v1952, %v1953
        %v1955 = vand.u32 %v1954, 4294901760
        %1956 = vmatpush1.msra.mxu0 %v1955
        %1957 = vmatprep.subr.mxu0 0.0
        %1958 = vmatpush1.msra.mxu0 0.0
        %1959 = vmatprep.subr.mxu0 0.0
        %1960 = vmatpush1.msra.mxu0 0.0
        %1961 = vmatprep.subr.mxu0 0.0
        %1962 = vmatpush1.msra.mxu0 0.0
        %1963 = vmatprep.subr.mxu0 0.0
        %1964 = vmatpush1.msra.mxu0 0.0
        %1965 = vmatprep.subr.mxu0 0.0
        %1966 = vmatpush1.msra.mxu0 0.0
        %1967 = vmatprep.subr.mxu0 0.0
        %1968 = vmatpush1.msra.mxu0 0.0
        %1969 = vmatprep.subr.mxu0 0.0
        %1970 = vmatpush1.msra.mxu0 0.0
        %1971 = vmatprep.subr.mxu0 0.0
        %1972 = vmatpush1.msra.mxu0 0.0
        %1973 = vmatprep.subr.mxu0 0.0
        %1974 = vmatpush1.msra.mxu0 0.0
        %1975 = vmatprep.subr.mxu0 0.0
        %1976 = vmatpush1.msra.mxu0 0.0
        %1977 = vmatprep.subr.mxu0 0.0
        %1978 = vmatpush1.msra.mxu0 0.0
        %1979 = vmatprep.subr.mxu0 0.0
        %1980 = vmatpush1.msra.mxu0 0.0
        %1981 = vmatprep.subr.mxu0 0.0
        %1982 = vmatpush1.msra.mxu0 0.0
        %1983 = vmatprep.subr.mxu0 0.0
        %1984 = vmatpush1.msra.mxu0 0.0
        %1985 = vmatprep.subr.mxu0 0.0
        %1986 = vmatpush1.msra.mxu0 0.0
        %1987 = vmatprep.subr.mxu0 0.0
        %1988 = vmatpush1.msra.mxu0 0.0
        %1989 = vmatprep.subr.mxu0 0.0
        %1990 = vmatpush1.msra.mxu0 0.0
        %1991 = vmatprep.subr.mxu0 0.0
        %1992 = vmatpush1.msra.mxu0 0.0
        %1993 = vmatprep.subr.mxu0 0.0
        %1994 = vmatpush1.msra.mxu0 0.0
        %1995 = vmatprep.subr.mxu0 0.0
        %1996 = vmatpush1.msra.mxu0 0.0
        %1997 = vmatprep.subr.mxu0 0.0
        %1998 = vmatpush1.msra.mxu0 0.0
        %1999 = vmatprep.subr.mxu0 0.0
        %2000 = vmatpush1.msra.mxu0 0.0
        %2001 = vmatprep.subr.mxu0 0.0
        %2002 = vmatpush1.msra.mxu0 0.0
        %2003 = vmatprep.subr.mxu0 0.0
        %2004 = vmatpush1.msra.mxu0 0.0
        %2005 = vmatprep.subr.mxu0 0.0
        %2006 = vmatpush1.msra.mxu0 0.0
        %2007 = vmatprep.subr.mxu0 0.0
        %2008 = vmatpush1.msra.mxu0 0.0
        %2009 = vmatprep.subr.mxu0 0.0
        %2010 = vmatpush1.msra.mxu0 0.0
        %2011 = vmatprep.subr.mxu0 0.0
        %2012 = vmatpush1.msra.mxu0 0.0
        %2013 = vmatprep.mubr.f32.mxu0 0.0
        %v2014 = vand.u32 %v1848, 4294901760
        %2015 = vmatmul.mubr.f32.gmra.mrb[0].mxu0 %v2014
        %v2016 = vpop.f32.mrb[0].mxu0
        %v2017 = vadd.f32 %v1926, %v2016
        %v2018 = vpop.f32.mrb[0].mxu0
        %2019 = vdwg.mxu0
        %2020 = vmatprep.subr.mxu0 0.0
        %v2021 = vand.u32 %v340, 4294901760
        %v2022 = vsub.f32 %v340, %v2021
        %2023 = vmatpush1.msra.mxu0 %v2022
        %2024 = vmatprep.subr.mxu0 0.0
        %v2025 = vand.u32 %v341, 4294901760
        %v2026 = vsub.f32 %v341, %v2025
        %2027 = vmatpush1.msra.mxu0 %v2026
        %2028 = vmatprep.subr.mxu0 0.0
        %v2029 = vand.u32 %v342, 4294901760
        %v2030 = vsub.f32 %v342, %v2029
        %2031 = vmatpush1.msra.mxu0 %v2030
        %2032 = vmatprep.subr.mxu0 0.0
        %v2033 = vand.u32 %v343, 4294901760
        %v2034 = vsub.f32 %v343, %v2033
        %2035 = vmatpush1.msra.mxu0 %v2034
        %2036 = vmatprep.subr.mxu0 0.0
        %2037 = vmatpush1.msra.mxu0 0.0
        %2038 = vmatprep.subr.mxu0 0.0
        %2039 = vmatpush1.msra.mxu0 0.0
        %2040 = vmatprep.subr.mxu0 0.0
        %2041 = vmatpush1.msra.mxu0 0.0
        %2042 = vmatprep.subr.mxu0 0.0
        %2043 = vmatpush1.msra.mxu0 0.0
        %2044 = vmatprep.subr.mxu0 0.0
        %2045 = vmatpush1.msra.mxu0 0.0
        %2046 = vmatprep.subr.mxu0 0.0
        %2047 = vmatpush1.msra.mxu0 0.0
        %2048 = vmatprep.subr.mxu0 0.0
        %2049 = vmatpush1.msra.mxu0 0.0
        %2050 = vmatprep.subr.mxu0 0.0
        %2051 = vmatpush1.msra.mxu0 0.0
        %2052 = vmatprep.subr.mxu0 0.0
        %2053 = vmatpush1.msra.mxu0 0.0
        %2054 = vmatprep.subr.mxu0 0.0
        %2055 = vmatpush1.msra.mxu0 0.0
        %2056 = vmatprep.subr.mxu0 0.0
        %2057 = vmatpush1.msra.mxu0 0.0
        %2058 = vmatprep.subr.mxu0 0.0
        %2059 = vmatpush1.msra.mxu0 0.0
        %2060 = vmatprep.subr.mxu0 0.0
        %2061 = vmatpush1.msra.mxu0 0.0
        %2062 = vmatprep.subr.mxu0 0.0
        %2063 = vmatpush1.msra.mxu0 0.0
        %2064 = vmatprep.subr.mxu0 0.0
        %2065 = vmatpush1.msra.mxu0 0.0
        %2066 = vmatprep.subr.mxu0 0.0
        %2067 = vmatpush1.msra.mxu0 0.0
        %2068 = vmatprep.subr.mxu0 0.0
        %2069 = vmatpush1.msra.mxu0 0.0
        %2070 = vmatprep.subr.mxu0 0.0
        %2071 = vmatpush1.msra.mxu0 0.0
        %2072 = vmatprep.subr.mxu0 0.0
        %2073 = vmatpush1.msra.mxu0 0.0
        %2074 = vmatprep.subr.mxu0 0.0
        %2075 = vmatpush1.msra.mxu0 0.0
        %2076 = vmatprep.subr.mxu0 0.0
        %2077 = vmatpush1.msra.mxu0 0.0
        %2078 = vmatprep.subr.mxu0 0.0
        %2079 = vmatpush1.msra.mxu0 0.0
        %2080 = vmatprep.subr.mxu0 0.0
        %2081 = vmatpush1.msra.mxu0 0.0
        %2082 = vmatprep.subr.mxu0 0.0
        %2083 = vmatpush1.msra.mxu0 0.0
        %2084 = vmatprep.subr.mxu0 0.0
        %2085 = vmatpush1.msra.mxu0 0.0
        %2086 = vmatprep.subr.mxu0 0.0
        %2087 = vmatpush1.msra.mxu0 0.0
        %2088 = vmatprep.subr.mxu0 0.0
        %2089 = vmatpush1.msra.mxu0 0.0
        %2090 = vmatprep.subr.mxu0 0.0
        %2091 = vmatpush1.msra.mxu0 0.0
        %2092 = vmatprep.mubr.f32.mxu0 0.0
        %v2093 = vand.u32 %v1848, 4294901760
        %v2094 = vsub.f32 %v1848, %v2093
        %2095 = vmatmul.mubr.f32.gmra.mrb[0].mxu0 %v2094
        %v2096 = vpop.f32.mrb[0].mxu0
        %v2097 = vadd.f32 %v2017, %v2096
        %v2098 = vpop.f32.mrb[0].mxu0
        %2099 = vdwg.mxu0
        %2100 = vmatprep.subr.mxu0 0.0
        %v2101 = vand.u32 %v340, 4294901760
        %2102 = vmatpush1.msra.mxu0 %v2101
        %2103 = vmatprep.subr.mxu0 0.0
        %v2104 = vand.u32 %v341, 4294901760
        %2105 = vmatpush1.msra.mxu0 %v2104
        %2106 = vmatprep.subr.mxu0 0.0
        %v2107 = vand.u32 %v342, 4294901760
        %2108 = vmatpush1.msra.mxu0 %v2107
        %2109 = vmatprep.subr.mxu0 0.0
        %v2110 = vand.u32 %v343, 4294901760
        %2111 = vmatpush1.msra.mxu0 %v2110
        %2112 = vmatprep.subr.mxu0 0.0
        %2113 = vmatpush1.msra.mxu0 0.0
        %2114 = vmatprep.subr.mxu0 0.0
        %2115 = vmatpush1.msra.mxu0 0.0
        %2116 = vmatprep.subr.mxu0 0.0
        %2117 = vmatpush1.msra.mxu0 0.0
        %2118 = vmatprep.subr.mxu0 0.0
        %2119 = vmatpush1.msra.mxu0 0.0
        %2120 = vmatprep.subr.mxu0 0.0
        %2121 = vmatpush1.msra.mxu0 0.0
        %2122 = vmatprep.subr.mxu0 0.0
        %2123 = vmatpush1.msra.mxu0 0.0
        %2124 = vmatprep.subr.mxu0 0.0
        %2125 = vmatpush1.msra.mxu0 0.0
        %2126 = vmatprep.subr.mxu0 0.0
        %2127 = vmatpush1.msra.mxu0 0.0
        %2128 = vmatprep.subr.mxu0 0.0
        %2129 = vmatpush1.msra.mxu0 0.0
        %2130 = vmatprep.subr.mxu0 0.0
        %2131 = vmatpush1.msra.mxu0 0.0
        %2132 = vmatprep.subr.mxu0 0.0
        %2133 = vmatpush1.msra.mxu0 0.0
        %2134 = vmatprep.subr.mxu0 0.0
        %2135 = vmatpush1.msra.mxu0 0.0
        %2136 = vmatprep.subr.mxu0 0.0
        %2137 = vmatpush1.msra.mxu0 0.0
        %2138 = vmatprep.subr.mxu0 0.0
        %2139 = vmatpush1.msra.mxu0 0.0
        %2140 = vmatprep.subr.mxu0 0.0
        %2141 = vmatpush1.msra.mxu0 0.0
        %2142 = vmatprep.subr.mxu0 0.0
        %2143 = vmatpush1.msra.mxu0 0.0
        %2144 = vmatprep.subr.mxu0 0.0
        %2145 = vmatpush1.msra.mxu0 0.0
        %2146 = vmatprep.subr.mxu0 0.0
        %2147 = vmatpush1.msra.mxu0 0.0
        %2148 = vmatprep.subr.mxu0 0.0
        %2149 = vmatpush1.msra.mxu0 0.0
        %2150 = vmatprep.subr.mxu0 0.0
        %2151 = vmatpush1.msra.mxu0 0.0
        %2152 = vmatprep.subr.mxu0 0.0
        %2153 = vmatpush1.msra.mxu0 0.0
        %2154 = vmatprep.subr.mxu0 0.0
        %2155 = vmatpush1.msra.mxu0 0.0
        %2156 = vmatprep.subr.mxu0 0.0
        %2157 = vmatpush1.msra.mxu0 0.0
        %2158 = vmatprep.subr.mxu0 0.0
        %2159 = vmatpush1.msra.mxu0 0.0
        %2160 = vmatprep.subr.mxu0 0.0
        %2161 = vmatpush1.msra.mxu0 0.0
        %2162 = vmatprep.subr.mxu0 0.0
        %2163 = vmatpush1.msra.mxu0 0.0
        %2164 = vmatprep.subr.mxu0 0.0
        %2165 = vmatpush1.msra.mxu0 0.0
        %2166 = vmatprep.subr.mxu0 0.0
        %2167 = vmatpush1.msra.mxu0 0.0
        %2168 = vmatprep.mubr.f32.mxu0 0.0
        %v2169 = vand.u32 %v1848, 4294901760
        %v2170 = vsub.f32 %v1848, %v2169
        %v2171 = vand.u32 %v2170, 4294901760
        %2172 = vmatmul.mubr.f32.gmra.mrb[0].mxu0 %v2171
        %v2173 = vpop.f32.mrb[0].mxu0
        %v2174 = vadd.f32 %v2097, %v2173
        %v2175 = vpop.f32.mrb[0].mxu0
        %2176 = vdwg.mxu0
        %2177 = vmatprep.subr.mxu0 0.0
        %v2178 = vand.u32 %v340, 4294901760
        %v2179 = vsub.f32 %v340, %v2178
        %v2180 = vand.u32 %v2179, 4294901760
        %2181 = vmatpush1.msra.mxu0 %v2180
        %2182 = vmatprep.subr.mxu0 0.0
        %v2183 = vand.u32 %v341, 4294901760
        %v2184 = vsub.f32 %v341, %v2183
        %v2185 = vand.u32 %v2184, 4294901760
        %2186 = vmatpush1.msra.mxu0 %v2185
        %2187 = vmatprep.subr.mxu0 0.0
        %v2188 = vand.u32 %v342, 4294901760
        %v2189 = vsub.f32 %v342, %v2188
        %v2190 = vand.u32 %v2189, 4294901760
        %2191 = vmatpush1.msra.mxu0 %v2190
        %2192 = vmatprep.subr.mxu0 0.0
        %v2193 = vand.u32 %v343, 4294901760
        %v2194 = vsub.f32 %v343, %v2193
        %v2195 = vand.u32 %v2194, 4294901760
        %2196 = vmatpush1.msra.mxu0 %v2195
        %2197 = vmatprep.subr.mxu0 0.0
        %2198 = vmatpush1.msra.mxu0 0.0
        %2199 = vmatprep.subr.mxu0 0.0
        %2200 = vmatpush1.msra.mxu0 0.0
        %2201 = vmatprep.subr.mxu0 0.0
        %2202 = vmatpush1.msra.mxu0 0.0
        %2203 = vmatprep.subr.mxu0 0.0
        %2204 = vmatpush1.msra.mxu0 0.0
        %2205 = vmatprep.subr.mxu0 0.0
        %2206 = vmatpush1.msra.mxu0 0.0
        %2207 = vmatprep.subr.mxu0 0.0
        %2208 = vmatpush1.msra.mxu0 0.0
        %2209 = vmatprep.subr.mxu0 0.0
        %2210 = vmatpush1.msra.mxu0 0.0
        %2211 = vmatprep.subr.mxu0 0.0
        %2212 = vmatpush1.msra.mxu0 0.0
        %2213 = vmatprep.subr.mxu0 0.0
        %2214 = vmatpush1.msra.mxu0 0.0
        %2215 = vmatprep.subr.mxu0 0.0
        %2216 = vmatpush1.msra.mxu0 0.0
        %2217 = vmatprep.subr.mxu0 0.0
        %2218 = vmatpush1.msra.mxu0 0.0
        %2219 = vmatprep.subr.mxu0 0.0
        %2220 = vmatpush1.msra.mxu0 0.0
        %2221 = vmatprep.subr.mxu0 0.0
        %2222 = vmatpush1.msra.mxu0 0.0
        %2223 = vmatprep.subr.mxu0 0.0
        %2224 = vmatpush1.msra.mxu0 0.0
        %2225 = vmatprep.subr.mxu0 0.0
        %2226 = vmatpush1.msra.mxu0 0.0
        %2227 = vmatprep.subr.mxu0 0.0
        %2228 = vmatpush1.msra.mxu0 0.0
        %2229 = vmatprep.subr.mxu0 0.0
        %2230 = vmatpush1.msra.mxu0 0.0
        %2231 = vmatprep.subr.mxu0 0.0
        %2232 = vmatpush1.msra.mxu0 0.0
        %2233 = vmatprep.subr.mxu0 0.0
        %2234 = vmatpush1.msra.mxu0 0.0
        %2235 = vmatprep.subr.mxu0 0.0
        %2236 = vmatpush1.msra.mxu0 0.0
        %2237 = vmatprep.subr.mxu0 0.0
        %2238 = vmatpush1.msra.mxu0 0.0
        %2239 = vmatprep.subr.mxu0 0.0
        %2240 = vmatpush1.msra.mxu0 0.0
        %2241 = vmatprep.subr.mxu0 0.0
        %2242 = vmatpush1.msra.mxu0 0.0
        %2243 = vmatprep.subr.mxu0 0.0
        %2244 = vmatpush1.msra.mxu0 0.0
        %2245 = vmatprep.subr.mxu0 0.0
        %2246 = vmatpush1.msra.mxu0 0.0
        %2247 = vmatprep.subr.mxu0 0.0
        %2248 = vmatpush1.msra.mxu0 0.0
        %2249 = vmatprep.subr.mxu0 0.0
        %2250 = vmatpush1.msra.mxu0 0.0
        %2251 = vmatprep.subr.mxu0 0.0
        %2252 = vmatpush1.msra.mxu0 0.0
        %2253 = vmatprep.mubr.f32.mxu0 0.0
        %v2254 = vand.u32 %v1848, 4294901760
        %2255 = vmatmul.mubr.f32.gmra.mrb[0].mxu0 %v2254
        %v2256 = vpop.f32.mrb[0].mxu0
        %v2257 = vadd.f32 %v2174, %v2256
        %v2258 = vpop.f32.mrb[0].mxu0
        %2259 = vdwg.mxu0
        %2260 = vmatprep.subr.mxu0 0.0
        %v2261 = vand.u32 %v340, 4294901760
        %2262 = vmatpush1.msra.mxu0 %v2261
        %2263 = vmatprep.subr.mxu0 0.0
        %v2264 = vand.u32 %v341, 4294901760
        %2265 = vmatpush1.msra.mxu0 %v2264
        %2266 = vmatprep.subr.mxu0 0.0
        %v2267 = vand.u32 %v342, 4294901760
        %2268 = vmatpush1.msra.mxu0 %v2267
        %2269 = vmatprep.subr.mxu0 0.0
        %v2270 = vand.u32 %v343, 4294901760
        %2271 = vmatpush1.msra.mxu0 %v2270
        %2272 = vmatprep.subr.mxu0 0.0
        %2273 = vmatpush1.msra.mxu0 0.0
        %2274 = vmatprep.subr.mxu0 0.0
        %2275 = vmatpush1.msra.mxu0 0.0
        %2276 = vmatprep.subr.mxu0 0.0
        %2277 = vmatpush1.msra.mxu0 0.0
        %2278 = vmatprep.subr.mxu0 0.0
        %2279 = vmatpush1.msra.mxu0 0.0
        %2280 = vmatprep.subr.mxu0 0.0
        %2281 = vmatpush1.msra.mxu0 0.0
        %2282 = vmatprep.subr.mxu0 0.0
        %2283 = vmatpush1.msra.mxu0 0.0
        %2284 = vmatprep.subr.mxu0 0.0
        %2285 = vmatpush1.msra.mxu0 0.0
        %2286 = vmatprep.subr.mxu0 0.0
        %2287 = vmatpush1.msra.mxu0 0.0
        %2288 = vmatprep.subr.mxu0 0.0
        %2289 = vmatpush1.msra.mxu0 0.0
        %2290 = vmatprep.subr.mxu0 0.0
        %2291 = vmatpush1.msra.mxu0 0.0
        %2292 = vmatprep.subr.mxu0 0.0
        %2293 = vmatpush1.msra.mxu0 0.0
        %2294 = vmatprep.subr.mxu0 0.0
        %2295 = vmatpush1.msra.mxu0 0.0
        %2296 = vmatprep.subr.mxu0 0.0
        %2297 = vmatpush1.msra.mxu0 0.0
        %2298 = vmatprep.subr.mxu0 0.0
        %2299 = vmatpush1.msra.mxu0 0.0
        %2300 = vmatprep.subr.mxu0 0.0
        %2301 = vmatpush1.msra.mxu0 0.0
        %2302 = vmatprep.subr.mxu0 0.0
        %2303 = vmatpush1.msra.mxu0 0.0
        %2304 = vmatprep.subr.mxu0 0.0
        %2305 = vmatpush1.msra.mxu0 0.0
        %2306 = vmatprep.subr.mxu0 0.0
        %2307 = vmatpush1.msra.mxu0 0.0
        %2308 = vmatprep.subr.mxu0 0.0
        %2309 = vmatpush1.msra.mxu0 0.0
        %2310 = vmatprep.subr.mxu0 0.0
        %2311 = vmatpush1.msra.mxu0 0.0
        %2312 = vmatprep.subr.mxu0 0.0
        %2313 = vmatpush1.msra.mxu0 0.0
        %2314 = vmatprep.subr.mxu0 0.0
        %2315 = vmatpush1.msra.mxu0 0.0
        %2316 = vmatprep.subr.mxu0 0.0
        %2317 = vmatpush1.msra.mxu0 0.0
        %2318 = vmatprep.subr.mxu0 0.0
        %2319 = vmatpush1.msra.mxu0 0.0
        %2320 = vmatprep.subr.mxu0 0.0
        %2321 = vmatpush1.msra.mxu0 0.0
        %2322 = vmatprep.subr.mxu0 0.0
        %2323 = vmatpush1.msra.mxu0 0.0
        %2324 = vmatprep.subr.mxu0 0.0
        %2325 = vmatpush1.msra.mxu0 0.0
        %2326 = vmatprep.subr.mxu0 0.0
        %2327 = vmatpush1.msra.mxu0 0.0
        %2328 = vmatprep.mubr.f32.mxu0 0.0
        %v2329 = vand.u32 %v1848, 4294901760
        %2330 = vmatmul.mubr.f32.gmra.mrb[0].mxu0 %v2329
        %v2331 = vpop.f32.mrb[0].mxu0
        %v2332 = vadd.f32 %v2257, %v2331
        %v2333 = vpop.f32.mrb[0].mxu0
        %2334 = vdwg.mxu0
        %v2335 = vadd.f32 %v1844, %v2332
        %v2336 = vxor.u32 %v2335, 2147483648
        %v2337 = vmul.f32 %v2336, 1.442695
        %v2338 = vpow.pop %v2337
        %v2339 = vadd.f32 %v2338, 1.0
        %v2340 = vrcp.pop %v2339
        %v2341 = vmul.f32 1.0, %v2340
        %2343 = vrot.lane.b32.xlu0 %v2332, 96
        %v2344 = vpop.permute.xlu0 %2343
        %v2346 = vmul.f32 %v2341, %v2344
        %2348 = vrot.lane.b32.xlu0 %v2346, 32
        %v2349 = vpop.permute.xlu0 %2348
        %v2351 = vadd.f32 %v1844, %v2349
        %v2352 = vtanh.pop %v2351
        %v2353 = vsub.f32 1.0, %v2341
        %v2354 = vmul.f32 %v2353, %v1355
        %2356 = vrot.lane.b32.xlu0 %v2352, 64
        %v2357 = vpop.permute.xlu0 %2356
        %v2359 = vmul.f32 %v2341, %v2357
        %v2360 = vadd.f32 %v2354, %v2359
        %s2361 = scalar_lea.vmem %s326, 8 [#allocation11]
        %2362 = vst.msk [vmem:[%s2361] sm:$0xff] %vm353, %v2360
        %s2363 = scalar_lea.vmem %s278, 16 [#allocation3]
        %v2364 = vld [vmem:[%s2363] sm:$0xff]
        %v2366 = vsel %vm353, %v2364, 0
        %2368 = vmatprep.subr.mxu0 0.0
        %v2369 = vand.u32 %v336, 4294901760
        %2370 = vmatpush1.msra.mxu0 %v2369
        %2371 = vmatprep.subr.mxu0 0.0
        %v2372 = vand.u32 %v337, 4294901760
        %2373 = vmatpush1.msra.mxu0 %v2372
        %2374 = vmatprep.subr.mxu0 0.0
        %v2375 = vand.u32 %v338, 4294901760
        %2376 = vmatpush1.msra.mxu0 %v2375
        %2377 = vmatprep.subr.mxu0 0.0
        %v2378 = vand.u32 %v339, 4294901760
        %2379 = vmatpush1.msra.mxu0 %v2378
        %2380 = vmatprep.subr.mxu0 0.0
        %2381 = vmatpush1.msra.mxu0 0.0
        %2382 = vmatprep.subr.mxu0 0.0
        %2383 = vmatpush1.msra.mxu0 0.0
        %2384 = vmatprep.subr.mxu0 0.0
        %2385 = vmatpush1.msra.mxu0 0.0
        %2386 = vmatprep.subr.mxu0 0.0
        %2387 = vmatpush1.msra.mxu0 0.0
        %2388 = vmatprep.subr.mxu0 0.0
        %2389 = vmatpush1.msra.mxu0 0.0
        %2390 = vmatprep.subr.mxu0 0.0
        %2391 = vmatpush1.msra.mxu0 0.0
        %2392 = vmatprep.subr.mxu0 0.0
        %2393 = vmatpush1.msra.mxu0 0.0
        %2394 = vmatprep.subr.mxu0 0.0
        %2395 = vmatpush1.msra.mxu0 0.0
        %2396 = vmatprep.subr.mxu0 0.0
        %2397 = vmatpush1.msra.mxu0 0.0
        %2398 = vmatprep.subr.mxu0 0.0
        %2399 = vmatpush1.msra.mxu0 0.0
        %2400 = vmatprep.subr.mxu0 0.0
        %2401 = vmatpush1.msra.mxu0 0.0
        %2402 = vmatprep.subr.mxu0 0.0
        %2403 = vmatpush1.msra.mxu0 0.0
        %2404 = vmatprep.subr.mxu0 0.0
        %2405 = vmatpush1.msra.mxu0 0.0
        %2406 = vmatprep.subr.mxu0 0.0
        %2407 = vmatpush1.msra.mxu0 0.0
        %2408 = vmatprep.subr.mxu0 0.0
        %2409 = vmatpush1.msra.mxu0 0.0
        %2410 = vmatprep.subr.mxu0 0.0
        %2411 = vmatpush1.msra.mxu0 0.0
        %2412 = vmatprep.subr.mxu0 0.0
        %2413 = vmatpush1.msra.mxu0 0.0
        %2414 = vmatprep.subr.mxu0 0.0
        %2415 = vmatpush1.msra.mxu0 0.0
        %2416 = vmatprep.subr.mxu0 0.0
        %2417 = vmatpush1.msra.mxu0 0.0
        %2418 = vmatprep.subr.mxu0 0.0
        %2419 = vmatpush1.msra.mxu0 0.0
        %2420 = vmatprep.subr.mxu0 0.0
        %2421 = vmatpush1.msra.mxu0 0.0
        %2422 = vmatprep.subr.mxu0 0.0
        %2423 = vmatpush1.msra.mxu0 0.0
        %2424 = vmatprep.subr.mxu0 0.0
        %2425 = vmatpush1.msra.mxu0 0.0
        %2426 = vmatprep.subr.mxu0 0.0
        %2427 = vmatpush1.msra.mxu0 0.0
        %2428 = vmatprep.subr.mxu0 0.0
        %2429 = vmatpush1.msra.mxu0 0.0
        %2430 = vmatprep.subr.mxu0 0.0
        %2431 = vmatpush1.msra.mxu0 0.0
        %2432 = vmatprep.subr.mxu0 0.0
        %2433 = vmatpush1.msra.mxu0 0.0
        %2434 = vmatprep.subr.mxu0 0.0
        %2435 = vmatpush1.msra.mxu0 0.0
        %2436 = vmatprep.mubr.f32.mxu0 0.0
        %v2437 = vand.u32 %v2366, 4294901760
        %v2438 = vsub.f32 %v2366, %v2437
        %v2439 = vand.u32 %v2438, 4294901760
        %v2440 = vsub.f32 %v2438, %v2439
        %v2441 = vand.u32 %v2440, 4294901760
        %2442 = vmatmul.mubr.f32.gmra.mrb[0].mxu0 %v2441
        %v2443 = vpop.f32.mrb[0].mxu0
        %v2444 = vadd.f32 %v349, %v2443
        %v2445 = vpop.f32.mrb[0].mxu0
        %2446 = vdwg.mxu0
        %2447 = vmatprep.subr.mxu0 0.0
        %v2448 = vand.u32 %v336, 4294901760
        %v2449 = vsub.f32 %v336, %v2448
        %v2450 = vand.u32 %v2449, 4294901760
        %v2451 = vsub.f32 %v2449, %v2450
        %v2452 = vand.u32 %v2451, 4294901760
        %2453 = vmatpush1.msra.mxu0 %v2452
        %2454 = vmatprep.subr.mxu0 0.0
        %v2455 = vand.u32 %v337, 4294901760
        %v2456 = vsub.f32 %v337, %v2455
        %v2457 = vand.u32 %v2456, 4294901760
        %v2458 = vsub.f32 %v2456, %v2457
        %v2459 = vand.u32 %v2458, 4294901760
        %2460 = vmatpush1.msra.mxu0 %v2459
        %2461 = vmatprep.subr.mxu0 0.0
        %v2462 = vand.u32 %v338, 4294901760
        %v2463 = vsub.f32 %v338, %v2462
        %v2464 = vand.u32 %v2463, 4294901760
        %v2465 = vsub.f32 %v2463, %v2464
        %v2466 = vand.u32 %v2465, 4294901760
        %2467 = vmatpush1.msra.mxu0 %v2466
        %2468 = vmatprep.subr.mxu0 0.0
        %v2469 = vand.u32 %v339, 4294901760
        %v2470 = vsub.f32 %v339, %v2469
        %v2471 = vand.u32 %v2470, 4294901760
        %v2472 = vsub.f32 %v2470, %v2471
        %v2473 = vand.u32 %v2472, 4294901760
        %2474 = vmatpush1.msra.mxu0 %v2473
        %2475 = vmatprep.subr.mxu0 0.0
        %2476 = vmatpush1.msra.mxu0 0.0
        %2477 = vmatprep.subr.mxu0 0.0
        %2478 = vmatpush1.msra.mxu0 0.0
        %2479 = vmatprep.subr.mxu0 0.0
        %2480 = vmatpush1.msra.mxu0 0.0
        %2481 = vmatprep.subr.mxu0 0.0
        %2482 = vmatpush1.msra.mxu0 0.0
        %2483 = vmatprep.subr.mxu0 0.0
        %2484 = vmatpush1.msra.mxu0 0.0
        %2485 = vmatprep.subr.mxu0 0.0
        %2486 = vmatpush1.msra.mxu0 0.0
        %2487 = vmatprep.subr.mxu0 0.0
        %2488 = vmatpush1.msra.mxu0 0.0
        %2489 = vmatprep.subr.mxu0 0.0
        %2490 = vmatpush1.msra.mxu0 0.0
        %2491 = vmatprep.subr.mxu0 0.0
        %2492 = vmatpush1.msra.mxu0 0.0
        %2493 = vmatprep.subr.mxu0 0.0
        %2494 = vmatpush1.msra.mxu0 0.0
        %2495 = vmatprep.subr.mxu0 0.0
        %2496 = vmatpush1.msra.mxu0 0.0
        %2497 = vmatprep.subr.mxu0 0.0
        %2498 = vmatpush1.msra.mxu0 0.0
        %2499 = vmatprep.subr.mxu0 0.0
        %2500 = vmatpush1.msra.mxu0 0.0
        %2501 = vmatprep.subr.mxu0 0.0
        %2502 = vmatpush1.msra.mxu0 0.0
        %2503 = vmatprep.subr.mxu0 0.0
        %2504 = vmatpush1.msra.mxu0 0.0
        %2505 = vmatprep.subr.mxu0 0.0
        %2506 = vmatpush1.msra.mxu0 0.0
        %2507 = vmatprep.subr.mxu0 0.0
        %2508 = vmatpush1.msra.mxu0 0.0
        %2509 = vmatprep.subr.mxu0 0.0
        %2510 = vmatpush1.msra.mxu0 0.0
        %2511 = vmatprep.subr.mxu0 0.0
        %2512 = vmatpush1.msra.mxu0 0.0
        %2513 = vmatprep.subr.mxu0 0.0
        %2514 = vmatpush1.msra.mxu0 0.0
        %2515 = vmatprep.subr.mxu0 0.0
        %2516 = vmatpush1.msra.mxu0 0.0
        %2517 = vmatprep.subr.mxu0 0.0
        %2518 = vmatpush1.msra.mxu0 0.0
        %2519 = vmatprep.subr.mxu0 0.0
        %2520 = vmatpush1.msra.mxu0 0.0
        %2521 = vmatprep.subr.mxu0 0.0
        %2522 = vmatpush1.msra.mxu0 0.0
        %2523 = vmatprep.subr.mxu0 0.0
        %2524 = vmatpush1.msra.mxu0 0.0
        %2525 = vmatprep.subr.mxu0 0.0
        %2526 = vmatpush1.msra.mxu0 0.0
        %2527 = vmatprep.subr.mxu0 0.0
        %2528 = vmatpush1.msra.mxu0 0.0
        %2529 = vmatprep.subr.mxu0 0.0
        %2530 = vmatpush1.msra.mxu0 0.0
        %2531 = vmatprep.mubr.f32.mxu0 0.0
        %v2532 = vand.u32 %v2366, 4294901760
        %2533 = vmatmul.mubr.f32.gmra.mrb[0].mxu0 %v2532
        %v2534 = vpop.f32.mrb[0].mxu0
        %v2535 = vadd.f32 %v2444, %v2534
        %v2536 = vpop.f32.mrb[0].mxu0
        %2537 = vdwg.mxu0
        %2538 = vmatprep.subr.mxu0 0.0
        %v2539 = vand.u32 %v336, 4294901760
        %v2540 = vsub.f32 %v336, %v2539
        %2541 = vmatpush1.msra.mxu0 %v2540
        %2542 = vmatprep.subr.mxu0 0.0
        %v2543 = vand.u32 %v337, 4294901760
        %v2544 = vsub.f32 %v337, %v2543
        %2545 = vmatpush1.msra.mxu0 %v2544
        %2546 = vmatprep.subr.mxu0 0.0
        %v2547 = vand.u32 %v338, 4294901760
        %v2548 = vsub.f32 %v338, %v2547
        %2549 = vmatpush1.msra.mxu0 %v2548
        %2550 = vmatprep.subr.mxu0 0.0
        %v2551 = vand.u32 %v339, 4294901760
        %v2552 = vsub.f32 %v339, %v2551
        %2553 = vmatpush1.msra.mxu0 %v2552
        %2554 = vmatprep.subr.mxu0 0.0
        %2555 = vmatpush1.msra.mxu0 0.0
        %2556 = vmatprep.subr.mxu0 0.0
        %2557 = vmatpush1.msra.mxu0 0.0
        %2558 = vmatprep.subr.mxu0 0.0
        %2559 = vmatpush1.msra.mxu0 0.0
        %2560 = vmatprep.subr.mxu0 0.0
        %2561 = vmatpush1.msra.mxu0 0.0
        %2562 = vmatprep.subr.mxu0 0.0
        %2563 = vmatpush1.msra.mxu0 0.0
        %2564 = vmatprep.subr.mxu0 0.0
        %2565 = vmatpush1.msra.mxu0 0.0
        %2566 = vmatprep.subr.mxu0 0.0
        %2567 = vmatpush1.msra.mxu0 0.0
        %2568 = vmatprep.subr.mxu0 0.0
        %2569 = vmatpush1.msra.mxu0 0.0
        %2570 = vmatprep.subr.mxu0 0.0
        %2571 = vmatpush1.msra.mxu0 0.0
        %2572 = vmatprep.subr.mxu0 0.0
        %2573 = vmatpush1.msra.mxu0 0.0
        %2574 = vmatprep.subr.mxu0 0.0
        %2575 = vmatpush1.msra.mxu0 0.0
        %2576 = vmatprep.subr.mxu0 0.0
        %2577 = vmatpush1.msra.mxu0 0.0
        %2578 = vmatprep.subr.mxu0 0.0
        %2579 = vmatpush1.msra.mxu0 0.0
        %2580 = vmatprep.subr.mxu0 0.0
        %2581 = vmatpush1.msra.mxu0 0.0
        %2582 = vmatprep.subr.mxu0 0.0
        %2583 = vmatpush1.msra.mxu0 0.0
        %2584 = vmatprep.subr.mxu0 0.0
        %2585 = vmatpush1.msra.mxu0 0.0
        %2586 = vmatprep.subr.mxu0 0.0
        %2587 = vmatpush1.msra.mxu0 0.0
        %2588 = vmatprep.subr.mxu0 0.0
        %2589 = vmatpush1.msra.mxu0 0.0
        %2590 = vmatprep.subr.mxu0 0.0
        %2591 = vmatpush1.msra.mxu0 0.0
        %2592 = vmatprep.subr.mxu0 0.0
        %2593 = vmatpush1.msra.mxu0 0.0
        %2594 = vmatprep.subr.mxu0 0.0
        %2595 = vmatpush1.msra.mxu0 0.0
        %2596 = vmatprep.subr.mxu0 0.0
        %2597 = vmatpush1.msra.mxu0 0.0
        %2598 = vmatprep.subr.mxu0 0.0
        %2599 = vmatpush1.msra.mxu0 0.0
        %2600 = vmatprep.subr.mxu0 0.0
        %2601 = vmatpush1.msra.mxu0 0.0
        %2602 = vmatprep.subr.mxu0 0.0
        %2603 = vmatpush1.msra.mxu0 0.0
        %2604 = vmatprep.subr.mxu0 0.0
        %2605 = vmatpush1.msra.mxu0 0.0
        %2606 = vmatprep.subr.mxu0 0.0
        %2607 = vmatpush1.msra.mxu0 0.0
        %2608 = vmatprep.subr.mxu0 0.0
        %2609 = vmatpush1.msra.mxu0 0.0
        %2610 = vmatprep.mubr.f32.mxu0 0.0
        %v2611 = vand.u32 %v2366, 4294901760
        %v2612 = vsub.f32 %v2366, %v2611
        %2613 = vmatmul.mubr.f32.gmra.mrb[0].mxu0 %v2612
        %v2614 = vpop.f32.mrb[0].mxu0
        %v2615 = vadd.f32 %v2535, %v2614
        %v2616 = vpop.f32.mrb[0].mxu0
        %2617 = vdwg.mxu0
        %2618 = vmatprep.subr.mxu0 0.0
        %v2619 = vand.u32 %v336, 4294901760
        %2620 = vmatpush1.msra.mxu0 %v2619
        %2621 = vmatprep.subr.mxu0 0.0
        %v2622 = vand.u32 %v337, 4294901760
        %2623 = vmatpush1.msra.mxu0 %v2622
        %2624 = vmatprep.subr.mxu0 0.0
        %v2625 = vand.u32 %v338, 4294901760
        %2626 = vmatpush1.msra.mxu0 %v2625
        %2627 = vmatprep.subr.mxu0 0.0
        %v2628 = vand.u32 %v339, 4294901760
        %2629 = vmatpush1.msra.mxu0 %v2628
        %2630 = vmatprep.subr.mxu0 0.0
        %2631 = vmatpush1.msra.mxu0 0.0
        %2632 = vmatprep.subr.mxu0 0.0
        %2633 = vmatpush1.msra.mxu0 0.0
        %2634 = vmatprep.subr.mxu0 0.0
        %2635 = vmatpush1.msra.mxu0 0.0
        %2636 = vmatprep.subr.mxu0 0.0
        %2637 = vmatpush1.msra.mxu0 0.0
        %2638 = vmatprep.subr.mxu0 0.0
        %2639 = vmatpush1.msra.mxu0 0.0
        %2640 = vmatprep.subr.mxu0 0.0
        %2641 = vmatpush1.msra.mxu0 0.0
        %2642 = vmatprep.subr.mxu0 0.0
        %2643 = vmatpush1.msra.mxu0 0.0
        %2644 = vmatprep.subr.mxu0 0.0
        %2645 = vmatpush1.msra.mxu0 0.0
        %2646 = vmatprep.subr.mxu0 0.0
        %2647 = vmatpush1.msra.mxu0 0.0
        %2648 = vmatprep.subr.mxu0 0.0
        %2649 = vmatpush1.msra.mxu0 0.0
        %2650 = vmatprep.subr.mxu0 0.0
        %2651 = vmatpush1.msra.mxu0 0.0
        %2652 = vmatprep.subr.mxu0 0.0
        %2653 = vmatpush1.msra.mxu0 0.0
        %2654 = vmatprep.subr.mxu0 0.0
        %2655 = vmatpush1.msra.mxu0 0.0
        %2656 = vmatprep.subr.mxu0 0.0
        %2657 = vmatpush1.msra.mxu0 0.0
        %2658 = vmatprep.subr.mxu0 0.0
        %2659 = vmatpush1.msra.mxu0 0.0
        %2660 = vmatprep.subr.mxu0 0.0
        %2661 = vmatpush1.msra.mxu0 0.0
        %2662 = vmatprep.subr.mxu0 0.0
        %2663 = vmatpush1.msra.mxu0 0.0
        %2664 = vmatprep.subr.mxu0 0.0
        %2665 = vmatpush1.msra.mxu0 0.0
        %2666 = vmatprep.subr.mxu0 0.0
        %2667 = vmatpush1.msra.mxu0 0.0
        %2668 = vmatprep.subr.mxu0 0.0
        %2669 = vmatpush1.msra.mxu0 0.0
        %2670 = vmatprep.subr.mxu0 0.0
        %2671 = vmatpush1.msra.mxu0 0.0
        %2672 = vmatprep.subr.mxu0 0.0
        %2673 = vmatpush1.msra.mxu0 0.0
        %2674 = vmatprep.subr.mxu0 0.0
        %2675 = vmatpush1.msra.mxu0 0.0
        %2676 = vmatprep.subr.mxu0 0.0
        %2677 = vmatpush1.msra.mxu0 0.0
        %2678 = vmatprep.subr.mxu0 0.0
        %2679 = vmatpush1.msra.mxu0 0.0
        %2680 = vmatprep.subr.mxu0 0.0
        %2681 = vmatpush1.msra.mxu0 0.0
        %2682 = vmatprep.subr.mxu0 0.0
        %2683 = vmatpush1.msra.mxu0 0.0
        %2684 = vmatprep.subr.mxu0 0.0
        %2685 = vmatpush1.msra.mxu0 0.0
        %2686 = vmatprep.mubr.f32.mxu0 0.0
        %v2687 = vand.u32 %v2366, 4294901760
        %v2688 = vsub.f32 %v2366, %v2687
        %v2689 = vand.u32 %v2688, 4294901760
        %2690 = vmatmul.mubr.f32.gmra.mrb[0].mxu0 %v2689
        %v2691 = vpop.f32.mrb[0].mxu0
        %v2692 = vadd.f32 %v2615, %v2691
        %v2693 = vpop.f32.mrb[0].mxu0
        %2694 = vdwg.mxu0
        %2695 = vmatprep.subr.mxu0 0.0
        %v2696 = vand.u32 %v336, 4294901760
        %v2697 = vsub.f32 %v336, %v2696
        %v2698 = vand.u32 %v2697, 4294901760
        %2699 = vmatpush1.msra.mxu0 %v2698
        %2700 = vmatprep.subr.mxu0 0.0
        %v2701 = vand.u32 %v337, 4294901760
        %v2702 = vsub.f32 %v337, %v2701
        %v2703 = vand.u32 %v2702, 4294901760
        %2704 = vmatpush1.msra.mxu0 %v2703
        %2705 = vmatprep.subr.mxu0 0.0
        %v2706 = vand.u32 %v338, 4294901760
        %v2707 = vsub.f32 %v338, %v2706
        %v2708 = vand.u32 %v2707, 4294901760
        %2709 = vmatpush1.msra.mxu0 %v2708
        %2710 = vmatprep.subr.mxu0 0.0
        %v2711 = vand.u32 %v339, 4294901760
        %v2712 = vsub.f32 %v339, %v2711
        %v2713 = vand.u32 %v2712, 4294901760
        %2714 = vmatpush1.msra.mxu0 %v2713
        %2715 = vmatprep.subr.mxu0 0.0
        %2716 = vmatpush1.msra.mxu0 0.0
        %2717 = vmatprep.subr.mxu0 0.0
        %2718 = vmatpush1.msra.mxu0 0.0
        %2719 = vmatprep.subr.mxu0 0.0
        %2720 = vmatpush1.msra.mxu0 0.0
        %2721 = vmatprep.subr.mxu0 0.0
        %2722 = vmatpush1.msra.mxu0 0.0
        %2723 = vmatprep.subr.mxu0 0.0
        %2724 = vmatpush1.msra.mxu0 0.0
        %2725 = vmatprep.subr.mxu0 0.0
        %2726 = vmatpush1.msra.mxu0 0.0
        %2727 = vmatprep.subr.mxu0 0.0
        %2728 = vmatpush1.msra.mxu0 0.0
        %2729 = vmatprep.subr.mxu0 0.0
        %2730 = vmatpush1.msra.mxu0 0.0
        %2731 = vmatprep.subr.mxu0 0.0
        %2732 = vmatpush1.msra.mxu0 0.0
        %2733 = vmatprep.subr.mxu0 0.0
        %2734 = vmatpush1.msra.mxu0 0.0
        %2735 = vmatprep.subr.mxu0 0.0
        %2736 = vmatpush1.msra.mxu0 0.0
        %2737 = vmatprep.subr.mxu0 0.0
        %2738 = vmatpush1.msra.mxu0 0.0
        %2739 = vmatprep.subr.mxu0 0.0
        %2740 = vmatpush1.msra.mxu0 0.0
        %2741 = vmatprep.subr.mxu0 0.0
        %2742 = vmatpush1.msra.mxu0 0.0
        %2743 = vmatprep.subr.mxu0 0.0
        %2744 = vmatpush1.msra.mxu0 0.0
        %2745 = vmatprep.subr.mxu0 0.0
        %2746 = vmatpush1.msra.mxu0 0.0
        %2747 = vmatprep.subr.mxu0 0.0
        %2748 = vmatpush1.msra.mxu0 0.0
        %2749 = vmatprep.subr.mxu0 0.0
        %2750 = vmatpush1.msra.mxu0 0.0
        %2751 = vmatprep.subr.mxu0 0.0
        %2752 = vmatpush1.msra.mxu0 0.0
        %2753 = vmatprep.subr.mxu0 0.0
        %2754 = vmatpush1.msra.mxu0 0.0
        %2755 = vmatprep.subr.mxu0 0.0
        %2756 = vmatpush1.msra.mxu0 0.0
        %2757 = vmatprep.subr.mxu0 0.0
        %2758 = vmatpush1.msra.mxu0 0.0
        %2759 = vmatprep.subr.mxu0 0.0
        %2760 = vmatpush1.msra.mxu0 0.0
        %2761 = vmatprep.subr.mxu0 0.0
        %2762 = vmatpush1.msra.mxu0 0.0
        %2763 = vmatprep.subr.mxu0 0.0
        %2764 = vmatpush1.msra.mxu0 0.0
        %2765 = vmatprep.subr.mxu0 0.0
        %2766 = vmatpush1.msra.mxu0 0.0
        %2767 = vmatprep.subr.mxu0 0.0
        %2768 = vmatpush1.msra.mxu0 0.0
        %2769 = vmatprep.subr.mxu0 0.0
        %2770 = vmatpush1.msra.mxu0 0.0
        %2771 = vmatprep.mubr.f32.mxu0 0.0
        %v2772 = vand.u32 %v2366, 4294901760
        %2773 = vmatmul.mubr.f32.gmra.mrb[0].mxu0 %v2772
        %v2774 = vpop.f32.mrb[0].mxu0
        %v2775 = vadd.f32 %v2692, %v2774
        %v2776 = vpop.f32.mrb[0].mxu0
        %2777 = vdwg.mxu0
        %2778 = vmatprep.subr.mxu0 0.0
        %v2779 = vand.u32 %v336, 4294901760
        %2780 = vmatpush1.msra.mxu0 %v2779
        %2781 = vmatprep.subr.mxu0 0.0
        %v2782 = vand.u32 %v337, 4294901760
        %2783 = vmatpush1.msra.mxu0 %v2782
        %2784 = vmatprep.subr.mxu0 0.0
        %v2785 = vand.u32 %v338, 4294901760
        %2786 = vmatpush1.msra.mxu0 %v2785
        %2787 = vmatprep.subr.mxu0 0.0
        %v2788 = vand.u32 %v339, 4294901760
        %2789 = vmatpush1.msra.mxu0 %v2788
        %2790 = vmatprep.subr.mxu0 0.0
        %2791 = vmatpush1.msra.mxu0 0.0
        %2792 = vmatprep.subr.mxu0 0.0
        %2793 = vmatpush1.msra.mxu0 0.0
        %2794 = vmatprep.subr.mxu0 0.0
        %2795 = vmatpush1.msra.mxu0 0.0
        %2796 = vmatprep.subr.mxu0 0.0
        %2797 = vmatpush1.msra.mxu0 0.0
        %2798 = vmatprep.subr.mxu0 0.0
        %2799 = vmatpush1.msra.mxu0 0.0
        %2800 = vmatprep.subr.mxu0 0.0
        %2801 = vmatpush1.msra.mxu0 0.0
        %2802 = vmatprep.subr.mxu0 0.0
        %2803 = vmatpush1.msra.mxu0 0.0
        %2804 = vmatprep.subr.mxu0 0.0
        %2805 = vmatpush1.msra.mxu0 0.0
        %2806 = vmatprep.subr.mxu0 0.0
        %2807 = vmatpush1.msra.mxu0 0.0
        %2808 = vmatprep.subr.mxu0 0.0
        %2809 = vmatpush1.msra.mxu0 0.0
        %2810 = vmatprep.subr.mxu0 0.0
        %2811 = vmatpush1.msra.mxu0 0.0
        %2812 = vmatprep.subr.mxu0 0.0
        %2813 = vmatpush1.msra.mxu0 0.0
        %2814 = vmatprep.subr.mxu0 0.0
        %2815 = vmatpush1.msra.mxu0 0.0
        %2816 = vmatprep.subr.mxu0 0.0
        %2817 = vmatpush1.msra.mxu0 0.0
        %2818 = vmatprep.subr.mxu0 0.0
        %2819 = vmatpush1.msra.mxu0 0.0
        %2820 = vmatprep.subr.mxu0 0.0
        %2821 = vmatpush1.msra.mxu0 0.0
        %2822 = vmatprep.subr.mxu0 0.0
        %2823 = vmatpush1.msra.mxu0 0.0
        %2824 = vmatprep.subr.mxu0 0.0
        %2825 = vmatpush1.msra.mxu0 0.0
        %2826 = vmatprep.subr.mxu0 0.0
        %2827 = vmatpush1.msra.mxu0 0.0
        %2828 = vmatprep.subr.mxu0 0.0
        %2829 = vmatpush1.msra.mxu0 0.0
        %2830 = vmatprep.subr.mxu0 0.0
        %2831 = vmatpush1.msra.mxu0 0.0
        %2832 = vmatprep.subr.mxu0 0.0
        %2833 = vmatpush1.msra.mxu0 0.0
        %2834 = vmatprep.subr.mxu0 0.0
        %2835 = vmatpush1.msra.mxu0 0.0
        %2836 = vmatprep.subr.mxu0 0.0
        %2837 = vmatpush1.msra.mxu0 0.0
        %2838 = vmatprep.subr.mxu0 0.0
        %2839 = vmatpush1.msra.mxu0 0.0
        %2840 = vmatprep.subr.mxu0 0.0
        %2841 = vmatpush1.msra.mxu0 0.0
        %2842 = vmatprep.subr.mxu0 0.0
        %2843 = vmatpush1.msra.mxu0 0.0
        %2844 = vmatprep.subr.mxu0 0.0
        %2845 = vmatpush1.msra.mxu0 0.0
        %2846 = vmatprep.mubr.f32.mxu0 0.0
        %v2847 = vand.u32 %v2366, 4294901760
        %2848 = vmatmul.mubr.f32.gmra.mrb[0].mxu0 %v2847
        %v2849 = vpop.f32.mrb[0].mxu0
        %v2850 = vadd.f32 %v2775, %v2849
        %v2851 = vpop.f32.mrb[0].mxu0
        %2852 = vdwg.mxu0
        %v2854 = vsel %vm353, %v2360, 0
        %2856 = vmatprep.subr.mxu0 0.0
        %v2857 = vand.u32 %v340, 4294901760
        %2858 = vmatpush1.msra.mxu0 %v2857
        %2859 = vmatprep.subr.mxu0 0.0
        %v2860 = vand.u32 %v341, 4294901760
        %2861 = vmatpush1.msra.mxu0 %v2860
        %2862 = vmatprep.subr.mxu0 0.0
        %v2863 = vand.u32 %v342, 4294901760
        %2864 = vmatpush1.msra.mxu0 %v2863
        %2865 = vmatprep.subr.mxu0 0.0
        %v2866 = vand.u32 %v343, 4294901760
        %2867 = vmatpush1.msra.mxu0 %v2866
        %2868 = vmatprep.subr.mxu0 0.0
        %2869 = vmatpush1.msra.mxu0 0.0
        %2870 = vmatprep.subr.mxu0 0.0
        %2871 = vmatpush1.msra.mxu0 0.0
        %2872 = vmatprep.subr.mxu0 0.0
        %2873 = vmatpush1.msra.mxu0 0.0
        %2874 = vmatprep.subr.mxu0 0.0
        %2875 = vmatpush1.msra.mxu0 0.0
        %2876 = vmatprep.subr.mxu0 0.0
        %2877 = vmatpush1.msra.mxu0 0.0
        %2878 = vmatprep.subr.mxu0 0.0
        %2879 = vmatpush1.msra.mxu0 0.0
        %2880 = vmatprep.subr.mxu0 0.0
        %2881 = vmatpush1.msra.mxu0 0.0
        %2882 = vmatprep.subr.mxu0 0.0
        %2883 = vmatpush1.msra.mxu0 0.0
        %2884 = vmatprep.subr.mxu0 0.0
        %2885 = vmatpush1.msra.mxu0 0.0
        %2886 = vmatprep.subr.mxu0 0.0
        %2887 = vmatpush1.msra.mxu0 0.0
        %2888 = vmatprep.subr.mxu0 0.0
        %2889 = vmatpush1.msra.mxu0 0.0
        %2890 = vmatprep.subr.mxu0 0.0
        %2891 = vmatpush1.msra.mxu0 0.0
        %2892 = vmatprep.subr.mxu0 0.0
        %2893 = vmatpush1.msra.mxu0 0.0
        %2894 = vmatprep.subr.mxu0 0.0
        %2895 = vmatpush1.msra.mxu0 0.0
        %2896 = vmatprep.subr.mxu0 0.0
        %2897 = vmatpush1.msra.mxu0 0.0
        %2898 = vmatprep.subr.mxu0 0.0
        %2899 = vmatpush1.msra.mxu0 0.0
        %2900 = vmatprep.subr.mxu0 0.0
        %2901 = vmatpush1.msra.mxu0 0.0
        %2902 = vmatprep.subr.mxu0 0.0
        %2903 = vmatpush1.msra.mxu0 0.0
        %2904 = vmatprep.subr.mxu0 0.0
        %2905 = vmatpush1.msra.mxu0 0.0
        %2906 = vmatprep.subr.mxu0 0.0
        %2907 = vmatpush1.msra.mxu0 0.0
        %2908 = vmatprep.subr.mxu0 0.0
        %2909 = vmatpush1.msra.mxu0 0.0
        %2910 = vmatprep.subr.mxu0 0.0
        %2911 = vmatpush1.msra.mxu0 0.0
        %2912 = vmatprep.subr.mxu0 0.0
        %2913 = vmatpush1.msra.mxu0 0.0
        %2914 = vmatprep.subr.mxu0 0.0
        %2915 = vmatpush1.msra.mxu0 0.0
        %2916 = vmatprep.subr.mxu0 0.0
        %2917 = vmatpush1.msra.mxu0 0.0
        %2918 = vmatprep.subr.mxu0 0.0
        %2919 = vmatpush1.msra.mxu0 0.0
        %2920 = vmatprep.subr.mxu0 0.0
        %2921 = vmatpush1.msra.mxu0 0.0
        %2922 = vmatprep.subr.mxu0 0.0
        %2923 = vmatpush1.msra.mxu0 0.0
        %2924 = vmatprep.mubr.f32.mxu0 0.0
        %v2925 = vand.u32 %v2854, 4294901760
        %v2926 = vsub.f32 %v2854, %v2925
        %v2927 = vand.u32 %v2926, 4294901760
        %v2928 = vsub.f32 %v2926, %v2927
        %v2929 = vand.u32 %v2928, 4294901760
        %2930 = vmatmul.mubr.f32.gmra.mrb[0].mxu0 %v2929
        %v2931 = vpop.f32.mrb[0].mxu0
        %v2932 = vadd.f32 0.0, %v2931
        %v2933 = vpop.f32.mrb[0].mxu0
        %2934 = vdwg.mxu0
        %2935 = vmatprep.subr.mxu0 0.0
        %v2936 = vand.u32 %v340, 4294901760
        %v2937 = vsub.f32 %v340, %v2936
        %v2938 = vand.u32 %v2937, 4294901760
        %v2939 = vsub.f32 %v2937, %v2938
        %v2940 = vand.u32 %v2939, 4294901760
        %2941 = vmatpush1.msra.mxu0 %v2940
        %2942 = vmatprep.subr.mxu0 0.0
        %v2943 = vand.u32 %v341, 4294901760
        %v2944 = vsub.f32 %v341, %v2943
        %v2945 = vand.u32 %v2944, 4294901760
        %v2946 = vsub.f32 %v2944, %v2945
        %v2947 = vand.u32 %v2946, 4294901760
        %2948 = vmatpush1.msra.mxu0 %v2947
        %2949 = vmatprep.subr.mxu0 0.0
        %v2950 = vand.u32 %v342, 4294901760
        %v2951 = vsub.f32 %v342, %v2950
        %v2952 = vand.u32 %v2951, 4294901760
        %v2953 = vsub.f32 %v2951, %v2952
        %v2954 = vand.u32 %v2953, 4294901760
        %2955 = vmatpush1.msra.mxu0 %v2954
        %2956 = vmatprep.subr.mxu0 0.0
        %v2957 = vand.u32 %v343, 4294901760
        %v2958 = vsub.f32 %v343, %v2957
        %v2959 = vand.u32 %v2958, 4294901760
        %v2960 = vsub.f32 %v2958, %v2959
        %v2961 = vand.u32 %v2960, 4294901760
        %2962 = vmatpush1.msra.mxu0 %v2961
        %2963 = vmatprep.subr.mxu0 0.0
        %2964 = vmatpush1.msra.mxu0 0.0
        %2965 = vmatprep.subr.mxu0 0.0
        %2966 = vmatpush1.msra.mxu0 0.0
        %2967 = vmatprep.subr.mxu0 0.0
        %2968 = vmatpush1.msra.mxu0 0.0
        %2969 = vmatprep.subr.mxu0 0.0
        %2970 = vmatpush1.msra.mxu0 0.0
        %2971 = vmatprep.subr.mxu0 0.0
        %2972 = vmatpush1.msra.mxu0 0.0
        %2973 = vmatprep.subr.mxu0 0.0
        %2974 = vmatpush1.msra.mxu0 0.0
        %2975 = vmatprep.subr.mxu0 0.0
        %2976 = vmatpush1.msra.mxu0 0.0
        %2977 = vmatprep.subr.mxu0 0.0
        %2978 = vmatpush1.msra.mxu0 0.0
        %2979 = vmatprep.subr.mxu0 0.0
        %2980 = vmatpush1.msra.mxu0 0.0
        %2981 = vmatprep.subr.mxu0 0.0
        %2982 = vmatpush1.msra.mxu0 0.0
        %2983 = vmatprep.subr.mxu0 0.0
        %2984 = vmatpush1.msra.mxu0 0.0
        %2985 = vmatprep.subr.mxu0 0.0
        %2986 = vmatpush1.msra.mxu0 0.0
        %2987 = vmatprep.subr.mxu0 0.0
        %2988 = vmatpush1.msra.mxu0 0.0
        %2989 = vmatprep.subr.mxu0 0.0
        %2990 = vmatpush1.msra.mxu0 0.0
        %2991 = vmatprep.subr.mxu0 0.0
        %2992 = vmatpush1.msra.mxu0 0.0
        %2993 = vmatprep.subr.mxu0 0.0
        %2994 = vmatpush1.msra.mxu0 0.0
        %2995 = vmatprep.subr.mxu0 0.0
        %2996 = vmatpush1.msra.mxu0 0.0
        %2997 = vmatprep.subr.mxu0 0.0
        %2998 = vmatpush1.msra.mxu0 0.0
        %2999 = vmatprep.subr.mxu0 0.0
        %3000 = vmatpush1.msra.mxu0 0.0
        %3001 = vmatprep.subr.mxu0 0.0
        %3002 = vmatpush1.msra.mxu0 0.0
        %3003 = vmatprep.subr.mxu0 0.0
        %3004 = vmatpush1.msra.mxu0 0.0
        %3005 = vmatprep.subr.mxu0 0.0
        %3006 = vmatpush1.msra.mxu0 0.0
        %3007 = vmatprep.subr.mxu0 0.0
        %3008 = vmatpush1.msra.mxu0 0.0
        %3009 = vmatprep.subr.mxu0 0.0
        %3010 = vmatpush1.msra.mxu0 0.0
        %3011 = vmatprep.subr.mxu0 0.0
        %3012 = vmatpush1.msra.mxu0 0.0
        %3013 = vmatprep.subr.mxu0 0.0
        %3014 = vmatpush1.msra.mxu0 0.0
        %3015 = vmatprep.subr.mxu0 0.0
        %3016 = vmatpush1.msra.mxu0 0.0
        %3017 = vmatprep.subr.mxu0 0.0
        %3018 = vmatpush1.msra.mxu0 0.0
        %3019 = vmatprep.mubr.f32.mxu0 0.0
        %v3020 = vand.u32 %v2854, 4294901760
        %3021 = vmatmul.mubr.f32.gmra.mrb[0].mxu0 %v3020
        %v3022 = vpop.f32.mrb[0].mxu0
        %v3023 = vadd.f32 %v2932, %v3022
        %v3024 = vpop.f32.mrb[0].mxu0
        %3025 = vdwg.mxu0
        %3026 = vmatprep.subr.mxu0 0.0
        %v3027 = vand.u32 %v340, 4294901760
        %v3028 = vsub.f32 %v340, %v3027
        %3029 = vmatpush1.msra.mxu0 %v3028
        %3030 = vmatprep.subr.mxu0 0.0
        %v3031 = vand.u32 %v341, 4294901760
        %v3032 = vsub.f32 %v341, %v3031
        %3033 = vmatpush1.msra.mxu0 %v3032
        %3034 = vmatprep.subr.mxu0 0.0
        %v3035 = vand.u32 %v342, 4294901760
        %v3036 = vsub.f32 %v342, %v3035
        %3037 = vmatpush1.msra.mxu0 %v3036
        %3038 = vmatprep.subr.mxu0 0.0
        %v3039 = vand.u32 %v343, 4294901760
        %v3040 = vsub.f32 %v343, %v3039
        %3041 = vmatpush1.msra.mxu0 %v3040
        %3042 = vmatprep.subr.mxu0 0.0
        %3043 = vmatpush1.msra.mxu0 0.0
        %3044 = vmatprep.subr.mxu0 0.0
        %3045 = vmatpush1.msra.mxu0 0.0
        %3046 = vmatprep.subr.mxu0 0.0
        %3047 = vmatpush1.msra.mxu0 0.0
        %3048 = vmatprep.subr.mxu0 0.0
        %3049 = vmatpush1.msra.mxu0 0.0
        %3050 = vmatprep.subr.mxu0 0.0
        %3051 = vmatpush1.msra.mxu0 0.0
        %3052 = vmatprep.subr.mxu0 0.0
        %3053 = vmatpush1.msra.mxu0 0.0
        %3054 = vmatprep.subr.mxu0 0.0
        %3055 = vmatpush1.msra.mxu0 0.0
        %3056 = vmatprep.subr.mxu0 0.0
        %3057 = vmatpush1.msra.mxu0 0.0
        %3058 = vmatprep.subr.mxu0 0.0
        %3059 = vmatpush1.msra.mxu0 0.0
        %3060 = vmatprep.subr.mxu0 0.0
        %3061 = vmatpush1.msra.mxu0 0.0
        %3062 = vmatprep.subr.mxu0 0.0
        %3063 = vmatpush1.msra.mxu0 0.0
        %3064 = vmatprep.subr.mxu0 0.0
        %3065 = vmatpush1.msra.mxu0 0.0
        %3066 = vmatprep.subr.mxu0 0.0
        %3067 = vmatpush1.msra.mxu0 0.0
        %3068 = vmatprep.subr.mxu0 0.0
        %3069 = vmatpush1.msra.mxu0 0.0
        %3070 = vmatprep.subr.mxu0 0.0
        %3071 = vmatpush1.msra.mxu0 0.0
        %3072 = vmatprep.subr.mxu0 0.0
        %3073 = vmatpush1.msra.mxu0 0.0
        %3074 = vmatprep.subr.mxu0 0.0
        %3075 = vmatpush1.msra.mxu0 0.0
        %3076 = vmatprep.subr.mxu0 0.0
        %3077 = vmatpush1.msra.mxu0 0.0
        %3078 = vmatprep.subr.mxu0 0.0
        %3079 = vmatpush1.msra.mxu0 0.0
        %3080 = vmatprep.subr.mxu0 0.0
        %3081 = vmatpush1.msra.mxu0 0.0
        %3082 = vmatprep.subr.mxu0 0.0
        %3083 = vmatpush1.msra.mxu0 0.0
        %3084 = vmatprep.subr.mxu0 0.0
        %3085 = vmatpush1.msra.mxu0 0.0
        %3086 = vmatprep.subr.mxu0 0.0
        %3087 = vmatpush1.msra.mxu0 0.0
        %3088 = vmatprep.subr.mxu0 0.0
        %3089 = vmatpush1.msra.mxu0 0.0
        %3090 = vmatprep.subr.mxu0 0.0
        %3091 = vmatpush1.msra.mxu0 0.0
        %3092 = vmatprep.subr.mxu0 0.0
        %3093 = vmatpush1.msra.mxu0 0.0
        %3094 = vmatprep.subr.mxu0 0.0
        %3095 = vmatpush1.msra.mxu0 0.0
        %3096 = vmatprep.subr.mxu0 0.0
        %3097 = vmatpush1.msra.mxu0 0.0
        %3098 = vmatprep.mubr.f32.mxu0 0.0
        %v3099 = vand.u32 %v2854, 4294901760
        %v3100 = vsub.f32 %v2854, %v3099
        %3101 = vmatmul.mubr.f32.gmra.mrb[0].mxu0 %v3100
        %v3102 = vpop.f32.mrb[0].mxu0
        %v3103 = vadd.f32 %v3023, %v3102
        %v3104 = vpop.f32.mrb[0].mxu0
        %3105 = vdwg.mxu0
        %3106 = vmatprep.subr.mxu0 0.0
        %v3107 = vand.u32 %v340, 4294901760
        %3108 = vmatpush1.msra.mxu0 %v3107
        %3109 = vmatprep.subr.mxu0 0.0
        %v3110 = vand.u32 %v341, 4294901760
        %3111 = vmatpush1.msra.mxu0 %v3110
        %3112 = vmatprep.subr.mxu0 0.0
        %v3113 = vand.u32 %v342, 4294901760
        %3114 = vmatpush1.msra.mxu0 %v3113
        %3115 = vmatprep.subr.mxu0 0.0
        %v3116 = vand.u32 %v343, 4294901760
        %3117 = vmatpush1.msra.mxu0 %v3116
        %3118 = vmatprep.subr.mxu0 0.0
        %3119 = vmatpush1.msra.mxu0 0.0
        %3120 = vmatprep.subr.mxu0 0.0
        %3121 = vmatpush1.msra.mxu0 0.0
        %3122 = vmatprep.subr.mxu0 0.0
        %3123 = vmatpush1.msra.mxu0 0.0
        %3124 = vmatprep.subr.mxu0 0.0
        %3125 = vmatpush1.msra.mxu0 0.0
        %3126 = vmatprep.subr.mxu0 0.0
        %3127 = vmatpush1.msra.mxu0 0.0
        %3128 = vmatprep.subr.mxu0 0.0
        %3129 = vmatpush1.msra.mxu0 0.0
        %3130 = vmatprep.subr.mxu0 0.0
        %3131 = vmatpush1.msra.mxu0 0.0
        %3132 = vmatprep.subr.mxu0 0.0
        %3133 = vmatpush1.msra.mxu0 0.0
        %3134 = vmatprep.subr.mxu0 0.0
        %3135 = vmatpush1.msra.mxu0 0.0
        %3136 = vmatprep.subr.mxu0 0.0
        %3137 = vmatpush1.msra.mxu0 0.0
        %3138 = vmatprep.subr.mxu0 0.0
        %3139 = vmatpush1.msra.mxu0 0.0
        %3140 = vmatprep.subr.mxu0 0.0
        %3141 = vmatpush1.msra.mxu0 0.0
        %3142 = vmatprep.subr.mxu0 0.0
        %3143 = vmatpush1.msra.mxu0 0.0
        %3144 = vmatprep.subr.mxu0 0.0
        %3145 = vmatpush1.msra.mxu0 0.0
        %3146 = vmatprep.subr.mxu0 0.0
        %3147 = vmatpush1.msra.mxu0 0.0
        %3148 = vmatprep.subr.mxu0 0.0
        %3149 = vmatpush1.msra.mxu0 0.0
        %3150 = vmatprep.subr.mxu0 0.0
        %3151 = vmatpush1.msra.mxu0 0.0
        %3152 = vmatprep.subr.mxu0 0.0
        %3153 = vmatpush1.msra.mxu0 0.0
        %3154 = vmatprep.subr.mxu0 0.0
        %3155 = vmatpush1.msra.mxu0 0.0
        %3156 = vmatprep.subr.mxu0 0.0
        %3157 = vmatpush1.msra.mxu0 0.0
        %3158 = vmatprep.subr.mxu0 0.0
        %3159 = vmatpush1.msra.mxu0 0.0
        %3160 = vmatprep.subr.mxu0 0.0
        %3161 = vmatpush1.msra.mxu0 0.0
        %3162 = vmatprep.subr.mxu0 0.0
        %3163 = vmatpush1.msra.mxu0 0.0
        %3164 = vmatprep.subr.mxu0 0.0
        %3165 = vmatpush1.msra.mxu0 0.0
        %3166 = vmatprep.subr.mxu0 0.0
        %3167 = vmatpush1.msra.mxu0 0.0
        %3168 = vmatprep.subr.mxu0 0.0
        %3169 = vmatpush1.msra.mxu0 0.0
        %3170 = vmatprep.subr.mxu0 0.0
        %3171 = vmatpush1.msra.mxu0 0.0
        %3172 = vmatprep.subr.mxu0 0.0
        %3173 = vmatpush1.msra.mxu0 0.0
        %3174 = vmatprep.mubr.f32.mxu0 0.0
        %v3175 = vand.u32 %v2854, 4294901760
        %v3176 = vsub.f32 %v2854, %v3175
        %v3177 = vand.u32 %v3176, 4294901760
        %3178 = vmatmul.mubr.f32.gmra.mrb[0].mxu0 %v3177
        %v3179 = vpop.f32.mrb[0].mxu0
        %v3180 = vadd.f32 %v3103, %v3179
        %v3181 = vpop.f32.mrb[0].mxu0
        %3182 = vdwg.mxu0
        %3183 = vmatprep.subr.mxu0 0.0
        %v3184 = vand.u32 %v340, 4294901760
        %v3185 = vsub.f32 %v340, %v3184
        %v3186 = vand.u32 %v3185, 4294901760
        %3187 = vmatpush1.msra.mxu0 %v3186
        %3188 = vmatprep.subr.mxu0 0.0
        %v3189 = vand.u32 %v341, 4294901760
        %v3190 = vsub.f32 %v341, %v3189
        %v3191 = vand.u32 %v3190, 4294901760
        %3192 = vmatpush1.msra.mxu0 %v3191
        %3193 = vmatprep.subr.mxu0 0.0
        %v3194 = vand.u32 %v342, 4294901760
        %v3195 = vsub.f32 %v342, %v3194
        %v3196 = vand.u32 %v3195, 4294901760
        %3197 = vmatpush1.msra.mxu0 %v3196
        %3198 = vmatprep.subr.mxu0 0.0
        %v3199 = vand.u32 %v343, 4294901760
        %v3200 = vsub.f32 %v343, %v3199
        %v3201 = vand.u32 %v3200, 4294901760
        %3202 = vmatpush1.msra.mxu0 %v3201
        %3203 = vmatprep.subr.mxu0 0.0
        %3204 = vmatpush1.msra.mxu0 0.0
        %3205 = vmatprep.subr.mxu0 0.0
        %3206 = vmatpush1.msra.mxu0 0.0
        %3207 = vmatprep.subr.mxu0 0.0
        %3208 = vmatpush1.msra.mxu0 0.0
        %3209 = vmatprep.subr.mxu0 0.0
        %3210 = vmatpush1.msra.mxu0 0.0
        %3211 = vmatprep.subr.mxu0 0.0
        %3212 = vmatpush1.msra.mxu0 0.0
        %3213 = vmatprep.subr.mxu0 0.0
        %3214 = vmatpush1.msra.mxu0 0.0
        %3215 = vmatprep.subr.mxu0 0.0
        %3216 = vmatpush1.msra.mxu0 0.0
        %3217 = vmatprep.subr.mxu0 0.0
        %3218 = vmatpush1.msra.mxu0 0.0
        %3219 = vmatprep.subr.mxu0 0.0
        %3220 = vmatpush1.msra.mxu0 0.0
        %3221 = vmatprep.subr.mxu0 0.0
        %3222 = vmatpush1.msra.mxu0 0.0
        %3223 = vmatprep.subr.mxu0 0.0
        %3224 = vmatpush1.msra.mxu0 0.0
        %3225 = vmatprep.subr.mxu0 0.0
        %3226 = vmatpush1.msra.mxu0 0.0
        %3227 = vmatprep.subr.mxu0 0.0
        %3228 = vmatpush1.msra.mxu0 0.0
        %3229 = vmatprep.subr.mxu0 0.0
        %3230 = vmatpush1.msra.mxu0 0.0
        %3231 = vmatprep.subr.mxu0 0.0
        %3232 = vmatpush1.msra.mxu0 0.0
        %3233 = vmatprep.subr.mxu0 0.0
        %3234 = vmatpush1.msra.mxu0 0.0
        %3235 = vmatprep.subr.mxu0 0.0
        %3236 = vmatpush1.msra.mxu0 0.0
        %3237 = vmatprep.subr.mxu0 0.0
        %3238 = vmatpush1.msra.mxu0 0.0
        %3239 = vmatprep.subr.mxu0 0.0
        %3240 = vmatpush1.msra.mxu0 0.0
        %3241 = vmatprep.subr.mxu0 0.0
        %3242 = vmatpush1.msra.mxu0 0.0
        %3243 = vmatprep.subr.mxu0 0.0
        %3244 = vmatpush1.msra.mxu0 0.0
        %3245 = vmatprep.subr.mxu0 0.0
        %3246 = vmatpush1.msra.mxu0 0.0
        %3247 = vmatprep.subr.mxu0 0.0
        %3248 = vmatpush1.msra.mxu0 0.0
        %3249 = vmatprep.subr.mxu0 0.0
        %3250 = vmatpush1.msra.mxu0 0.0
        %3251 = vmatprep.subr.mxu0 0.0
        %3252 = vmatpush1.msra.mxu0 0.0
        %3253 = vmatprep.subr.mxu0 0.0
        %3254 = vmatpush1.msra.mxu0 0.0
        %3255 = vmatprep.subr.mxu0 0.0
        %3256 = vmatpush1.msra.mxu0 0.0
        %3257 = vmatprep.subr.mxu0 0.0
        %3258 = vmatpush1.msra.mxu0 0.0
        %3259 = vmatprep.mubr.f32.mxu0 0.0
        %v3260 = vand.u32 %v2854, 4294901760
        %3261 = vmatmul.mubr.f32.gmra.mrb[0].mxu0 %v3260
        %v3262 = vpop.f32.mrb[0].mxu0
        %v3263 = vadd.f32 %v3180, %v3262
        %v3264 = vpop.f32.mrb[0].mxu0
        %3265 = vdwg.mxu0
        %3266 = vmatprep.subr.mxu0 0.0
        %v3267 = vand.u32 %v340, 4294901760
        %3268 = vmatpush1.msra.mxu0 %v3267
        %3269 = vmatprep.subr.mxu0 0.0
        %v3270 = vand.u32 %v341, 4294901760
        %3271 = vmatpush1.msra.mxu0 %v3270
        %3272 = vmatprep.subr.mxu0 0.0
        %v3273 = vand.u32 %v342, 4294901760
        %3274 = vmatpush1.msra.mxu0 %v3273
        %3275 = vmatprep.subr.mxu0 0.0
        %v3276 = vand.u32 %v343, 4294901760
        %3277 = vmatpush1.msra.mxu0 %v3276
        %3278 = vmatprep.subr.mxu0 0.0
        %3279 = vmatpush1.msra.mxu0 0.0
        %3280 = vmatprep.subr.mxu0 0.0
        %3281 = vmatpush1.msra.mxu0 0.0
        %3282 = vmatprep.subr.mxu0 0.0
        %3283 = vmatpush1.msra.mxu0 0.0
        %3284 = vmatprep.subr.mxu0 0.0
        %3285 = vmatpush1.msra.mxu0 0.0
        %3286 = vmatprep.subr.mxu0 0.0
        %3287 = vmatpush1.msra.mxu0 0.0
        %3288 = vmatprep.subr.mxu0 0.0
        %3289 = vmatpush1.msra.mxu0 0.0
        %3290 = vmatprep.subr.mxu0 0.0
        %3291 = vmatpush1.msra.mxu0 0.0
        %3292 = vmatprep.subr.mxu0 0.0
        %3293 = vmatpush1.msra.mxu0 0.0
        %3294 = vmatprep.subr.mxu0 0.0
        %3295 = vmatpush1.msra.mxu0 0.0
        %3296 = vmatprep.subr.mxu0 0.0
        %3297 = vmatpush1.msra.mxu0 0.0
        %3298 = vmatprep.subr.mxu0 0.0
        %3299 = vmatpush1.msra.mxu0 0.0
        %3300 = vmatprep.subr.mxu0 0.0
        %3301 = vmatpush1.msra.mxu0 0.0
        %3302 = vmatprep.subr.mxu0 0.0
        %3303 = vmatpush1.msra.mxu0 0.0
        %3304 = vmatprep.subr.mxu0 0.0
        %3305 = vmatpush1.msra.mxu0 0.0
        %3306 = vmatprep.subr.mxu0 0.0
        %3307 = vmatpush1.msra.mxu0 0.0
        %3308 = vmatprep.subr.mxu0 0.0
        %3309 = vmatpush1.msra.mxu0 0.0
        %3310 = vmatprep.subr.mxu0 0.0
        %3311 = vmatpush1.msra.mxu0 0.0
        %3312 = vmatprep.subr.mxu0 0.0
        %3313 = vmatpush1.msra.mxu0 0.0
        %3314 = vmatprep.subr.mxu0 0.0
        %3315 = vmatpush1.msra.mxu0 0.0
        %3316 = vmatprep.subr.mxu0 0.0
        %3317 = vmatpush1.msra.mxu0 0.0
        %3318 = vmatprep.subr.mxu0 0.0
        %3319 = vmatpush1.msra.mxu0 0.0
        %3320 = vmatprep.subr.mxu0 0.0
        %3321 = vmatpush1.msra.mxu0 0.0
        %3322 = vmatprep.subr.mxu0 0.0
        %3323 = vmatpush1.msra.mxu0 0.0
        %3324 = vmatprep.subr.mxu0 0.0
        %3325 = vmatpush1.msra.mxu0 0.0
        %3326 = vmatprep.subr.mxu0 0.0
        %3327 = vmatpush1.msra.mxu0 0.0
        %3328 = vmatprep.subr.mxu0 0.0
        %3329 = vmatpush1.msra.mxu0 0.0
        %3330 = vmatprep.subr.mxu0 0.0
        %3331 = vmatpush1.msra.mxu0 0.0
        %3332 = vmatprep.subr.mxu0 0.0
        %3333 = vmatpush1.msra.mxu0 0.0
        %3334 = vmatprep.mubr.f32.mxu0 0.0
        %v3335 = vand.u32 %v2854, 4294901760
        %3336 = vmatmul.mubr.f32.gmra.mrb[0].mxu0 %v3335
        %v3337 = vpop.f32.mrb[0].mxu0
        %v3338 = vadd.f32 %v3263, %v3337
        %v3339 = vpop.f32.mrb[0].mxu0
        %3340 = vdwg.mxu0
        %v3341 = vadd.f32 %v2850, %v3338
        %v3342 = vxor.u32 %v3341, 2147483648
        %v3343 = vmul.f32 %v3342, 1.442695
        %v3344 = vpow.pop %v3343
        %v3345 = vadd.f32 %v3344, 1.0
        %v3346 = vrcp.pop %v3345
        %v3347 = vmul.f32 1.0, %v3346
        %3349 = vrot.lane.b32.xlu0 %v3338, 96
        %v3350 = vpop.permute.xlu0 %3349
        %v3352 = vmul.f32 %v3347, %v3350
        %3354 = vrot.lane.b32.xlu0 %v3352, 32
        %v3355 = vpop.permute.xlu0 %3354
        %v3357 = vadd.f32 %v2850, %v3355
        %v3358 = vtanh.pop %v3357
        %v3359 = vsub.f32 1.0, %v3347
        %v3360 = vmul.f32 %v3359, %v2360
        %3362 = vrot.lane.b32.xlu0 %v3358, 64
        %v3363 = vpop.permute.xlu0 %3362
        %v3365 = vmul.f32 %v3347, %v3363
        %v3366 = vadd.f32 %v3360, %v3365
        %s3367 = scalar_lea.vmem %s326, 16 [#allocation11]
        %3368 = vst.msk [vmem:[%s3367] sm:$0xff] %vm353, %v3366
        %s3369 = scalar_lea.vmem %s278, 24 [#allocation3]
        %v3370 = vld [vmem:[%s3369] sm:$0xff]
        %v3372 = vsel %vm353, %v3370, 0
        %3374 = vmatprep.subr.mxu0 0.0
        %v3375 = vand.u32 %v336, 4294901760
        %3376 = vmatpush1.msra.mxu0 %v3375
        %3377 = vmatprep.subr.mxu0 0.0
        %v3378 = vand.u32 %v337, 4294901760
        %3379 = vmatpush1.msra.mxu0 %v3378
        %3380 = vmatprep.subr.mxu0 0.0
        %v3381 = vand.u32 %v338, 4294901760
        %3382 = vmatpush1.msra.mxu0 %v3381
        %3383 = vmatprep.subr.mxu0 0.0
        %v3384 = vand.u32 %v339, 4294901760
        %3385 = vmatpush1.msra.mxu0 %v3384
        %3386 = vmatprep.subr.mxu0 0.0
        %3387 = vmatpush1.msra.mxu0 0.0
        %3388 = vmatprep.subr.mxu0 0.0
        %3389 = vmatpush1.msra.mxu0 0.0
        %3390 = vmatprep.subr.mxu0 0.0
        %3391 = vmatpush1.msra.mxu0 0.0
        %3392 = vmatprep.subr.mxu0 0.0
        %3393 = vmatpush1.msra.mxu0 0.0
        %3394 = vmatprep.subr.mxu0 0.0
        %3395 = vmatpush1.msra.mxu0 0.0
        %3396 = vmatprep.subr.mxu0 0.0
        %3397 = vmatpush1.msra.mxu0 0.0
        %3398 = vmatprep.subr.mxu0 0.0
        %3399 = vmatpush1.msra.mxu0 0.0
        %3400 = vmatprep.subr.mxu0 0.0
        %3401 = vmatpush1.msra.mxu0 0.0
        %3402 = vmatprep.subr.mxu0 0.0
        %3403 = vmatpush1.msra.mxu0 0.0
        %3404 = vmatprep.subr.mxu0 0.0
        %3405 = vmatpush1.msra.mxu0 0.0
        %3406 = vmatprep.subr.mxu0 0.0
        %3407 = vmatpush1.msra.mxu0 0.0
        %3408 = vmatprep.subr.mxu0 0.0
        %3409 = vmatpush1.msra.mxu0 0.0
        %3410 = vmatprep.subr.mxu0 0.0
        %3411 = vmatpush1.msra.mxu0 0.0
        %3412 = vmatprep.subr.mxu0 0.0
        %3413 = vmatpush1.msra.mxu0 0.0
        %3414 = vmatprep.subr.mxu0 0.0
        %3415 = vmatpush1.msra.mxu0 0.0
        %3416 = vmatprep.subr.mxu0 0.0
        %3417 = vmatpush1.msra.mxu0 0.0
        %3418 = vmatprep.subr.mxu0 0.0
        %3419 = vmatpush1.msra.mxu0 0.0
        %3420 = vmatprep.subr.mxu0 0.0
        %3421 = vmatpush1.msra.mxu0 0.0
        %3422 = vmatprep.subr.mxu0 0.0
        %3423 = vmatpush1.msra.mxu0 0.0
        %3424 = vmatprep.subr.mxu0 0.0
        %3425 = vmatpush1.msra.mxu0 0.0
        %3426 = vmatprep.subr.mxu0 0.0
        %3427 = vmatpush1.msra.mxu0 0.0
        %3428 = vmatprep.subr.mxu0 0.0
        %3429 = vmatpush1.msra.mxu0 0.0
        %3430 = vmatprep.subr.mxu0 0.0
        %3431 = vmatpush1.msra.mxu0 0.0
        %3432 = vmatprep.subr.mxu0 0.0
        %3433 = vmatpush1.msra.mxu0 0.0
        %3434 = vmatprep.subr.mxu0 0.0
        %3435 = vmatpush1.msra.mxu0 0.0
        %3436 = vmatprep.subr.mxu0 0.0
        %3437 = vmatpush1.msra.mxu0 0.0
        %3438 = vmatprep.subr.mxu0 0.0
        %3439 = vmatpush1.msra.mxu0 0.0
        %3440 = vmatprep.subr.mxu0 0.0
        %3441 = vmatpush1.msra.mxu0 0.0
        %3442 = vmatprep.mubr.f32.mxu0 0.0
        %v3443 = vand.u32 %v3372, 4294901760
        %v3444 = vsub.f32 %v3372, %v3443
        %v3445 = vand.u32 %v3444, 4294901760
        %v3446 = vsub.f32 %v3444, %v3445
        %v3447 = vand.u32 %v3446, 4294901760
        %3448 = vmatmul.mubr.f32.gmra.mrb[0].mxu0 %v3447
        %v3449 = vpop.f32.mrb[0].mxu0
        %v3450 = vadd.f32 %v349, %v3449
        %v3451 = vpop.f32.mrb[0].mxu0
        %3452 = vdwg.mxu0
        %3453 = vmatprep.subr.mxu0 0.0
        %v3454 = vand.u32 %v336, 4294901760
        %v3455 = vsub.f32 %v336, %v3454
        %v3456 = vand.u32 %v3455, 4294901760
        %v3457 = vsub.f32 %v3455, %v3456
        %v3458 = vand.u32 %v3457, 4294901760
        %3459 = vmatpush1.msra.mxu0 %v3458
        %3460 = vmatprep.subr.mxu0 0.0
        %v3461 = vand.u32 %v337, 4294901760
        %v3462 = vsub.f32 %v337, %v3461
        %v3463 = vand.u32 %v3462, 4294901760
        %v3464 = vsub.f32 %v3462, %v3463
        %v3465 = vand.u32 %v3464, 4294901760
        %3466 = vmatpush1.msra.mxu0 %v3465
        %3467 = vmatprep.subr.mxu0 0.0
        %v3468 = vand.u32 %v338, 4294901760
        %v3469 = vsub.f32 %v338, %v3468
        %v3470 = vand.u32 %v3469, 4294901760
        %v3471 = vsub.f32 %v3469, %v3470
        %v3472 = vand.u32 %v3471, 4294901760
        %3473 = vmatpush1.msra.mxu0 %v3472
        %3474 = vmatprep.subr.mxu0 0.0
        %v3475 = vand.u32 %v339, 4294901760
        %v3476 = vsub.f32 %v339, %v3475
        %v3477 = vand.u32 %v3476, 4294901760
        %v3478 = vsub.f32 %v3476, %v3477
        %v3479 = vand.u32 %v3478, 4294901760
        %3480 = vmatpush1.msra.mxu0 %v3479
        %3481 = vmatprep.subr.mxu0 0.0
        %3482 = vmatpush1.msra.mxu0 0.0
        %3483 = vmatprep.subr.mxu0 0.0
        %3484 = vmatpush1.msra.mxu0 0.0
        %3485 = vmatprep.subr.mxu0 0.0
        %3486 = vmatpush1.msra.mxu0 0.0
        %3487 = vmatprep.subr.mxu0 0.0
        %3488 = vmatpush1.msra.mxu0 0.0
        %3489 = vmatprep.subr.mxu0 0.0
        %3490 = vmatpush1.msra.mxu0 0.0
        %3491 = vmatprep.subr.mxu0 0.0
        %3492 = vmatpush1.msra.mxu0 0.0
        %3493 = vmatprep.subr.mxu0 0.0
        %3494 = vmatpush1.msra.mxu0 0.0
        %3495 = vmatprep.subr.mxu0 0.0
        %3496 = vmatpush1.msra.mxu0 0.0
        %3497 = vmatprep.subr.mxu0 0.0
        %3498 = vmatpush1.msra.mxu0 0.0
        %3499 = vmatprep.subr.mxu0 0.0
        %3500 = vmatpush1.msra.mxu0 0.0
        %3501 = vmatprep.subr.mxu0 0.0
        %3502 = vmatpush1.msra.mxu0 0.0
        %3503 = vmatprep.subr.mxu0 0.0
        %3504 = vmatpush1.msra.mxu0 0.0
        %3505 = vmatprep.subr.mxu0 0.0
        %3506 = vmatpush1.msra.mxu0 0.0
        %3507 = vmatprep.subr.mxu0 0.0
        %3508 = vmatpush1.msra.mxu0 0.0
        %3509 = vmatprep.subr.mxu0 0.0
        %3510 = vmatpush1.msra.mxu0 0.0
        %3511 = vmatprep.subr.mxu0 0.0
        %3512 = vmatpush1.msra.mxu0 0.0
        %3513 = vmatprep.subr.mxu0 0.0
        %3514 = vmatpush1.msra.mxu0 0.0
        %3515 = vmatprep.subr.mxu0 0.0
        %3516 = vmatpush1.msra.mxu0 0.0
        %3517 = vmatprep.subr.mxu0 0.0
        %3518 = vmatpush1.msra.mxu0 0.0
        %3519 = vmatprep.subr.mxu0 0.0
        %3520 = vmatpush1.msra.mxu0 0.0
        %3521 = vmatprep.subr.mxu0 0.0
        %3522 = vmatpush1.msra.mxu0 0.0
        %3523 = vmatprep.subr.mxu0 0.0
        %3524 = vmatpush1.msra.mxu0 0.0
        %3525 = vmatprep.subr.mxu0 0.0
        %3526 = vmatpush1.msra.mxu0 0.0
        %3527 = vmatprep.subr.mxu0 0.0
        %3528 = vmatpush1.msra.mxu0 0.0
        %3529 = vmatprep.subr.mxu0 0.0
        %3530 = vmatpush1.msra.mxu0 0.0
        %3531 = vmatprep.subr.mxu0 0.0
        %3532 = vmatpush1.msra.mxu0 0.0
        %3533 = vmatprep.subr.mxu0 0.0
        %3534 = vmatpush1.msra.mxu0 0.0
        %3535 = vmatprep.subr.mxu0 0.0
        %3536 = vmatpush1.msra.mxu0 0.0
        %3537 = vmatprep.mubr.f32.mxu0 0.0
        %v3538 = vand.u32 %v3372, 4294901760
        %3539 = vmatmul.mubr.f32.gmra.mrb[0].mxu0 %v3538
        %v3540 = vpop.f32.mrb[0].mxu0
        %v3541 = vadd.f32 %v3450, %v3540
        %v3542 = vpop.f32.mrb[0].mxu0
        %3543 = vdwg.mxu0
        %3544 = vmatprep.subr.mxu0 0.0
        %v3545 = vand.u32 %v336, 4294901760
        %v3546 = vsub.f32 %v336, %v3545
        %3547 = vmatpush1.msra.mxu0 %v3546
        %3548 = vmatprep.subr.mxu0 0.0
        %v3549 = vand.u32 %v337, 4294901760
        %v3550 = vsub.f32 %v337, %v3549
        %3551 = vmatpush1.msra.mxu0 %v3550
        %3552 = vmatprep.subr.mxu0 0.0
        %v3553 = vand.u32 %v338, 4294901760
        %v3554 = vsub.f32 %v338, %v3553
        %3555 = vmatpush1.msra.mxu0 %v3554
        %3556 = vmatprep.subr.mxu0 0.0
        %v3557 = vand.u32 %v339, 4294901760
        %v3558 = vsub.f32 %v339, %v3557
        %3559 = vmatpush1.msra.mxu0 %v3558
        %3560 = vmatprep.subr.mxu0 0.0
        %3561 = vmatpush1.msra.mxu0 0.0
        %3562 = vmatprep.subr.mxu0 0.0
        %3563 = vmatpush1.msra.mxu0 0.0
        %3564 = vmatprep.subr.mxu0 0.0
        %3565 = vmatpush1.msra.mxu0 0.0
        %3566 = vmatprep.subr.mxu0 0.0
        %3567 = vmatpush1.msra.mxu0 0.0
        %3568 = vmatprep.subr.mxu0 0.0
        %3569 = vmatpush1.msra.mxu0 0.0
        %3570 = vmatprep.subr.mxu0 0.0
        %3571 = vmatpush1.msra.mxu0 0.0
        %3572 = vmatprep.subr.mxu0 0.0
        %3573 = vmatpush1.msra.mxu0 0.0
        %3574 = vmatprep.subr.mxu0 0.0
        %3575 = vmatpush1.msra.mxu0 0.0
        %3576 = vmatprep.subr.mxu0 0.0
        %3577 = vmatpush1.msra.mxu0 0.0
        %3578 = vmatprep.subr.mxu0 0.0
        %3579 = vmatpush1.msra.mxu0 0.0
        %3580 = vmatprep.subr.mxu0 0.0
        %3581 = vmatpush1.msra.mxu0 0.0
        %3582 = vmatprep.subr.mxu0 0.0
        %3583 = vmatpush1.msra.mxu0 0.0
        %3584 = vmatprep.subr.mxu0 0.0
        %3585 = vmatpush1.msra.mxu0 0.0
        %3586 = vmatprep.subr.mxu0 0.0
        %3587 = vmatpush1.msra.mxu0 0.0
        %3588 = vmatprep.subr.mxu0 0.0
        %3589 = vmatpush1.msra.mxu0 0.0
        %3590 = vmatprep.subr.mxu0 0.0
        %3591 = vmatpush1.msra.mxu0 0.0
        %3592 = vmatprep.subr.mxu0 0.0
        %3593 = vmatpush1.msra.mxu0 0.0
        %3594 = vmatprep.subr.mxu0 0.0
        %3595 = vmatpush1.msra.mxu0 0.0
        %3596 = vmatprep.subr.mxu0 0.0
        %3597 = vmatpush1.msra.mxu0 0.0
        %3598 = vmatprep.subr.mxu0 0.0
        %3599 = vmatpush1.msra.mxu0 0.0
        %3600 = vmatprep.subr.mxu0 0.0
        %3601 = vmatpush1.msra.mxu0 0.0
        %3602 = vmatprep.subr.mxu0 0.0
        %3603 = vmatpush1.msra.mxu0 0.0
        %3604 = vmatprep.subr.mxu0 0.0
        %3605 = vmatpush1.msra.mxu0 0.0
        %3606 = vmatprep.subr.mxu0 0.0
        %3607 = vmatpush1.msra.mxu0 0.0
        %3608 = vmatprep.subr.mxu0 0.0
        %3609 = vmatpush1.msra.mxu0 0.0
        %3610 = vmatprep.subr.mxu0 0.0
        %3611 = vmatpush1.msra.mxu0 0.0
        %3612 = vmatprep.subr.mxu0 0.0
        %3613 = vmatpush1.msra.mxu0 0.0
        %3614 = vmatprep.subr.mxu0 0.0
        %3615 = vmatpush1.msra.mxu0 0.0
        %3616 = vmatprep.mubr.f32.mxu0 0.0
        %v3617 = vand.u32 %v3372, 4294901760
        %v3618 = vsub.f32 %v3372, %v3617
        %3619 = vmatmul.mubr.f32.gmra.mrb[0].mxu0 %v3618
        %v3620 = vpop.f32.mrb[0].mxu0
        %v3621 = vadd.f32 %v3541, %v3620
        %v3622 = vpop.f32.mrb[0].mxu0
        %3623 = vdwg.mxu0
        %3624 = vmatprep.subr.mxu0 0.0
        %v3625 = vand.u32 %v336, 4294901760
        %3626 = vmatpush1.msra.mxu0 %v3625
        %3627 = vmatprep.subr.mxu0 0.0
        %v3628 = vand.u32 %v337, 4294901760
        %3629 = vmatpush1.msra.mxu0 %v3628
        %3630 = vmatprep.subr.mxu0 0.0
        %v3631 = vand.u32 %v338, 4294901760
        %3632 = vmatpush1.msra.mxu0 %v3631
        %3633 = vmatprep.subr.mxu0 0.0
        %v3634 = vand.u32 %v339, 4294901760
        %3635 = vmatpush1.msra.mxu0 %v3634
        %3636 = vmatprep.subr.mxu0 0.0
        %3637 = vmatpush1.msra.mxu0 0.0
        %3638 = vmatprep.subr.mxu0 0.0
        %3639 = vmatpush1.msra.mxu0 0.0
        %3640 = vmatprep.subr.mxu0 0.0
        %3641 = vmatpush1.msra.mxu0 0.0
        %3642 = vmatprep.subr.mxu0 0.0
        %3643 = vmatpush1.msra.mxu0 0.0
        %3644 = vmatprep.subr.mxu0 0.0
        %3645 = vmatpush1.msra.mxu0 0.0
        %3646 = vmatprep.subr.mxu0 0.0
        %3647 = vmatpush1.msra.mxu0 0.0
        %3648 = vmatprep.subr.mxu0 0.0
        %3649 = vmatpush1.msra.mxu0 0.0
        %3650 = vmatprep.subr.mxu0 0.0
        %3651 = vmatpush1.msra.mxu0 0.0
        %3652 = vmatprep.subr.mxu0 0.0
        %3653 = vmatpush1.msra.mxu0 0.0
        %3654 = vmatprep.subr.mxu0 0.0
        %3655 = vmatpush1.msra.mxu0 0.0
        %3656 = vmatprep.subr.mxu0 0.0
        %3657 = vmatpush1.msra.mxu0 0.0
        %3658 = vmatprep.subr.mxu0 0.0
        %3659 = vmatpush1.msra.mxu0 0.0
        %3660 = vmatprep.subr.mxu0 0.0
        %3661 = vmatpush1.msra.mxu0 0.0
        %3662 = vmatprep.subr.mxu0 0.0
        %3663 = vmatpush1.msra.mxu0 0.0
        %3664 = vmatprep.subr.mxu0 0.0
        %3665 = vmatpush1.msra.mxu0 0.0
        %3666 = vmatprep.subr.mxu0 0.0
        %3667 = vmatpush1.msra.mxu0 0.0
        %3668 = vmatprep.subr.mxu0 0.0
        %3669 = vmatpush1.msra.mxu0 0.0
        %3670 = vmatprep.subr.mxu0 0.0
        %3671 = vmatpush1.msra.mxu0 0.0
        %3672 = vmatprep.subr.mxu0 0.0
        %3673 = vmatpush1.msra.mxu0 0.0
        %3674 = vmatprep.subr.mxu0 0.0
        %3675 = vmatpush1.msra.mxu0 0.0
        %3676 = vmatprep.subr.mxu0 0.0
        %3677 = vmatpush1.msra.mxu0 0.0
        %3678 = vmatprep.subr.mxu0 0.0
        %3679 = vmatpush1.msra.mxu0 0.0
        %3680 = vmatprep.subr.mxu0 0.0
        %3681 = vmatpush1.msra.mxu0 0.0
        %3682 = vmatprep.subr.mxu0 0.0
        %3683 = vmatpush1.msra.mxu0 0.0
        %3684 = vmatprep.subr.mxu0 0.0
        %3685 = vmatpush1.msra.mxu0 0.0
        %3686 = vmatprep.subr.mxu0 0.0
        %3687 = vmatpush1.msra.mxu0 0.0
        %3688 = vmatprep.subr.mxu0 0.0
        %3689 = vmatpush1.msra.mxu0 0.0
        %3690 = vmatprep.subr.mxu0 0.0
        %3691 = vmatpush1.msra.mxu0 0.0
        %3692 = vmatprep.mubr.f32.mxu0 0.0
        %v3693 = vand.u32 %v3372, 4294901760
        %v3694 = vsub.f32 %v3372, %v3693
        %v3695 = vand.u32 %v3694, 4294901760
        %3696 = vmatmul.mubr.f32.gmra.mrb[0].mxu0 %v3695
        %v3697 = vpop.f32.mrb[0].mxu0
        %v3698 = vadd.f32 %v3621, %v3697
        %v3699 = vpop.f32.mrb[0].mxu0
        %3700 = vdwg.mxu0
        %3701 = vmatprep.subr.mxu0 0.0
        %v3702 = vand.u32 %v336, 4294901760
        %v3703 = vsub.f32 %v336, %v3702
        %v3704 = vand.u32 %v3703, 4294901760
        %3705 = vmatpush1.msra.mxu0 %v3704
        %3706 = vmatprep.subr.mxu0 0.0
        %v3707 = vand.u32 %v337, 4294901760
        %v3708 = vsub.f32 %v337, %v3707
        %v3709 = vand.u32 %v3708, 4294901760
        %3710 = vmatpush1.msra.mxu0 %v3709
        %3711 = vmatprep.subr.mxu0 0.0
        %v3712 = vand.u32 %v338, 4294901760
        %v3713 = vsub.f32 %v338, %v3712
        %v3714 = vand.u32 %v3713, 4294901760
        %3715 = vmatpush1.msra.mxu0 %v3714
        %3716 = vmatprep.subr.mxu0 0.0
        %v3717 = vand.u32 %v339, 4294901760
        %v3718 = vsub.f32 %v339, %v3717
        %v3719 = vand.u32 %v3718, 4294901760
        %3720 = vmatpush1.msra.mxu0 %v3719
        %3721 = vmatprep.subr.mxu0 0.0
        %3722 = vmatpush1.msra.mxu0 0.0
        %3723 = vmatprep.subr.mxu0 0.0
        %3724 = vmatpush1.msra.mxu0 0.0
        %3725 = vmatprep.subr.mxu0 0.0
        %3726 = vmatpush1.msra.mxu0 0.0
        %3727 = vmatprep.subr.mxu0 0.0
        %3728 = vmatpush1.msra.mxu0 0.0
        %3729 = vmatprep.subr.mxu0 0.0
        %3730 = vmatpush1.msra.mxu0 0.0
        %3731 = vmatprep.subr.mxu0 0.0
        %3732 = vmatpush1.msra.mxu0 0.0
        %3733 = vmatprep.subr.mxu0 0.0
        %3734 = vmatpush1.msra.mxu0 0.0
        %3735 = vmatprep.subr.mxu0 0.0
        %3736 = vmatpush1.msra.mxu0 0.0
        %3737 = vmatprep.subr.mxu0 0.0
        %3738 = vmatpush1.msra.mxu0 0.0
        %3739 = vmatprep.subr.mxu0 0.0
        %3740 = vmatpush1.msra.mxu0 0.0
        %3741 = vmatprep.subr.mxu0 0.0
        %3742 = vmatpush1.msra.mxu0 0.0
        %3743 = vmatprep.subr.mxu0 0.0
        %3744 = vmatpush1.msra.mxu0 0.0
        %3745 = vmatprep.subr.mxu0 0.0
        %3746 = vmatpush1.msra.mxu0 0.0
        %3747 = vmatprep.subr.mxu0 0.0
        %3748 = vmatpush1.msra.mxu0 0.0
        %3749 = vmatprep.subr.mxu0 0.0
        %3750 = vmatpush1.msra.mxu0 0.0
        %3751 = vmatprep.subr.mxu0 0.0
        %3752 = vmatpush1.msra.mxu0 0.0
        %3753 = vmatprep.subr.mxu0 0.0
        %3754 = vmatpush1.msra.mxu0 0.0
        %3755 = vmatprep.subr.mxu0 0.0
        %3756 = vmatpush1.msra.mxu0 0.0
        %3757 = vmatprep.subr.mxu0 0.0
        %3758 = vmatpush1.msra.mxu0 0.0
        %3759 = vmatprep.subr.mxu0 0.0
        %3760 = vmatpush1.msra.mxu0 0.0
        %3761 = vmatprep.subr.mxu0 0.0
        %3762 = vmatpush1.msra.mxu0 0.0
        %3763 = vmatprep.subr.mxu0 0.0
        %3764 = vmatpush1.msra.mxu0 0.0
        %3765 = vmatprep.subr.mxu0 0.0
        %3766 = vmatpush1.msra.mxu0 0.0
        %3767 = vmatprep.subr.mxu0 0.0
        %3768 = vmatpush1.msra.mxu0 0.0
        %3769 = vmatprep.subr.mxu0 0.0
        %3770 = vmatpush1.msra.mxu0 0.0
        %3771 = vmatprep.subr.mxu0 0.0
        %3772 = vmatpush1.msra.mxu0 0.0
        %3773 = vmatprep.subr.mxu0 0.0
        %3774 = vmatpush1.msra.mxu0 0.0
        %3775 = vmatprep.subr.mxu0 0.0
        %3776 = vmatpush1.msra.mxu0 0.0
        %3777 = vmatprep.mubr.f32.mxu0 0.0
        %v3778 = vand.u32 %v3372, 4294901760
        %3779 = vmatmul.mubr.f32.gmra.mrb[0].mxu0 %v3778
        %v3780 = vpop.f32.mrb[0].mxu0
        %v3781 = vadd.f32 %v3698, %v3780
        %v3782 = vpop.f32.mrb[0].mxu0
        %3783 = vdwg.mxu0
        %3784 = vmatprep.subr.mxu0 0.0
        %v3785 = vand.u32 %v336, 4294901760
        %3786 = vmatpush1.msra.mxu0 %v3785
        %3787 = vmatprep.subr.mxu0 0.0
        %v3788 = vand.u32 %v337, 4294901760
        %3789 = vmatpush1.msra.mxu0 %v3788
        %3790 = vmatprep.subr.mxu0 0.0
        %v3791 = vand.u32 %v338, 4294901760
        %3792 = vmatpush1.msra.mxu0 %v3791
        %3793 = vmatprep.subr.mxu0 0.0
        %v3794 = vand.u32 %v339, 4294901760
        %3795 = vmatpush1.msra.mxu0 %v3794
        %3796 = vmatprep.subr.mxu0 0.0
        %3797 = vmatpush1.msra.mxu0 0.0
        %3798 = vmatprep.subr.mxu0 0.0
        %3799 = vmatpush1.msra.mxu0 0.0
        %3800 = vmatprep.subr.mxu0 0.0
        %3801 = vmatpush1.msra.mxu0 0.0
        %3802 = vmatprep.subr.mxu0 0.0
        %3803 = vmatpush1.msra.mxu0 0.0
        %3804 = vmatprep.subr.mxu0 0.0
        %3805 = vmatpush1.msra.mxu0 0.0
        %3806 = vmatprep.subr.mxu0 0.0
        %3807 = vmatpush1.msra.mxu0 0.0
        %3808 = vmatprep.subr.mxu0 0.0
        %3809 = vmatpush1.msra.mxu0 0.0
        %3810 = vmatprep.subr.mxu0 0.0
        %3811 = vmatpush1.msra.mxu0 0.0
        %3812 = vmatprep.subr.mxu0 0.0
        %3813 = vmatpush1.msra.mxu0 0.0
        %3814 = vmatprep.subr.mxu0 0.0
        %3815 = vmatpush1.msra.mxu0 0.0
        %3816 = vmatprep.subr.mxu0 0.0
        %3817 = vmatpush1.msra.mxu0 0.0
        %3818 = vmatprep.subr.mxu0 0.0
        %3819 = vmatpush1.msra.mxu0 0.0
        %3820 = vmatprep.subr.mxu0 0.0
        %3821 = vmatpush1.msra.mxu0 0.0
        %3822 = vmatprep.subr.mxu0 0.0
        %3823 = vmatpush1.msra.mxu0 0.0
        %3824 = vmatprep.subr.mxu0 0.0
        %3825 = vmatpush1.msra.mxu0 0.0
        %3826 = vmatprep.subr.mxu0 0.0
        %3827 = vmatpush1.msra.mxu0 0.0
        %3828 = vmatprep.subr.mxu0 0.0
        %3829 = vmatpush1.msra.mxu0 0.0
        %3830 = vmatprep.subr.mxu0 0.0
        %3831 = vmatpush1.msra.mxu0 0.0
        %3832 = vmatprep.subr.mxu0 0.0
        %3833 = vmatpush1.msra.mxu0 0.0
        %3834 = vmatprep.subr.mxu0 0.0
        %3835 = vmatpush1.msra.mxu0 0.0
        %3836 = vmatprep.subr.mxu0 0.0
        %3837 = vmatpush1.msra.mxu0 0.0
        %3838 = vmatprep.subr.mxu0 0.0
        %3839 = vmatpush1.msra.mxu0 0.0
        %3840 = vmatprep.subr.mxu0 0.0
        %3841 = vmatpush1.msra.mxu0 0.0
        %3842 = vmatprep.subr.mxu0 0.0
        %3843 = vmatpush1.msra.mxu0 0.0
        %3844 = vmatprep.subr.mxu0 0.0
        %3845 = vmatpush1.msra.mxu0 0.0
        %3846 = vmatprep.subr.mxu0 0.0
        %3847 = vmatpush1.msra.mxu0 0.0
        %3848 = vmatprep.subr.mxu0 0.0
        %3849 = vmatpush1.msra.mxu0 0.0
        %3850 = vmatprep.subr.mxu0 0.0
        %3851 = vmatpush1.msra.mxu0 0.0
        %3852 = vmatprep.mubr.f32.mxu0 0.0
        %v3853 = vand.u32 %v3372, 4294901760
        %3854 = vmatmul.mubr.f32.gmra.mrb[0].mxu0 %v3853
        %v3855 = vpop.f32.mrb[0].mxu0
        %v3856 = vadd.f32 %v3781, %v3855
        %v3857 = vpop.f32.mrb[0].mxu0
        %3858 = vdwg.mxu0
        %v3860 = vsel %vm353, %v3366, 0
        %3862 = vmatprep.subr.mxu0 0.0
        %v3863 = vand.u32 %v340, 4294901760
        %3864 = vmatpush1.msra.mxu0 %v3863
        %3865 = vmatprep.subr.mxu0 0.0
        %v3866 = vand.u32 %v341, 4294901760
        %3867 = vmatpush1.msra.mxu0 %v3866
        %3868 = vmatprep.subr.mxu0 0.0
        %v3869 = vand.u32 %v342, 4294901760
        %3870 = vmatpush1.msra.mxu0 %v3869
        %3871 = vmatprep.subr.mxu0 0.0
        %v3872 = vand.u32 %v343, 4294901760
        %3873 = vmatpush1.msra.mxu0 %v3872
        %3874 = vmatprep.subr.mxu0 0.0
        %3875 = vmatpush1.msra.mxu0 0.0
        %3876 = vmatprep.subr.mxu0 0.0
        %3877 = vmatpush1.msra.mxu0 0.0
        %3878 = vmatprep.subr.mxu0 0.0
        %3879 = vmatpush1.msra.mxu0 0.0
        %3880 = vmatprep.subr.mxu0 0.0
        %3881 = vmatpush1.msra.mxu0 0.0
        %3882 = vmatprep.subr.mxu0 0.0
        %3883 = vmatpush1.msra.mxu0 0.0
        %3884 = vmatprep.subr.mxu0 0.0
        %3885 = vmatpush1.msra.mxu0 0.0
        %3886 = vmatprep.subr.mxu0 0.0
        %3887 = vmatpush1.msra.mxu0 0.0
        %3888 = vmatprep.subr.mxu0 0.0
        %3889 = vmatpush1.msra.mxu0 0.0
        %3890 = vmatprep.subr.mxu0 0.0
        %3891 = vmatpush1.msra.mxu0 0.0
        %3892 = vmatprep.subr.mxu0 0.0
        %3893 = vmatpush1.msra.mxu0 0.0
        %3894 = vmatprep.subr.mxu0 0.0
        %3895 = vmatpush1.msra.mxu0 0.0
        %3896 = vmatprep.subr.mxu0 0.0
        %3897 = vmatpush1.msra.mxu0 0.0
        %3898 = vmatprep.subr.mxu0 0.0
        %3899 = vmatpush1.msra.mxu0 0.0
        %3900 = vmatprep.subr.mxu0 0.0
        %3901 = vmatpush1.msra.mxu0 0.0
        %3902 = vmatprep.subr.mxu0 0.0
        %3903 = vmatpush1.msra.mxu0 0.0
        %3904 = vmatprep.subr.mxu0 0.0
        %3905 = vmatpush1.msra.mxu0 0.0
        %3906 = vmatprep.subr.mxu0 0.0
        %3907 = vmatpush1.msra.mxu0 0.0
        %3908 = vmatprep.subr.mxu0 0.0
        %3909 = vmatpush1.msra.mxu0 0.0
        %3910 = vmatprep.subr.mxu0 0.0
        %3911 = vmatpush1.msra.mxu0 0.0
        %3912 = vmatprep.subr.mxu0 0.0
        %3913 = vmatpush1.msra.mxu0 0.0
        %3914 = vmatprep.subr.mxu0 0.0
        %3915 = vmatpush1.msra.mxu0 0.0
        %3916 = vmatprep.subr.mxu0 0.0
        %3917 = vmatpush1.msra.mxu0 0.0
        %3918 = vmatprep.subr.mxu0 0.0
        %3919 = vmatpush1.msra.mxu0 0.0
        %3920 = vmatprep.subr.mxu0 0.0
        %3921 = vmatpush1.msra.mxu0 0.0
        %3922 = vmatprep.subr.mxu0 0.0
        %3923 = vmatpush1.msra.mxu0 0.0
        %3924 = vmatprep.subr.mxu0 0.0
        %3925 = vmatpush1.msra.mxu0 0.0
        %3926 = vmatprep.subr.mxu0 0.0
        %3927 = vmatpush1.msra.mxu0 0.0
        %3928 = vmatprep.subr.mxu0 0.0
        %3929 = vmatpush1.msra.mxu0 0.0
        %3930 = vmatprep.mubr.f32.mxu0 0.0
        %v3931 = vand.u32 %v3860, 4294901760
        %v3932 = vsub.f32 %v3860, %v3931
        %v3933 = vand.u32 %v3932, 4294901760
        %v3934 = vsub.f32 %v3932, %v3933
        %v3935 = vand.u32 %v3934, 4294901760
        %3936 = vmatmul.mubr.f32.gmra.mrb[0].mxu0 %v3935
        %v3937 = vpop.f32.mrb[0].mxu0
        %v3938 = vadd.f32 0.0, %v3937
        %v3939 = vpop.f32.mrb[0].mxu0
        %3940 = vdwg.mxu0
        %3941 = vmatprep.subr.mxu0 0.0
        %v3942 = vand.u32 %v340, 4294901760
        %v3943 = vsub.f32 %v340, %v3942
        %v3944 = vand.u32 %v3943, 4294901760
        %v3945 = vsub.f32 %v3943, %v3944
        %v3946 = vand.u32 %v3945, 4294901760
        %3947 = vmatpush1.msra.mxu0 %v3946
        %3948 = vmatprep.subr.mxu0 0.0
        %v3949 = vand.u32 %v341, 4294901760
        %v3950 = vsub.f32 %v341, %v3949
        %v3951 = vand.u32 %v3950, 4294901760
        %v3952 = vsub.f32 %v3950, %v3951
        %v3953 = vand.u32 %v3952, 4294901760
        %3954 = vmatpush1.msra.mxu0 %v3953
        %3955 = vmatprep.subr.mxu0 0.0
        %v3956 = vand.u32 %v342, 4294901760
        %v3957 = vsub.f32 %v342, %v3956
        %v3958 = vand.u32 %v3957, 4294901760
        %v3959 = vsub.f32 %v3957, %v3958
        %v3960 = vand.u32 %v3959, 4294901760
        %3961 = vmatpush1.msra.mxu0 %v3960
        %3962 = vmatprep.subr.mxu0 0.0
        %v3963 = vand.u32 %v343, 4294901760
        %v3964 = vsub.f32 %v343, %v3963
        %v3965 = vand.u32 %v3964, 4294901760
        %v3966 = vsub.f32 %v3964, %v3965
        %v3967 = vand.u32 %v3966, 4294901760
        %3968 = vmatpush1.msra.mxu0 %v3967
        %3969 = vmatprep.subr.mxu0 0.0
        %3970 = vmatpush1.msra.mxu0 0.0
        %3971 = vmatprep.subr.mxu0 0.0
        %3972 = vmatpush1.msra.mxu0 0.0
        %3973 = vmatprep.subr.mxu0 0.0
        %3974 = vmatpush1.msra.mxu0 0.0
        %3975 = vmatprep.subr.mxu0 0.0
        %3976 = vmatpush1.msra.mxu0 0.0
        %3977 = vmatprep.subr.mxu0 0.0
        %3978 = vmatpush1.msra.mxu0 0.0
        %3979 = vmatprep.subr.mxu0 0.0
        %3980 = vmatpush1.msra.mxu0 0.0
        %3981 = vmatprep.subr.mxu0 0.0
        %3982 = vmatpush1.msra.mxu0 0.0
        %3983 = vmatprep.subr.mxu0 0.0
        %3984 = vmatpush1.msra.mxu0 0.0
        %3985 = vmatprep.subr.mxu0 0.0
        %3986 = vmatpush1.msra.mxu0 0.0
        %3987 = vmatprep.subr.mxu0 0.0
        %3988 = vmatpush1.msra.mxu0 0.0
        %3989 = vmatprep.subr.mxu0 0.0
        %3990 = vmatpush1.msra.mxu0 0.0
        %3991 = vmatprep.subr.mxu0 0.0
        %3992 = vmatpush1.msra.mxu0 0.0
        %3993 = vmatprep.subr.mxu0 0.0
        %3994 = vmatpush1.msra.mxu0 0.0
        %3995 = vmatprep.subr.mxu0 0.0
        %3996 = vmatpush1.msra.mxu0 0.0
        %3997 = vmatprep.subr.mxu0 0.0
        %3998 = vmatpush1.msra.mxu0 0.0
        %3999 = vmatprep.subr.mxu0 0.0
        %4000 = vmatpush1.msra.mxu0 0.0
        %4001 = vmatprep.subr.mxu0 0.0
        %4002 = vmatpush1.msra.mxu0 0.0
        %4003 = vmatprep.subr.mxu0 0.0
        %4004 = vmatpush1.msra.mxu0 0.0
        %4005 = vmatprep.subr.mxu0 0.0
        %4006 = vmatpush1.msra.mxu0 0.0
        %4007 = vmatprep.subr.mxu0 0.0
        %4008 = vmatpush1.msra.mxu0 0.0
        %4009 = vmatprep.subr.mxu0 0.0
        %4010 = vmatpush1.msra.mxu0 0.0
        %4011 = vmatprep.subr.mxu0 0.0
        %4012 = vmatpush1.msra.mxu0 0.0
        %4013 = vmatprep.subr.mxu0 0.0
        %4014 = vmatpush1.msra.mxu0 0.0
        %4015 = vmatprep.subr.mxu0 0.0
        %4016 = vmatpush1.msra.mxu0 0.0
        %4017 = vmatprep.subr.mxu0 0.0
        %4018 = vmatpush1.msra.mxu0 0.0
        %4019 = vmatprep.subr.mxu0 0.0
        %4020 = vmatpush1.msra.mxu0 0.0
        %4021 = vmatprep.subr.mxu0 0.0
        %4022 = vmatpush1.msra.mxu0 0.0
        %4023 = vmatprep.subr.mxu0 0.0
        %4024 = vmatpush1.msra.mxu0 0.0
        %4025 = vmatprep.mubr.f32.mxu0 0.0
        %v4026 = vand.u32 %v3860, 4294901760
        %4027 = vmatmul.mubr.f32.gmra.mrb[0].mxu0 %v4026
        %v4028 = vpop.f32.mrb[0].mxu0
        %v4029 = vadd.f32 %v3938, %v4028
        %v4030 = vpop.f32.mrb[0].mxu0
        %4031 = vdwg.mxu0
        %4032 = vmatprep.subr.mxu0 0.0
        %v4033 = vand.u32 %v340, 4294901760
        %v4034 = vsub.f32 %v340, %v4033
        %4035 = vmatpush1.msra.mxu0 %v4034
        %4036 = vmatprep.subr.mxu0 0.0
        %v4037 = vand.u32 %v341, 4294901760
        %v4038 = vsub.f32 %v341, %v4037
        %4039 = vmatpush1.msra.mxu0 %v4038
        %4040 = vmatprep.subr.mxu0 0.0
        %v4041 = vand.u32 %v342, 4294901760
        %v4042 = vsub.f32 %v342, %v4041
        %4043 = vmatpush1.msra.mxu0 %v4042
        %4044 = vmatprep.subr.mxu0 0.0
        %v4045 = vand.u32 %v343, 4294901760
        %v4046 = vsub.f32 %v343, %v4045
        %4047 = vmatpush1.msra.mxu0 %v4046
        %4048 = vmatprep.subr.mxu0 0.0
        %4049 = vmatpush1.msra.mxu0 0.0
        %4050 = vmatprep.subr.mxu0 0.0
        %4051 = vmatpush1.msra.mxu0 0.0
        %4052 = vmatprep.subr.mxu0 0.0
        %4053 = vmatpush1.msra.mxu0 0.0
        %4054 = vmatprep.subr.mxu0 0.0
        %4055 = vmatpush1.msra.mxu0 0.0
        %4056 = vmatprep.subr.mxu0 0.0
        %4057 = vmatpush1.msra.mxu0 0.0
        %4058 = vmatprep.subr.mxu0 0.0
        %4059 = vmatpush1.msra.mxu0 0.0
        %4060 = vmatprep.subr.mxu0 0.0
        %4061 = vmatpush1.msra.mxu0 0.0
        %4062 = vmatprep.subr.mxu0 0.0
        %4063 = vmatpush1.msra.mxu0 0.0
        %4064 = vmatprep.subr.mxu0 0.0
        %4065 = vmatpush1.msra.mxu0 0.0
        %4066 = vmatprep.subr.mxu0 0.0
        %4067 = vmatpush1.msra.mxu0 0.0
        %4068 = vmatprep.subr.mxu0 0.0
        %4069 = vmatpush1.msra.mxu0 0.0
        %4070 = vmatprep.subr.mxu0 0.0
        %4071 = vmatpush1.msra.mxu0 0.0
        %4072 = vmatprep.subr.mxu0 0.0
        %4073 = vmatpush1.msra.mxu0 0.0
        %4074 = vmatprep.subr.mxu0 0.0
        %4075 = vmatpush1.msra.mxu0 0.0
        %4076 = vmatprep.subr.mxu0 0.0
        %4077 = vmatpush1.msra.mxu0 0.0
        %4078 = vmatprep.subr.mxu0 0.0
        %4079 = vmatpush1.msra.mxu0 0.0
        %4080 = vmatprep.subr.mxu0 0.0
        %4081 = vmatpush1.msra.mxu0 0.0
        %4082 = vmatprep.subr.mxu0 0.0
        %4083 = vmatpush1.msra.mxu0 0.0
        %4084 = vmatprep.subr.mxu0 0.0
        %4085 = vmatpush1.msra.mxu0 0.0
        %4086 = vmatprep.subr.mxu0 0.0
        %4087 = vmatpush1.msra.mxu0 0.0
        %4088 = vmatprep.subr.mxu0 0.0
        %4089 = vmatpush1.msra.mxu0 0.0
        %4090 = vmatprep.subr.mxu0 0.0
        %4091 = vmatpush1.msra.mxu0 0.0
        %4092 = vmatprep.subr.mxu0 0.0
        %4093 = vmatpush1.msra.mxu0 0.0
        %4094 = vmatprep.subr.mxu0 0.0
        %4095 = vmatpush1.msra.mxu0 0.0
        %4096 = vmatprep.subr.mxu0 0.0
        %4097 = vmatpush1.msra.mxu0 0.0
        %4098 = vmatprep.subr.mxu0 0.0
        %4099 = vmatpush1.msra.mxu0 0.0
        %4100 = vmatprep.subr.mxu0 0.0
        %4101 = vmatpush1.msra.mxu0 0.0
        %4102 = vmatprep.subr.mxu0 0.0
        %4103 = vmatpush1.msra.mxu0 0.0
        %4104 = vmatprep.mubr.f32.mxu0 0.0
        %v4105 = vand.u32 %v3860, 4294901760
        %v4106 = vsub.f32 %v3860, %v4105
        %4107 = vmatmul.mubr.f32.gmra.mrb[0].mxu0 %v4106
        %v4108 = vpop.f32.mrb[0].mxu0
        %v4109 = vadd.f32 %v4029, %v4108
        %v4110 = vpop.f32.mrb[0].mxu0
        %4111 = vdwg.mxu0
        %4112 = vmatprep.subr.mxu0 0.0
        %v4113 = vand.u32 %v340, 4294901760
        %4114 = vmatpush1.msra.mxu0 %v4113
        %4115 = vmatprep.subr.mxu0 0.0
        %v4116 = vand.u32 %v341, 4294901760
        %4117 = vmatpush1.msra.mxu0 %v4116
        %4118 = vmatprep.subr.mxu0 0.0
        %v4119 = vand.u32 %v342, 4294901760
        %4120 = vmatpush1.msra.mxu0 %v4119
        %4121 = vmatprep.subr.mxu0 0.0
        %v4122 = vand.u32 %v343, 4294901760
        %4123 = vmatpush1.msra.mxu0 %v4122
        %4124 = vmatprep.subr.mxu0 0.0
        %4125 = vmatpush1.msra.mxu0 0.0
        %4126 = vmatprep.subr.mxu0 0.0
        %4127 = vmatpush1.msra.mxu0 0.0
        %4128 = vmatprep.subr.mxu0 0.0
        %4129 = vmatpush1.msra.mxu0 0.0
        %4130 = vmatprep.subr.mxu0 0.0
        %4131 = vmatpush1.msra.mxu0 0.0
        %4132 = vmatprep.subr.mxu0 0.0
        %4133 = vmatpush1.msra.mxu0 0.0
        %4134 = vmatprep.subr.mxu0 0.0
        %4135 = vmatpush1.msra.mxu0 0.0
        %4136 = vmatprep.subr.mxu0 0.0
        %4137 = vmatpush1.msra.mxu0 0.0
        %4138 = vmatprep.subr.mxu0 0.0
        %4139 = vmatpush1.msra.mxu0 0.0
        %4140 = vmatprep.subr.mxu0 0.0
        %4141 = vmatpush1.msra.mxu0 0.0
        %4142 = vmatprep.subr.mxu0 0.0
        %4143 = vmatpush1.msra.mxu0 0.0
        %4144 = vmatprep.subr.mxu0 0.0
        %4145 = vmatpush1.msra.mxu0 0.0
        %4146 = vmatprep.subr.mxu0 0.0
        %4147 = vmatpush1.msra.mxu0 0.0
        %4148 = vmatprep.subr.mxu0 0.0
        %4149 = vmatpush1.msra.mxu0 0.0
        %4150 = vmatprep.subr.mxu0 0.0
        %4151 = vmatpush1.msra.mxu0 0.0
        %4152 = vmatprep.subr.mxu0 0.0
        %4153 = vmatpush1.msra.mxu0 0.0
        %4154 = vmatprep.subr.mxu0 0.0
        %4155 = vmatpush1.msra.mxu0 0.0
        %4156 = vmatprep.subr.mxu0 0.0
        %4157 = vmatpush1.msra.mxu0 0.0
        %4158 = vmatprep.subr.mxu0 0.0
        %4159 = vmatpush1.msra.mxu0 0.0
        %4160 = vmatprep.subr.mxu0 0.0
        %4161 = vmatpush1.msra.mxu0 0.0
        %4162 = vmatprep.subr.mxu0 0.0
        %4163 = vmatpush1.msra.mxu0 0.0
        %4164 = vmatprep.subr.mxu0 0.0
        %4165 = vmatpush1.msra.mxu0 0.0
        %4166 = vmatprep.subr.mxu0 0.0
        %4167 = vmatpush1.msra.mxu0 0.0
        %4168 = vmatprep.subr.mxu0 0.0
        %4169 = vmatpush1.msra.mxu0 0.0
        %4170 = vmatprep.subr.mxu0 0.0
        %4171 = vmatpush1.msra.mxu0 0.0
        %4172 = vmatprep.subr.mxu0 0.0
        %4173 = vmatpush1.msra.mxu0 0.0
        %4174 = vmatprep.subr.mxu0 0.0
        %4175 = vmatpush1.msra.mxu0 0.0
        %4176 = vmatprep.subr.mxu0 0.0
        %4177 = vmatpush1.msra.mxu0 0.0
        %4178 = vmatprep.subr.mxu0 0.0
        %4179 = vmatpush1.msra.mxu0 0.0
        %4180 = vmatprep.mubr.f32.mxu0 0.0
        %v4181 = vand.u32 %v3860, 4294901760
        %v4182 = vsub.f32 %v3860, %v4181
        %v4183 = vand.u32 %v4182, 4294901760
        %4184 = vmatmul.mubr.f32.gmra.mrb[0].mxu0 %v4183
        %v4185 = vpop.f32.mrb[0].mxu0
        %v4186 = vadd.f32 %v4109, %v4185
        %v4187 = vpop.f32.mrb[0].mxu0
        %4188 = vdwg.mxu0
        %4189 = vmatprep.subr.mxu0 0.0
        %v4190 = vand.u32 %v340, 4294901760
        %v4191 = vsub.f32 %v340, %v4190
        %v4192 = vand.u32 %v4191, 4294901760
        %4193 = vmatpush1.msra.mxu0 %v4192
        %4194 = vmatprep.subr.mxu0 0.0
        %v4195 = vand.u32 %v341, 4294901760
        %v4196 = vsub.f32 %v341, %v4195
        %v4197 = vand.u32 %v4196, 4294901760
        %4198 = vmatpush1.msra.mxu0 %v4197
        %4199 = vmatprep.subr.mxu0 0.0
        %v4200 = vand.u32 %v342, 4294901760
        %v4201 = vsub.f32 %v342, %v4200
        %v4202 = vand.u32 %v4201, 4294901760
        %4203 = vmatpush1.msra.mxu0 %v4202
        %4204 = vmatprep.subr.mxu0 0.0
        %v4205 = vand.u32 %v343, 4294901760
        %v4206 = vsub.f32 %v343, %v4205
        %v4207 = vand.u32 %v4206, 4294901760
        %4208 = vmatpush1.msra.mxu0 %v4207
        %4209 = vmatprep.subr.mxu0 0.0
        %4210 = vmatpush1.msra.mxu0 0.0
        %4211 = vmatprep.subr.mxu0 0.0
        %4212 = vmatpush1.msra.mxu0 0.0
        %4213 = vmatprep.subr.mxu0 0.0
        %4214 = vmatpush1.msra.mxu0 0.0
        %4215 = vmatprep.subr.mxu0 0.0
        %4216 = vmatpush1.msra.mxu0 0.0
        %4217 = vmatprep.subr.mxu0 0.0
        %4218 = vmatpush1.msra.mxu0 0.0
        %4219 = vmatprep.subr.mxu0 0.0
        %4220 = vmatpush1.msra.mxu0 0.0
        %4221 = vmatprep.subr.mxu0 0.0
        %4222 = vmatpush1.msra.mxu0 0.0
        %4223 = vmatprep.subr.mxu0 0.0
        %4224 = vmatpush1.msra.mxu0 0.0
        %4225 = vmatprep.subr.mxu0 0.0
        %4226 = vmatpush1.msra.mxu0 0.0
        %4227 = vmatprep.subr.mxu0 0.0
        %4228 = vmatpush1.msra.mxu0 0.0
        %4229 = vmatprep.subr.mxu0 0.0
        %4230 = vmatpush1.msra.mxu0 0.0
        %4231 = vmatprep.subr.mxu0 0.0
        %4232 = vmatpush1.msra.mxu0 0.0
        %4233 = vmatprep.subr.mxu0 0.0
        %4234 = vmatpush1.msra.mxu0 0.0
        %4235 = vmatprep.subr.mxu0 0.0
        %4236 = vmatpush1.msra.mxu0 0.0
        %4237 = vmatprep.subr.mxu0 0.0
        %4238 = vmatpush1.msra.mxu0 0.0
        %4239 = vmatprep.subr.mxu0 0.0
        %4240 = vmatpush1.msra.mxu0 0.0
        %4241 = vmatprep.subr.mxu0 0.0
        %4242 = vmatpush1.msra.mxu0 0.0
        %4243 = vmatprep.subr.mxu0 0.0
        %4244 = vmatpush1.msra.mxu0 0.0
        %4245 = vmatprep.subr.mxu0 0.0
        %4246 = vmatpush1.msra.mxu0 0.0
        %4247 = vmatprep.subr.mxu0 0.0
        %4248 = vmatpush1.msra.mxu0 0.0
        %4249 = vmatprep.subr.mxu0 0.0
        %4250 = vmatpush1.msra.mxu0 0.0
        %4251 = vmatprep.subr.mxu0 0.0
        %4252 = vmatpush1.msra.mxu0 0.0
        %4253 = vmatprep.subr.mxu0 0.0
        %4254 = vmatpush1.msra.mxu0 0.0
        %4255 = vmatprep.subr.mxu0 0.0
        %4256 = vmatpush1.msra.mxu0 0.0
        %4257 = vmatprep.subr.mxu0 0.0
        %4258 = vmatpush1.msra.mxu0 0.0
        %4259 = vmatprep.subr.mxu0 0.0
        %4260 = vmatpush1.msra.mxu0 0.0
        %4261 = vmatprep.subr.mxu0 0.0
        %4262 = vmatpush1.msra.mxu0 0.0
        %4263 = vmatprep.subr.mxu0 0.0
        %4264 = vmatpush1.msra.mxu0 0.0
        %4265 = vmatprep.mubr.f32.mxu0 0.0
        %v4266 = vand.u32 %v3860, 4294901760
        %4267 = vmatmul.mubr.f32.gmra.mrb[0].mxu0 %v4266
        %v4268 = vpop.f32.mrb[0].mxu0
        %v4269 = vadd.f32 %v4186, %v4268
        %v4270 = vpop.f32.mrb[0].mxu0
        %4271 = vdwg.mxu0
        %4272 = vmatprep.subr.mxu0 0.0
        %v4273 = vand.u32 %v340, 4294901760
        %4274 = vmatpush1.msra.mxu0 %v4273
        %4275 = vmatprep.subr.mxu0 0.0
        %v4276 = vand.u32 %v341, 4294901760
        %4277 = vmatpush1.msra.mxu0 %v4276
        %4278 = vmatprep.subr.mxu0 0.0
        %v4279 = vand.u32 %v342, 4294901760
        %4280 = vmatpush1.msra.mxu0 %v4279
        %4281 = vmatprep.subr.mxu0 0.0
        %v4282 = vand.u32 %v343, 4294901760
        %4283 = vmatpush1.msra.mxu0 %v4282
        %4284 = vmatprep.subr.mxu0 0.0
        %4285 = vmatpush1.msra.mxu0 0.0
        %4286 = vmatprep.subr.mxu0 0.0
        %4287 = vmatpush1.msra.mxu0 0.0
        %4288 = vmatprep.subr.mxu0 0.0
        %4289 = vmatpush1.msra.mxu0 0.0
        %4290 = vmatprep.subr.mxu0 0.0
        %4291 = vmatpush1.msra.mxu0 0.0
        %4292 = vmatprep.subr.mxu0 0.0
        %4293 = vmatpush1.msra.mxu0 0.0
        %4294 = vmatprep.subr.mxu0 0.0
        %4295 = vmatpush1.msra.mxu0 0.0
        %4296 = vmatprep.subr.mxu0 0.0
        %4297 = vmatpush1.msra.mxu0 0.0
        %4298 = vmatprep.subr.mxu0 0.0
        %4299 = vmatpush1.msra.mxu0 0.0
        %4300 = vmatprep.subr.mxu0 0.0
        %4301 = vmatpush1.msra.mxu0 0.0
        %4302 = vmatprep.subr.mxu0 0.0
        %4303 = vmatpush1.msra.mxu0 0.0
        %4304 = vmatprep.subr.mxu0 0.0
        %4305 = vmatpush1.msra.mxu0 0.0
        %4306 = vmatprep.subr.mxu0 0.0
        %4307 = vmatpush1.msra.mxu0 0.0
        %4308 = vmatprep.subr.mxu0 0.0
        %4309 = vmatpush1.msra.mxu0 0.0
        %4310 = vmatprep.subr.mxu0 0.0
        %4311 = vmatpush1.msra.mxu0 0.0
        %4312 = vmatprep.subr.mxu0 0.0
        %4313 = vmatpush1.msra.mxu0 0.0
        %4314 = vmatprep.subr.mxu0 0.0
        %4315 = vmatpush1.msra.mxu0 0.0
        %4316 = vmatprep.subr.mxu0 0.0
        %4317 = vmatpush1.msra.mxu0 0.0
        %4318 = vmatprep.subr.mxu0 0.0
        %4319 = vmatpush1.msra.mxu0 0.0
        %4320 = vmatprep.subr.mxu0 0.0
        %4321 = vmatpush1.msra.mxu0 0.0
        %4322 = vmatprep.subr.mxu0 0.0
        %4323 = vmatpush1.msra.mxu0 0.0
        %4324 = vmatprep.subr.mxu0 0.0
        %4325 = vmatpush1.msra.mxu0 0.0
        %4326 = vmatprep.subr.mxu0 0.0
        %4327 = vmatpush1.msra.mxu0 0.0
        %4328 = vmatprep.subr.mxu0 0.0
        %4329 = vmatpush1.msra.mxu0 0.0
        %4330 = vmatprep.subr.mxu0 0.0
        %4331 = vmatpush1.msra.mxu0 0.0
        %4332 = vmatprep.subr.mxu0 0.0
        %4333 = vmatpush1.msra.mxu0 0.0
        %4334 = vmatprep.subr.mxu0 0.0
        %4335 = vmatpush1.msra.mxu0 0.0
        %4336 = vmatprep.subr.mxu0 0.0
        %4337 = vmatpush1.msra.mxu0 0.0
        %4338 = vmatprep.subr.mxu0 0.0
        %4339 = vmatpush1.msra.mxu0 0.0
        %4340 = vmatprep.mubr.f32.mxu0 0.0
        %v4341 = vand.u32 %v3860, 4294901760
        %4342 = vmatmul.mubr.f32.gmra.mrb[0].mxu0 %v4341
        %v4343 = vpop.f32.mrb[0].mxu0
        %v4344 = vadd.f32 %v4269, %v4343
        %v4345 = vpop.f32.mrb[0].mxu0
        %4346 = vdwg.mxu0
        %v4347 = vadd.f32 %v3856, %v4344
        %v4348 = vxor.u32 %v4347, 2147483648
        %v4349 = vmul.f32 %v4348, 1.442695
        %v4350 = vpow.pop %v4349
        %v4351 = vadd.f32 %v4350, 1.0
        %v4352 = vrcp.pop %v4351
        %v4353 = vmul.f32 1.0, %v4352
        %4355 = vrot.lane.b32.xlu0 %v4344, 96
        %v4356 = vpop.permute.xlu0 %4355
        %v4358 = vmul.f32 %v4353, %v4356
        %4360 = vrot.lane.b32.xlu0 %v4358, 32
        %v4361 = vpop.permute.xlu0 %4360
        %v4363 = vadd.f32 %v3856, %v4361
        %v4364 = vtanh.pop %v4363
        %v4365 = vsub.f32 1.0, %v4353
        %v4366 = vmul.f32 %v4365, %v3366
        %4368 = vrot.lane.b32.xlu0 %v4364, 64
        %v4369 = vpop.permute.xlu0 %4368
        %v4371 = vmul.f32 %v4353, %v4369
        %v4372 = vadd.f32 %v4366, %v4371
        %s4373 = scalar_lea.vmem %s326, 24 [#allocation11]
        %4374 = vst.msk [vmem:[%s4373] sm:$0xff] %vm353, %v4372
        %4375 = vst.msk [vmem:[#allocation2] sm:$0xff] %vm353, %v4372
        %s4376 = sand.u32 %s165, 1
        %s4377 = scalar_lea.sflag [#allocation5], %s4376
        %s4378 = sand.u32 %s165, 1
        %s4379 = smul.addr %s4378, 32
        %s4380 = scalar_lea.vmem [#allocation11], %s4379
        // Predicated region
        $region61: #{tpu_custom_call.1} parent=39 // pred_check
          %p4381 = pneg %p175
        $region62: #{tpu_custom_call.1} parent=39 // pred_check_branch
          %4383 = sbr.rel (%p4381) target = $region64
        $region63: #{tpu_custom_call.1} parent=39 // pred_region
          %s4384 = smul.u32 4, %s31
          %s4386 = ssub.s32 512, 512
          %4387 = vsyncadd %s4377, %s4386
          %s4388 = smul.addr %s4384, 2
          %s4389 = sadd.s32 %s30, %s4388
          %s4390 = smul.addr %s4389, 128
          %s4391 = scalar_lea.hbm %s5, %s4390
          %s4392 = sshll.u32 %s4380, 4
          %s4393 = int_to_ptr.vmem [resolvable:$true] %s4392
          %4398 = dma.vmem_to_hbm [thread:$0]  %s4393, 512, %s4391, %s4377, 128, 256, 8
        $region64: #{tpu_custom_call.1} parent=39 // pred_fallthru
          _
      $region40: #{tpu_custom_call.1} parent=5 // pred_fallthru
        _
      %p4399 = scmp.le.s32.totalorder 2, %s21
      // Predicated region
      $region65: #{tpu_custom_call.1} parent=5 // pred_check
        %p4400 = pneg %p4399
      $region66: #{tpu_custom_call.1} parent=5 // pred_check_branch
        %4402 = sbr.rel (%p4400) target = $region68
      $region67: #{tpu_custom_call.1} parent=5 // pred_region
        %s4403 = ssub.s32 %s21, 2
        // Predicated region
        $region69: #{tpu_custom_call.1} parent=67 // pred_check
          %p4404 = pneg %p181
        $region70: #{tpu_custom_call.1} parent=67 // pred_check_branch
          %4406 = sbr.rel (%p4404) target = $region72
        $region71: #{tpu_custom_call.1} parent=67 // pred_region
          %s4407 = sand.u32 %s166, 1
          %s4408 = scalar_lea.sflag [#allocation5], %s4407
          %s4409 = sand.u32 %s166, 1
          %s4410 = smul.addr %s4409, 32
          %s4411 = scalar_lea.vmem [#allocation11], %s4410
          %4412 = dma.done %s4408, 512
        $region72: #{tpu_custom_call.1} parent=67 // pred_fallthru
          _
      $region68: #{tpu_custom_call.1} parent=5 // pred_fallthru
        _
    $region6: #{tpu_custom_call.1} parent=1 // loop_footer
      %s25 = sadd.s32 1, %s21
    $region7: #{tpu_custom_call.1} parent=1 // loop_footer_branch
      %20 = sbr.rel target = $region3
    $region8: #{tpu_custom_call.1} parent=1 // loop_exit
      _
    %4413 = vsyncpa [#allocation4], 1
    %s4414 = scalar_lea.sflag [#allocation4], 1
    %4415 = vsyncpa %s4414, 1
    %4416 = vsyncpa [#allocation7], 1
    %s4417 = scalar_lea.sflag [#allocation7], 1
    %4418 = vsyncpa %s4417, 1
    %4419 = vsyncpa [#allocation10], 1
    %4420 = vsyncpa [#allocation5], 1
    %s4421 = scalar_lea.sflag [#allocation5], 1
    %4422 = vsyncpa %s4421, 1

</llo_original>
